<compile_context>
chip_gen: v6e
topology: v6e:2x2x1
jax: 0.10.0
libtpu: 0.0.40
codegen_flags: <defaults>
</compile_context>

<pallas_src>
import jax
import jax.numpy as jnp
from jax import lax
from jax.experimental import pallas as pl
from jax.experimental.pallas import tpu as pltpu


def _dwconv3x3_half(h_hwc, w_dw, b_dw, pad_ref, H, W):
    """Depthwise 3x3 conv (padding=1) of one channel-half via a padded VMEM scratch.

    h_hwc : (H, W, Ch) value
    w_dw  : (9, Ch) value  -- taps in row-major (dy, dx) order
    b_dw  : (1, Ch) value
    pad_ref: VMEM scratch (H+2, W+2, Ch)
    """
    Ch = h_hwc.shape[-1]
    pad_ref[...] = jnp.zeros_like(pad_ref)
    pad_ref[pl.ds(1, H), pl.ds(1, W), :] = h_hwc
    acc = jnp.zeros((H, W, Ch), jnp.float32)
    for k in range(9):                      # fully unrolled 3x3 stencil
        dy, dx = divmod(k, 3)
        acc = acc + pad_ref[pl.ds(dy, H), pl.ds(dx, W), :] * w_dw[k:k + 1, :]
    return acc + b_dw


def feedforward_kernel(x_ref, w_in_ref, b_in_ref, w_dw_ref, b_dw_ref,
                       w_out_ref, b_out_ref, o_ref, pad1_ref, pad2_ref):
    # x_ref   : (1, H, W, Cin)
    # w_in_ref: (2, Cin, Ch)   project_in weight, split into the two chunks
    # b_in_ref: (2, 1, Ch)
    # w_dw_ref: (2, 9, Ch)     depthwise 3x3 taps per chunk
    # b_dw_ref: (2, 1, Ch)
    # w_out_ref: (Ch, Cin)     project_out weight (transposed)
    # b_out_ref: (1, Cin)
    # o_ref   : (1, H, W, Cin)
    _, H, W, Cin = x_ref.shape
    Ch = w_in_ref.shape[-1]                         # hidden_features

    x = x_ref[0].astype(jnp.float32)                # (H, W, Cin)
    x2d = x.reshape(H * W, Cin)

    # project_in (1x1 conv == matmul), per chunk -> no lane slicing later.
    h1 = jnp.dot(x2d, w_in_ref[0], preferred_element_type=jnp.float32) + b_in_ref[0]
    h2 = jnp.dot(x2d, w_in_ref[1], preferred_element_type=jnp.float32) + b_in_ref[1]

    d1 = _dwconv3x3_half(h1.reshape(H, W, Ch), w_dw_ref[0], b_dw_ref[0], pad1_ref, H, W)
    d2 = _dwconv3x3_half(h2.reshape(H, W, Ch), w_dw_ref[1], b_dw_ref[1], pad2_ref, H, W)

    # Gated activation: gelu(x2)*x1 + gelu(x1)*x2
    # TODO(synk): PyTorch F.gelu defaults to the erf-exact form; tanh-approximate
    # gelu is used here (and in the reference) since erf lowering is not
    # guaranteed in Mosaic. Max deviation is ~1e-3 of the erf form.
    g = jax.nn.gelu(d2, approximate=True) * d1 + jax.nn.gelu(d1, approximate=True) * d2

    # project_out (1x1 conv == matmul)
    y = jnp.dot(g.reshape(H * W, Ch), w_out_ref[...],
                preferred_element_type=jnp.float32) + b_out_ref[...]
    o_ref[0] = y.reshape(H, W, Cin).astype(o_ref.dtype)


def feedforward(x_nchw, w_in, b_in, w_dw, b_dw, w_out, b_out):
    """FeedForward forward pass.

    x_nchw : (B, dim, H, W)                       -- same layout as PyTorch
    w_in   : (2*hidden, dim, 1, 1), b_in (2*hidden,)
    w_dw   : (2*hidden, 1, 3, 3),   b_dw (2*hidden,)
    w_out  : (dim, hidden, 1, 1),   b_out (dim,)
    returns (B, dim, H, W)
    """
    B, Cin, H, W = x_nchw.shape
    C2 = w_in.shape[0]
    Ch = C2 // 2

    # NCHW -> NHWC so channels land on the 128-wide lanes.
    x_nhwc = jnp.transpose(x_nchw, (0, 2, 3, 1))                    # (B, H, W, Cin)

    # Pre-split the conv weights into the two chunk() halves.
    w_in_m = w_in.reshape(C2, Cin)
    w_in_s = jnp.stack([w_in_m[:Ch].T, w_in_m[Ch:].T])              # (2, Cin, Ch)
    b_in_s = jnp.stack([b_in[:Ch], b_in[Ch:]]).reshape(2, 1, Ch)

    w_dw_m = w_dw.reshape(C2, 9)                                    # taps in (dy,dx) order
    w_dw_s = jnp.stack([w_dw_m[:Ch].T, w_dw_m[Ch:].T])              # (2, 9, Ch)
    b_dw_s = jnp.stack([b_dw[:Ch], b_dw[Ch:]]).reshape(2, 1, Ch)

    w_out_t = w_out.reshape(Cin, Ch).T                              # (Ch, Cin)
    b_out_r = b_out.reshape(1, Cin)

    itemsize = 4
    flops = 2 * B * H * W * (Cin * C2 + 9 * C2 + Ch * Cin)
    transcendentals = 2 * B * H * W * Ch
    bytes_accessed = itemsize * (2 * B * H * W * Cin
                                 + Cin * C2 + 9 * C2 + Ch * Cin + 2 * C2 + Cin)

    out_nhwc = pl.pallas_call(
        feedforward_kernel,
        out_shape=jax.ShapeDtypeStruct((B, H, W, Cin), x_nchw.dtype),
        grid=(B,),
        in_specs=[
            pl.BlockSpec((1, H, W, Cin), lambda b: (b, 0, 0, 0)),   # x, tiled over batch
            pl.BlockSpec((2, Cin, Ch), lambda b: (0, 0, 0)),        # weights: resident
            pl.BlockSpec((2, 1, Ch), lambda b: (0, 0, 0)),
            pl.BlockSpec((2, 9, Ch), lambda b: (0, 0, 0)),
            pl.BlockSpec((2, 1, Ch), lambda b: (0, 0, 0)),
            pl.BlockSpec((Ch, Cin), lambda b: (0, 0)),
            pl.BlockSpec((1, Cin), lambda b: (0, 0)),
        ],
        out_specs=pl.BlockSpec((1, H, W, Cin), lambda b: (b, 0, 0, 0)),
        scratch_shapes=[
            pltpu.VMEM((H + 2, W + 2, Ch), jnp.float32),            # zero-padded halves
            pltpu.VMEM((H + 2, W + 2, Ch), jnp.float32),
        ],
        compiler_params=pltpu.CompilerParams(
            dimension_semantics=("parallel",),                      # batch split on v7x 2xTC
        ),
        cost_estimate=pl.CostEstimate(
            flops=flops,
            transcendentals=transcendentals,
            bytes_accessed=bytes_accessed,
        ),
    )(x_nhwc, w_in_s, b_in_s, w_dw_s, b_dw_s, w_out_t, b_out_r)

    return jnp.transpose(out_nhwc, (0, 3, 1, 2))                    # back to NCHW


def feedforward_ref(x, w_in, b_in, w_dw, b_dw, w_out, b_out):
    """Pure-JAX/XLA reference mirroring the PyTorch forward (NCHW)."""
    dn = ('NCHW', 'OIHW', 'NCHW')
    C2 = w_dw.shape[0]
    h = lax.conv_general_dilated(x, w_in, (1, 1), 'VALID', dimension_numbers=dn)
    h = h + b_in[None, :, None, None]
    hd = lax.conv_general_dilated(h, w_dw, (1, 1), ((1, 1), (1, 1)),
                                  dimension_numbers=dn, feature_group_count=C2)
    hd = hd + b_dw[None, :, None, None]
    x1, x2 = jnp.split(hd, 2, axis=1)
    g = jax.nn.gelu(x2, approximate=True) * x1 + jax.nn.gelu(x1, approximate=True) * x2
    y = lax.conv_general_dilated(g, w_out, (1, 1), 'VALID', dimension_numbers=dn)
    return y + b_out[None, :, None, None]


if __name__ == "__main__":
    B, dim, H, W = 2, 32, 16, 16
    ffn_expansion_factor = 2.0
    hidden = int(dim * ffn_expansion_factor)          # 64
    C2 = 2 * hidden                                   # 128

    key = jax.random.PRNGKey(0)
    ks = jax.random.split(key, 7)

    def bf16_exact(a):
        # Keep test data exactly representable in bf16 so MXU matmul paths in the
        # kernel and XLA reference agree to f32-accumulation-order level.
        return a.astype(jnp.bfloat16).astype(jnp.float32)

    x = bf16_exact(jax.random.normal(ks[0], (B, dim, H, W), jnp.float32))
    w_in = bf16_exact(jax.random.normal(ks[1], (C2, dim, 1, 1), jnp.float32) / jnp.sqrt(dim))
    b_in = bf16_exact(jax.random.normal(ks[2], (C2,), jnp.float32) * 0.1)
    w_dw = bf16_exact(jax.random.normal(ks[3], (C2, 1, 3, 3), jnp.float32) / 3.0)
    b_dw = bf16_exact(jax.random.normal(ks[4], (C2,), jnp.float32) * 0.1)
    w_out = bf16_exact(jax.random.normal(ks[5], (dim, hidden, 1, 1), jnp.float32) / jnp.sqrt(hidden))
    b_out = bf16_exact(jax.random.normal(ks[6], (dim,), jnp.float32) * 0.1)

    out = feedforward(x, w_in, b_in, w_dw, b_dw, w_out, b_out)
    out = jax.block_until_ready(out)

    ref = feedforward_ref(x, w_in, b_in, w_dw, b_dw, w_out, b_out)
    assert out.shape == (B, dim, H, W)
    max_err = float(jnp.max(jnp.abs(out - ref)))
    assert jnp.allclose(out, ref, atol=1e-4, rtol=1e-4), max_err

    print("KERNEL_OK")
</pallas_src>

<mosaic_0001>
module attributes {stable_mosaic.version = 11 : i64} {
  func.func @feedforward_kernel(%arg0: i32, %arg1: memref<1x16x16x32xf32, #tpu.memory_space<vmem>>, %arg2: memref<2x32x64xf32, #tpu.memory_space<vmem>>, %arg3: memref<2x1x64xf32, #tpu.memory_space<vmem>>, %arg4: memref<2x9x64xf32, #tpu.memory_space<vmem>>, %arg5: memref<2x1x64xf32, #tpu.memory_space<vmem>>, %arg6: memref<64x32xf32, #tpu.memory_space<vmem>>, %arg7: memref<1x32xf32, #tpu.memory_space<vmem>>, %arg8: memref<1x16x16x32xf32, #tpu.memory_space<vmem>>, %arg9: memref<18x18x64xf32, #tpu.memory_space<vmem>>, %arg10: memref<18x18x64xf32, #tpu.memory_space<vmem>>) attributes {dimension_semantics = [#tpu.dimension_semantics<parallel>], iteration_bounds = array<i64: 2>, scalar_prefetch = 0 : i64, scratch_operands = 2 : i64, tpu.core_type = #tpu.core_type<tc>, window_params = [{transform_indices = @transform_0, window_bounds = array<i64: 1, 16, 16, 32>}, {pipeline_mode = #tpu.pipeline_mode<synchronous>, transform_indices = @transform_1, window_bounds = array<i64: 2, 32, 64>}, {pipeline_mode = #tpu.pipeline_mode<synchronous>, transform_indices = @transform_2, window_bounds = array<i64: 2, 1, 64>}, {pipeline_mode = #tpu.pipeline_mode<synchronous>, transform_indices = @transform_3, window_bounds = array<i64: 2, 9, 64>}, {pipeline_mode = #tpu.pipeline_mode<synchronous>, transform_indices = @transform_4, window_bounds = array<i64: 2, 1, 64>}, {pipeline_mode = #tpu.pipeline_mode<synchronous>, transform_indices = @transform_5, window_bounds = array<i64: 64, 32>}, {pipeline_mode = #tpu.pipeline_mode<synchronous>, transform_indices = @transform_6, window_bounds = array<i64: 1, 32>}, {transform_indices = @transform_7, window_bounds = array<i64: 1, 16, 16, 32>}]} {
    %c0 = arith.constant 0 : index
    %c0_0 = arith.constant 0 : index
    %c0_1 = arith.constant 0 : index
    %c0_2 = arith.constant 0 : index
    %0 = vector.load %arg1[%c0, %c0_0, %c0_1, %c0_2] : memref<1x16x16x32xf32, #tpu.memory_space<vmem>>, vector<1x16x16x32xf32>
    %1 = vector.shape_cast %0 : vector<1x16x16x32xf32> to vector<16x16x32xf32>
    %2 = vector.shape_cast %1 : vector<16x16x32xf32> to vector<256x32xf32>
    %c0_3 = arith.constant 0 : index
    %c0_4 = arith.constant 0 : index
    %c0_5 = arith.constant 0 : index
    %3 = vector.load %arg2[%c0_3, %c0_4, %c0_5] : memref<2x32x64xf32, #tpu.memory_space<vmem>>, vector<1x32x64xf32>
    %4 = vector.shape_cast %3 : vector<1x32x64xf32> to vector<32x64xf32>
    %cst = arith.constant dense<0.000000e+00> : vector<256x64xf32>
    %5 = tpu.matmul %2, %4, %cst {dimension_numbers = #tpu.dot_dimension_numbers<[1], [0], [0], [1], [0, 0, 1, 1], [], []>} : vector<256x32xf32>, vector<32x64xf32>, vector<256x64xf32> -> vector<256x64xf32>
    %c0_6 = arith.constant 0 : index
    %c0_7 = arith.constant 0 : index
    %c0_8 = arith.constant 0 : index
    %6 = vector.load %arg3[%c0_6, %c0_7, %c0_8] : memref<2x1x64xf32, #tpu.memory_space<vmem>>, vector<1x1x64xf32>
    %7 = vector.shape_cast %6 : vector<1x1x64xf32> to vector<1x64xf32>
    %8 = vector.broadcast %7 : vector<1x64xf32> to vector<256x64xf32>
    %9 = arith.addf %5, %8 : vector<256x64xf32>
    %c1 = arith.constant 1 : index
    %c0_9 = arith.constant 0 : index
    %c0_10 = arith.constant 0 : index
    %10 = vector.load %arg2[%c1, %c0_9, %c0_10] : memref<2x32x64xf32, #tpu.memory_space<vmem>>, vector<1x32x64xf32>
    %11 = vector.shape_cast %10 : vector<1x32x64xf32> to vector<32x64xf32>
    %cst_11 = arith.constant dense<0.000000e+00> : vector<256x64xf32>
    %12 = tpu.matmul %2, %11, %cst_11 {dimension_numbers = #tpu.dot_dimension_numbers<[1], [0], [0], [1], [0, 0, 1, 1], [], []>} : vector<256x32xf32>, vector<32x64xf32>, vector<256x64xf32> -> vector<256x64xf32>
    %c1_12 = arith.constant 1 : index
    %c0_13 = arith.constant 0 : index
    %c0_14 = arith.constant 0 : index
    %13 = vector.load %arg3[%c1_12, %c0_13, %c0_14] : memref<2x1x64xf32, #tpu.memory_space<vmem>>, vector<1x1x64xf32>
    %14 = vector.shape_cast %13 : vector<1x1x64xf32> to vector<1x64xf32>
    %15 = vector.broadcast %14 : vector<1x64xf32> to vector<256x64xf32>
    %16 = arith.addf %12, %15 : vector<256x64xf32>
    %17 = vector.shape_cast %9 : vector<256x64xf32> to vector<16x16x64xf32>
    %c0_15 = arith.constant 0 : index
    %c0_16 = arith.constant 0 : index
    %c0_17 = arith.constant 0 : index
    %18 = vector.load %arg4[%c0_15, %c0_16, %c0_17] : memref<2x9x64xf32, #tpu.memory_space<vmem>>, vector<1x9x64xf32>
    %19 = vector.shape_cast %18 : vector<1x9x64xf32> to vector<9x64xf32>
    %c0_18 = arith.constant 0 : index
    %c0_19 = arith.constant 0 : index
    %c0_20 = arith.constant 0 : index
    %20 = vector.load %arg5[%c0_18, %c0_19, %c0_20] : memref<2x1x64xf32, #tpu.memory_space<vmem>>, vector<1x1x64xf32>
    %21 = vector.shape_cast %20 : vector<1x1x64xf32> to vector<1x64xf32>
    %cst_21 = arith.constant 0.000000e+00 : f32
    %22 = vector.broadcast %cst_21 : f32 to vector<18x18x64xf32>
    %c0_22 = arith.constant 0 : index
    %c0_23 = arith.constant 0 : index
    %c0_24 = arith.constant 0 : index
    %23 = vector.load %arg9[%c0_22, %c0_23, %c0_24] : memref<18x18x64xf32, #tpu.memory_space<vmem>>, vector<18x18x64xf32>
    tpu.vector_store %arg9[%c0_22, %c0_23, %c0_24], %22 {strides = array<i32>} : memref<18x18x64xf32, #tpu.memory_space<vmem>>, vector<18x18x64xf32>,
    %c1_25 = arith.constant 1 : index
    %c1_26 = arith.constant 1 : index
    %c0_27 = arith.constant 0 : index
    %24 = vector.load %arg9[%c1_25, %c1_26, %c0_27] : memref<18x18x64xf32, #tpu.memory_space<vmem>>, vector<16x16x64xf32>
    tpu.vector_store %arg9[%c1_25, %c1_26, %c0_27], %17 {strides = array<i32>} : memref<18x18x64xf32, #tpu.memory_space<vmem>>, vector<16x16x64xf32>,
    %cst_28 = arith.constant 0.000000e+00 : f32
    %25 = vector.broadcast %cst_28 : f32 to vector<16x16x64xf32>
    %c0_29 = arith.constant 0 : index
    %c0_30 = arith.constant 0 : index
    %c0_31 = arith.constant 0 : index
    %26 = vector.load %arg9[%c0_29, %c0_30, %c0_31] : memref<18x18x64xf32, #tpu.memory_space<vmem>>, vector<16x16x64xf32>
    %27 = vector.extract_strided_slice %19 {offsets = [0, 0], sizes = [1, 64], strides = [1, 1]} : vector<9x64xf32> to vector<1x64xf32>
    %28 = vector.shape_cast %27 : vector<1x64xf32> to vector<1x1x64xf32>
    %29 = vector.broadcast %28 : vector<1x1x64xf32> to vector<16x16x64xf32>
    %30 = arith.mulf %26, %29 : vector<16x16x64xf32>
    %31 = arith.addf %25, %30 : vector<16x16x64xf32>
    %c0_32 = arith.constant 0 : index
    %c1_33 = arith.constant 1 : index
    %c0_34 = arith.constant 0 : index
    %32 = vector.load %arg9[%c0_32, %c1_33, %c0_34] : memref<18x18x64xf32, #tpu.memory_space<vmem>>, vector<16x16x64xf32>
    %33 = vector.extract_strided_slice %19 {offsets = [1, 0], sizes = [1, 64], strides = [1, 1]} : vector<9x64xf32> to vector<1x64xf32>
    %34 = vector.shape_cast %33 : vector<1x64xf32> to vector<1x1x64xf32>
    %35 = vector.broadcast %34 : vector<1x1x64xf32> to vector<16x16x64xf32>
    %36 = arith.mulf %32, %35 : vector<16x16x64xf32>
    %37 = arith.addf %31, %36 : vector<16x16x64xf32>
    %c0_35 = arith.constant 0 : index
    %c2 = arith.constant 2 : index
    %c0_36 = arith.constant 0 : index
    %38 = vector.load %arg9[%c0_35, %c2, %c0_36] : memref<18x18x64xf32, #tpu.memory_space<vmem>>, vector<16x16x64xf32>
    %39 = vector.extract_strided_slice %19 {offsets = [2, 0], sizes = [1, 64], strides = [1, 1]} : vector<9x64xf32> to vector<1x64xf32>
    %40 = vector.shape_cast %39 : vector<1x64xf32> to vector<1x1x64xf32>
    %41 = vector.broadcast %40 : vector<1x1x64xf32> to vector<16x16x64xf32>
    %42 = arith.mulf %38, %41 : vector<16x16x64xf32>
    %43 = arith.addf %37, %42 : vector<16x16x64xf32>
    %c1_37 = arith.constant 1 : index
    %c0_38 = arith.constant 0 : index
    %c0_39 = arith.constant 0 : index
    %44 = vector.load %arg9[%c1_37, %c0_38, %c0_39] : memref<18x18x64xf32, #tpu.memory_space<vmem>>, vector<16x16x64xf32>
    %45 = vector.extract_strided_slice %19 {offsets = [3, 0], sizes = [1, 64], strides = [1, 1]} : vector<9x64xf32> to vector<1x64xf32>
    %46 = vector.shape_cast %45 : vector<1x64xf32> to vector<1x1x64xf32>
    %47 = vector.broadcast %46 : vector<1x1x64xf32> to vector<16x16x64xf32>
    %48 = arith.mulf %44, %47 : vector<16x16x64xf32>
    %49 = arith.addf %43, %48 : vector<16x16x64xf32>
    %c1_40 = arith.constant 1 : index
    %c1_41 = arith.constant 1 : index
    %c0_42 = arith.constant 0 : index
    %50 = vector.load %arg9[%c1_40, %c1_41, %c0_42] : memref<18x18x64xf32, #tpu.memory_space<vmem>>, vector<16x16x64xf32>
    %51 = vector.extract_strided_slice %19 {offsets = [4, 0], sizes = [1, 64], strides = [1, 1]} : vector<9x64xf32> to vector<1x64xf32>
    %52 = vector.shape_cast %51 : vector<1x64xf32> to vector<1x1x64xf32>
    %53 = vector.broadcast %52 : vector<1x1x64xf32> to vector<16x16x64xf32>
    %54 = arith.mulf %50, %53 : vector<16x16x64xf32>
    %55 = arith.addf %49, %54 : vector<16x16x64xf32>
    %c1_43 = arith.constant 1 : index
    %c2_44 = arith.constant 2 : index
    %c0_45 = arith.constant 0 : index
    %56 = vector.load %arg9[%c1_43, %c2_44, %c0_45] : memref<18x18x64xf32, #tpu.memory_space<vmem>>, vector<16x16x64xf32>
    %57 = vector.extract_strided_slice %19 {offsets = [5, 0], sizes = [1, 64], strides = [1, 1]} : vector<9x64xf32> to vector<1x64xf32>
    %58 = vector.shape_cast %57 : vector<1x64xf32> to vector<1x1x64xf32>
    %59 = vector.broadcast %58 : vector<1x1x64xf32> to vector<16x16x64xf32>
    %60 = arith.mulf %56, %59 : vector<16x16x64xf32>
    %61 = arith.addf %55, %60 : vector<16x16x64xf32>
    %c2_46 = arith.constant 2 : index
    %c0_47 = arith.constant 0 : index
    %c0_48 = arith.constant 0 : index
    %62 = vector.load %arg9[%c2_46, %c0_47, %c0_48] : memref<18x18x64xf32, #tpu.memory_space<vmem>>, vector<16x16x64xf32>
    %63 = vector.extract_strided_slice %19 {offsets = [6, 0], sizes = [1, 64], strides = [1, 1]} : vector<9x64xf32> to vector<1x64xf32>
    %64 = vector.shape_cast %63 : vector<1x64xf32> to vector<1x1x64xf32>
    %65 = vector.broadcast %64 : vector<1x1x64xf32> to vector<16x16x64xf32>
    %66 = arith.mulf %62, %65 : vector<16x16x64xf32>
    %67 = arith.addf %61, %66 : vector<16x16x64xf32>
    %c2_49 = arith.constant 2 : index
    %c1_50 = arith.constant 1 : index
    %c0_51 = arith.constant 0 : index
    %68 = vector.load %arg9[%c2_49, %c1_50, %c0_51] : memref<18x18x64xf32, #tpu.memory_space<vmem>>, vector<16x16x64xf32>
    %69 = vector.extract_strided_slice %19 {offsets = [7, 0], sizes = [1, 64], strides = [1, 1]} : vector<9x64xf32> to vector<1x64xf32>
    %70 = vector.shape_cast %69 : vector<1x64xf32> to vector<1x1x64xf32>
    %71 = vector.broadcast %70 : vector<1x1x64xf32> to vector<16x16x64xf32>
    %72 = arith.mulf %68, %71 : vector<16x16x64xf32>
    %73 = arith.addf %67, %72 : vector<16x16x64xf32>
    %c2_52 = arith.constant 2 : index
    %c2_53 = arith.constant 2 : index
    %c0_54 = arith.constant 0 : index
    %74 = vector.load %arg9[%c2_52, %c2_53, %c0_54] : memref<18x18x64xf32, #tpu.memory_space<vmem>>, vector<16x16x64xf32>
    %75 = vector.extract_strided_slice %19 {offsets = [8, 0], sizes = [1, 64], strides = [1, 1]} : vector<9x64xf32> to vector<1x64xf32>
    %76 = vector.shape_cast %75 : vector<1x64xf32> to vector<1x1x64xf32>
    %77 = vector.broadcast %76 : vector<1x1x64xf32> to vector<16x16x64xf32>
    %78 = arith.mulf %74, %77 : vector<16x16x64xf32>
    %79 = arith.addf %73, %78 : vector<16x16x64xf32>
    %80 = vector.shape_cast %21 : vector<1x64xf32> to vector<1x1x64xf32>
    %81 = vector.broadcast %80 : vector<1x1x64xf32> to vector<16x16x64xf32>
    %82 = arith.addf %79, %81 : vector<16x16x64xf32>
    %83 = vector.shape_cast %16 : vector<256x64xf32> to vector<16x16x64xf32>
    %c1_55 = arith.constant 1 : index
    %c0_56 = arith.constant 0 : index
    %c0_57 = arith.constant 0 : index
    %84 = vector.load %arg4[%c1_55, %c0_56, %c0_57] : memref<2x9x64xf32, #tpu.memory_space<vmem>>, vector<1x9x64xf32>
    %85 = vector.shape_cast %84 : vector<1x9x64xf32> to vector<9x64xf32>
    %c1_58 = arith.constant 1 : index
    %c0_59 = arith.constant 0 : index
    %c0_60 = arith.constant 0 : index
    %86 = vector.load %arg5[%c1_58, %c0_59, %c0_60] : memref<2x1x64xf32, #tpu.memory_space<vmem>>, vector<1x1x64xf32>
    %87 = vector.shape_cast %86 : vector<1x1x64xf32> to vector<1x64xf32>
    %cst_61 = arith.constant 0.000000e+00 : f32
    %88 = vector.broadcast %cst_61 : f32 to vector<18x18x64xf32>
    %c0_62 = arith.constant 0 : index
    %c0_63 = arith.constant 0 : index
    %c0_64 = arith.constant 0 : index
    %89 = vector.load %arg10[%c0_62, %c0_63, %c0_64] : memref<18x18x64xf32, #tpu.memory_space<vmem>>, vector<18x18x64xf32>
    tpu.vector_store %arg10[%c0_62, %c0_63, %c0_64], %88 {strides = array<i32>} : memref<18x18x64xf32, #tpu.memory_space<vmem>>, vector<18x18x64xf32>,
    %c1_65 = arith.constant 1 : index
    %c1_66 = arith.constant 1 : index
    %c0_67 = arith.constant 0 : index
    %90 = vector.load %arg10[%c1_65, %c1_66, %c0_67] : memref<18x18x64xf32, #tpu.memory_space<vmem>>, vector<16x16x64xf32>
    tpu.vector_store %arg10[%c1_65, %c1_66, %c0_67], %83 {strides = array<i32>} : memref<18x18x64xf32, #tpu.memory_space<vmem>>, vector<16x16x64xf32>,
    %cst_68 = arith.constant 0.000000e+00 : f32
    %91 = vector.broadcast %cst_68 : f32 to vector<16x16x64xf32>
    %c0_69 = arith.constant 0 : index
    %c0_70 = arith.constant 0 : index
    %c0_71 = arith.constant 0 : index
    %92 = vector.load %arg10[%c0_69, %c0_70, %c0_71] : memref<18x18x64xf32, #tpu.memory_space<vmem>>, vector<16x16x64xf32>
    %93 = vector.extract_strided_slice %85 {offsets = [0, 0], sizes = [1, 64], strides = [1, 1]} : vector<9x64xf32> to vector<1x64xf32>
    %94 = vector.shape_cast %93 : vector<1x64xf32> to vector<1x1x64xf32>
    %95 = vector.broadcast %94 : vector<1x1x64xf32> to vector<16x16x64xf32>
    %96 = arith.mulf %92, %95 : vector<16x16x64xf32>
    %97 = arith.addf %91, %96 : vector<16x16x64xf32>
    %c0_72 = arith.constant 0 : index
    %c1_73 = arith.constant 1 : index
    %c0_74 = arith.constant 0 : index
    %98 = vector.load %arg10[%c0_72, %c1_73, %c0_74] : memref<18x18x64xf32, #tpu.memory_space<vmem>>, vector<16x16x64xf32>
    %99 = vector.extract_strided_slice %85 {offsets = [1, 0], sizes = [1, 64], strides = [1, 1]} : vector<9x64xf32> to vector<1x64xf32>
    %100 = vector.shape_cast %99 : vector<1x64xf32> to vector<1x1x64xf32>
    %101 = vector.broadcast %100 : vector<1x1x64xf32> to vector<16x16x64xf32>
    %102 = arith.mulf %98, %101 : vector<16x16x64xf32>
    %103 = arith.addf %97, %102 : vector<16x16x64xf32>
    %c0_75 = arith.constant 0 : index
    %c2_76 = arith.constant 2 : index
    %c0_77 = arith.constant 0 : index
    %104 = vector.load %arg10[%c0_75, %c2_76, %c0_77] : memref<18x18x64xf32, #tpu.memory_space<vmem>>, vector<16x16x64xf32>
    %105 = vector.extract_strided_slice %85 {offsets = [2, 0], sizes = [1, 64], strides = [1, 1]} : vector<9x64xf32> to vector<1x64xf32>
    %106 = vector.shape_cast %105 : vector<1x64xf32> to vector<1x1x64xf32>
    %107 = vector.broadcast %106 : vector<1x1x64xf32> to vector<16x16x64xf32>
    %108 = arith.mulf %104, %107 : vector<16x16x64xf32>
    %109 = arith.addf %103, %108 : vector<16x16x64xf32>
    %c1_78 = arith.constant 1 : index
    %c0_79 = arith.constant 0 : index
    %c0_80 = arith.constant 0 : index
    %110 = vector.load %arg10[%c1_78, %c0_79, %c0_80] : memref<18x18x64xf32, #tpu.memory_space<vmem>>, vector<16x16x64xf32>
    %111 = vector.extract_strided_slice %85 {offsets = [3, 0], sizes = [1, 64], strides = [1, 1]} : vector<9x64xf32> to vector<1x64xf32>
    %112 = vector.shape_cast %111 : vector<1x64xf32> to vector<1x1x64xf32>
    %113 = vector.broadcast %112 : vector<1x1x64xf32> to vector<16x16x64xf32>
    %114 = arith.mulf %110, %113 : vector<16x16x64xf32>
    %115 = arith.addf %109, %114 : vector<16x16x64xf32>
    %c1_81 = arith.constant 1 : index
    %c1_82 = arith.constant 1 : index
    %c0_83 = arith.constant 0 : index
    %116 = vector.load %arg10[%c1_81, %c1_82, %c0_83] : memref<18x18x64xf32, #tpu.memory_space<vmem>>, vector<16x16x64xf32>
    %117 = vector.extract_strided_slice %85 {offsets = [4, 0], sizes = [1, 64], strides = [1, 1]} : vector<9x64xf32> to vector<1x64xf32>
    %118 = vector.shape_cast %117 : vector<1x64xf32> to vector<1x1x64xf32>
    %119 = vector.broadcast %118 : vector<1x1x64xf32> to vector<16x16x64xf32>
    %120 = arith.mulf %116, %119 : vector<16x16x64xf32>
    %121 = arith.addf %115, %120 : vector<16x16x64xf32>
    %c1_84 = arith.constant 1 : index
    %c2_85 = arith.constant 2 : index
    %c0_86 = arith.constant 0 : index
    %122 = vector.load %arg10[%c1_84, %c2_85, %c0_86] : memref<18x18x64xf32, #tpu.memory_space<vmem>>, vector<16x16x64xf32>
    %123 = vector.extract_strided_slice %85 {offsets = [5, 0], sizes = [1, 64], strides = [1, 1]} : vector<9x64xf32> to vector<1x64xf32>
    %124 = vector.shape_cast %123 : vector<1x64xf32> to vector<1x1x64xf32>
    %125 = vector.broadcast %124 : vector<1x1x64xf32> to vector<16x16x64xf32>
    %126 = arith.mulf %122, %125 : vector<16x16x64xf32>
    %127 = arith.addf %121, %126 : vector<16x16x64xf32>
    %c2_87 = arith.constant 2 : index
    %c0_88 = arith.constant 0 : index
    %c0_89 = arith.constant 0 : index
    %128 = vector.load %arg10[%c2_87, %c0_88, %c0_89] : memref<18x18x64xf32, #tpu.memory_space<vmem>>, vector<16x16x64xf32>
    %129 = vector.extract_strided_slice %85 {offsets = [6, 0], sizes = [1, 64], strides = [1, 1]} : vector<9x64xf32> to vector<1x64xf32>
    %130 = vector.shape_cast %129 : vector<1x64xf32> to vector<1x1x64xf32>
    %131 = vector.broadcast %130 : vector<1x1x64xf32> to vector<16x16x64xf32>
    %132 = arith.mulf %128, %131 : vector<16x16x64xf32>
    %133 = arith.addf %127, %132 : vector<16x16x64xf32>
    %c2_90 = arith.constant 2 : index
    %c1_91 = arith.constant 1 : index
    %c0_92 = arith.constant 0 : index
    %134 = vector.load %arg10[%c2_90, %c1_91, %c0_92] : memref<18x18x64xf32, #tpu.memory_space<vmem>>, vector<16x16x64xf32>
    %135 = vector.extract_strided_slice %85 {offsets = [7, 0], sizes = [1, 64], strides = [1, 1]} : vector<9x64xf32> to vector<1x64xf32>
    %136 = vector.shape_cast %135 : vector<1x64xf32> to vector<1x1x64xf32>
    %137 = vector.broadcast %136 : vector<1x1x64xf32> to vector<16x16x64xf32>
    %138 = arith.mulf %134, %137 : vector<16x16x64xf32>
    %139 = arith.addf %133, %138 : vector<16x16x64xf32>
    %c2_93 = arith.constant 2 : index
    %c2_94 = arith.constant 2 : index
    %c0_95 = arith.constant 0 : index
    %140 = vector.load %arg10[%c2_93, %c2_94, %c0_95] : memref<18x18x64xf32, #tpu.memory_space<vmem>>, vector<16x16x64xf32>
    %141 = vector.extract_strided_slice %85 {offsets = [8, 0], sizes = [1, 64], strides = [1, 1]} : vector<9x64xf32> to vector<1x64xf32>
    %142 = vector.shape_cast %141 : vector<1x64xf32> to vector<1x1x64xf32>
    %143 = vector.broadcast %142 : vector<1x1x64xf32> to vector<16x16x64xf32>
    %144 = arith.mulf %140, %143 : vector<16x16x64xf32>
    %145 = arith.addf %139, %144 : vector<16x16x64xf32>
    %146 = vector.shape_cast %87 : vector<1x64xf32> to vector<1x1x64xf32>
    %147 = vector.broadcast %146 : vector<1x1x64xf32> to vector<16x16x64xf32>
    %148 = arith.addf %145, %147 : vector<16x16x64xf32>
    %149 = arith.mulf %148, %148 : vector<16x16x64xf32>
    %150 = arith.mulf %148, %149 : vector<16x16x64xf32>
    %cst_96 = arith.constant 4.471500e-02 : f32
    %151 = vector.broadcast %cst_96 : f32 to vector<16x16x64xf32>
    %152 = arith.mulf %151, %150 : vector<16x16x64xf32>
    %153 = arith.addf %148, %152 : vector<16x16x64xf32>
    %cst_97 = arith.constant 0.797884583 : f32
    %154 = vector.broadcast %cst_97 : f32 to vector<16x16x64xf32>
    %155 = arith.mulf %154, %153 : vector<16x16x64xf32>
    %156 = math.tanh %155 : vector<16x16x64xf32>
    %cst_98 = arith.constant 1.000000e+00 : f32
    %157 = vector.broadcast %cst_98 : f32 to vector<16x16x64xf32>
    %158 = arith.addf %157, %156 : vector<16x16x64xf32>
    %cst_99 = arith.constant 5.000000e-01 : f32
    %159 = vector.broadcast %cst_99 : f32 to vector<16x16x64xf32>
    %160 = arith.mulf %159, %158 : vector<16x16x64xf32>
    %161 = arith.mulf %148, %160 : vector<16x16x64xf32>
    %162 = arith.mulf %161, %82 : vector<16x16x64xf32>
    %163 = arith.mulf %82, %82 : vector<16x16x64xf32>
    %164 = arith.mulf %82, %163 : vector<16x16x64xf32>
    %cst_100 = arith.constant 4.471500e-02 : f32
    %165 = vector.broadcast %cst_100 : f32 to vector<16x16x64xf32>
    %166 = arith.mulf %165, %164 : vector<16x16x64xf32>
    %167 = arith.addf %82, %166 : vector<16x16x64xf32>
    %cst_101 = arith.constant 0.797884583 : f32
    %168 = vector.broadcast %cst_101 : f32 to vector<16x16x64xf32>
    %169 = arith.mulf %168, %167 : vector<16x16x64xf32>
    %170 = math.tanh %169 : vector<16x16x64xf32>
    %cst_102 = arith.constant 1.000000e+00 : f32
    %171 = vector.broadcast %cst_102 : f32 to vector<16x16x64xf32>
    %172 = arith.addf %171, %170 : vector<16x16x64xf32>
    %cst_103 = arith.constant 5.000000e-01 : f32
    %173 = vector.broadcast %cst_103 : f32 to vector<16x16x64xf32>
    %174 = arith.mulf %173, %172 : vector<16x16x64xf32>
    %175 = arith.mulf %82, %174 : vector<16x16x64xf32>
    %176 = arith.mulf %175, %148 : vector<16x16x64xf32>
    %177 = arith.addf %162, %176 : vector<16x16x64xf32>
    %178 = vector.shape_cast %177 : vector<16x16x64xf32> to vector<256x64xf32>
    %c0_104 = arith.constant 0 : index
    %c0_105 = arith.constant 0 : index
    %179 = vector.load %arg6[%c0_104, %c0_105] : memref<64x32xf32, #tpu.memory_space<vmem>>, vector<64x32xf32>
    %cst_106 = arith.constant dense<0.000000e+00> : vector<256x32xf32>
    %180 = tpu.matmul %178, %179, %cst_106 {dimension_numbers = #tpu.dot_dimension_numbers<[1], [0], [0], [1], [0, 0, 1, 1], [], []>} : vector<256x64xf32>, vector<64x32xf32>, vector<256x32xf32> -> vector<256x32xf32>
    %c0_107 = arith.constant 0 : index
    %c0_108 = arith.constant 0 : index
    %181 = vector.load %arg7[%c0_107, %c0_108] : memref<1x32xf32, #tpu.memory_space<vmem>>, vector<1x32xf32>
    %182 = vector.broadcast %181 : vector<1x32xf32> to vector<256x32xf32>
    %183 = arith.addf %180, %182 : vector<256x32xf32>
    %184 = vector.shape_cast %183 : vector<256x32xf32> to vector<16x16x32xf32>
    %c0_109 = arith.constant 0 : index
    %c0_110 = arith.constant 0 : index
    %c0_111 = arith.constant 0 : index
    %c0_112 = arith.constant 0 : index
    %185 = vector.load %arg8[%c0_109, %c0_110, %c0_111, %c0_112] : memref<1x16x16x32xf32, #tpu.memory_space<vmem>>, vector<1x16x16x32xf32>
    %186 = vector.shape_cast %185 : vector<1x16x16x32xf32> to vector<16x16x32xf32>
    %187 = vector.shape_cast %184 : vector<16x16x32xf32> to vector<1x16x16x32xf32>
    tpu.vector_store %arg8[%c0_109, %c0_110, %c0_111, %c0_112], %187 {strides = array<i32>} : memref<1x16x16x32xf32, #tpu.memory_space<vmem>>, vector<1x16x16x32xf32>,
    return
  }
  func.func @transform_0(%arg0: i32) -> (i32, i32, i32, i32) {
    %c0_i32 = arith.constant 0 : i32
    %c0_i32_0 = arith.constant 0 : i32
    %c0_i32_1 = arith.constant 0 : i32
    %c0_i32_2 = arith.constant 0 : i32
    return %arg0, %c0_i32, %c0_i32_0, %c0_i32_1 : i32, i32, i32, i32
  }
  func.func @transform_1(%arg0: i32) -> (i32, i32, i32) {
    %c0_i32 = arith.constant 0 : i32
    %c0_i32_0 = arith.constant 0 : i32
    %c0_i32_1 = arith.constant 0 : i32
    %c0_i32_2 = arith.constant 0 : i32
    return %c0_i32, %c0_i32_0, %c0_i32_1 : i32, i32, i32
  }
  func.func @transform_2(%arg0: i32) -> (i32, i32, i32) {
    %c0_i32 = arith.constant 0 : i32
    %c0_i32_0 = arith.constant 0 : i32
    %c0_i32_1 = arith.constant 0 : i32
    %c0_i32_2 = arith.constant 0 : i32
    return %c0_i32, %c0_i32_0, %c0_i32_1 : i32, i32, i32
  }
  func.func @transform_3(%arg0: i32) -> (i32, i32, i32) {
    %c0_i32 = arith.constant 0 : i32
    %c0_i32_0 = arith.constant 0 : i32
    %c0_i32_1 = arith.constant 0 : i32
    %c0_i32_2 = arith.constant 0 : i32
    return %c0_i32, %c0_i32_0, %c0_i32_1 : i32, i32, i32
  }
  func.func @transform_4(%arg0: i32) -> (i32, i32, i32) {
    %c0_i32 = arith.constant 0 : i32
    %c0_i32_0 = arith.constant 0 : i32
    %c0_i32_1 = arith.constant 0 : i32
    %c0_i32_2 = arith.constant 0 : i32
    return %c0_i32, %c0_i32_0, %c0_i32_1 : i32, i32, i32
  }
  func.func @transform_5(%arg0: i32) -> (i32, i32) {
    %c0_i32 = arith.constant 0 : i32
    %c0_i32_0 = arith.constant 0 : i32
    %c0_i32_1 = arith.constant 0 : i32
    return %c0_i32, %c0_i32_0 : i32, i32
  }
  func.func @transform_6(%arg0: i32) -> (i32, i32) {
    %c0_i32 = arith.constant 0 : i32
    %c0_i32_0 = arith.constant 0 : i32
    %c0_i32_1 = arith.constant 0 : i32
    return %c0_i32, %c0_i32_0 : i32, i32
  }
  func.func @transform_7(%arg0: i32) -> (i32, i32, i32, i32) {
    %c0_i32 = arith.constant 0 : i32
    %c0_i32_0 = arith.constant 0 : i32
    %c0_i32_1 = arith.constant 0 : i32
    %c0_i32_2 = arith.constant 0 : i32
    return %arg0, %c0_i32, %c0_i32_0, %c0_i32_1 : i32, i32, i32, i32
  }
}

</mosaic_0001>

<llo_original>
// kernel: tpu_custom_call.1
$region0: #{tpu_custom_call.1}
  #allocation0 [shape = 'u32[]', space=smem, size = 0x4, offset = 0x4, fixed_abs, tag = 'smem constant byte address 0x4 - core index']
  #allocation1 [shape = 'u32[144,128]{1,0:T(1,128)}', space=vmem, size = 0x12000, scoped, tag = 'internal scratch']
  #allocation2 [shape = 'f32[18,18,64]{2,1,0:T(8,128)}', space=vmem, size = 0x36000, scoped, tag = 'scratch operand']
  #allocation3 [shape = 'f32[18,18,64]{2,1,0:T(8,128)}', space=vmem, size = 0x36000, scoped, tag = 'scratch operand']
  %s0 = inlined_call_operand.hbm [shape: f32[2,16,16,32], index: 0, kind: input, shape index: {}]
  %s1 = inlined_call_operand.vmem [shape: f32[2,32,64], index: 1, kind: input, shape index: {}]
  %s2 = inlined_call_operand.vmem [shape: f32[2,1,64], index: 2, kind: input, shape index: {}]
  %s3 = inlined_call_operand.vmem [shape: f32[2,9,64], index: 3, kind: input, shape index: {}]
  %s4 = inlined_call_operand.vmem [shape: f32[2,1,64], index: 4, kind: input, shape index: {}]
  %s5 = inlined_call_operand.vmem [shape: f32[64,32], index: 5, kind: input, shape index: {}]
  %s6 = inlined_call_operand.vmem [shape: f32[1,32], index: 6, kind: input, shape index: {}]
  %s7 = inlined_call_operand.hbm [shape: f32[2,16,16,32], index: 7, kind: output, shape index: {}]
  %s8 = sld [smem:[#allocation0]]
  $region65: #{tpu_custom_call.1} parent=0
    _
  %s10 = ssub.s32 1, %s8
  %s11 = scalar_select 0, %s10, %s8
  $region1: #{tpu_custom_call.1} parent=0
    #allocation4 [shape = 'u8[262144]{0}', space=vmem, size = 0x40000, scoped, tag = 'input window, operand 0']
    #allocation5 [shape = 's32[2]{0}', space=sflag, size = 0x8, scoped, tag = 'scoped memory for tpu_custom_call.1']
    #allocation6 [shape = 's32[2]{0}', space=sflag, size = 0x8, scoped, tag = 'scoped memory for tpu_custom_call.1']
    #allocation7 [shape = 'u8[262144]{0}', space=vmem, size = 0x40000, scoped, tag = 'output window, operand 0']
    %12 = vsyncpa [#allocation5], 0
    %s13 = scalar_lea.sflag [#allocation5], 1
    %14 = vsyncpa %s13, 0
    %15 = vsyncpa [#allocation6], 0
    %s16 = scalar_lea.sflag [#allocation6], 1
    %17 = vsyncpa %s16, 0
    loop: start=0, step=1, limit=4
    $region2: #{tpu_custom_call.1} parent=1 // loop_pre_header
      _
    $region3: #{tpu_custom_call.1} parent=1 // loop_header
      %s19 = sphi 0, %s23
      %p20 = scmp.ge.s32.totalorder %s19, 4
      %s29 = sphi 0, %s31
      %s32 = sphi 0, %s29
      %s33 = sphi 0, %s32
      %s49 = sphi 0, %s33
      %s53 = sphi 0, %s53
      %s55 = sphi 0, %s53
      %s56 = sphi 0, %s55
      %s70 = sphi 0, %s56
      %s74 = sphi 0, %s74
      %s76 = sphi 0, %s74
      %s77 = sphi 0, %s76
      %s91 = sphi 0, %s77
      %s95 = sphi 0, %s95
      %s97 = sphi 0, %s95
      %s98 = sphi 0, %s97
      %s112 = sphi 0, %s98
      %s116 = sphi 0, %s116
      %s118 = sphi 0, %s116
      %s119 = sphi 0, %s118
      %s133 = sphi 0, %s119
      %s137 = sphi 0, %s137
      %s139 = sphi 0, %s137
      %s140 = sphi 0, %s139
      %s154 = sphi 0, %s140
      %s158 = sphi 0, %s158
      %s160 = sphi 0, %s158
      %s161 = sphi 0, %s160
      %s175 = sphi 0, %s161
      %s181 = sphi 0, %s183
      %s184 = sphi 0, %s181
      %s185 = sphi 0, %s184
      %s201 = sphi 0, %s185
    $region4: #{tpu_custom_call.1} parent=1 // loop_header_branch
      %22 = sbr.rel (%p20) target = $region8
    $region5: #{tpu_custom_call.1} parent=1 // loop_body
      %s24 = ssub.s32 %s19, 1
      %s25 = ssub.s32 %s19, 2
      %s26 = sadd.s32 %s19, 1
      %s27 = ssub.s32 %s19, %s26
      %p28 = scmp.eq.s32.totalorder %s27, 0
      %s30 = sadd.s32 %s29, 1
      %s31 = scalar_select %p28, %s29, %s30
      %p34 = pneg %p28
      %p35 = scmp.eq.s32.totalorder %s19, 1
      %p36 = por %p34, %p35
      %p37 = scmp.ne.s32.totalorder %s29, %s32
      %p38 = scmp.eq.s32.totalorder %s19, 0
      %p39 = por %p37, %p38
      %p40 = scmp.ne.s32.totalorder %s29, %s32
      %p41 = scmp.eq.s32.totalorder %s24, 1
      %p42 = por %p40, %p41
      %p43 = scmp.ne.s32.totalorder %s32, %s33
      %p44 = scmp.eq.s32.totalorder %s24, 0
      %p45 = por %p43, %p44
      %p46 = scmp.ne.s32.totalorder %s32, %s33
      %p47 = scmp.eq.s32.totalorder %s25, 1
      %p48 = por %p46, %p47
      %p50 = scmp.ne.s32.totalorder %s33, %s49
      %p51 = scmp.eq.s32.totalorder %s25, 0
      %p52 = por %p50, %p51
      %s54 = sadd.s32 %s53, 1
      %p57 = scmp.eq.s32.totalorder %s19, 1
      %p58 = scmp.ne.s32.totalorder %s53, %s55
      %p59 = scmp.eq.s32.totalorder %s19, 0
      %p60 = por %p58, %p59
      %p61 = scmp.ne.s32.totalorder %s53, %s55
      %p62 = scmp.eq.s32.totalorder %s24, 1
      %p63 = por %p61, %p62
      %p64 = scmp.ne.s32.totalorder %s55, %s56
      %p65 = scmp.eq.s32.totalorder %s24, 0
      %p66 = por %p64, %p65
      %p67 = scmp.ne.s32.totalorder %s55, %s56
      %p68 = scmp.eq.s32.totalorder %s25, 1
      %p69 = por %p67, %p68
      %p71 = scmp.ne.s32.totalorder %s56, %s70
      %p72 = scmp.eq.s32.totalorder %s25, 0
      %p73 = por %p71, %p72
      %s75 = sadd.s32 %s74, 1
      %p78 = scmp.eq.s32.totalorder %s19, 1
      %p79 = scmp.ne.s32.totalorder %s74, %s76
      %p80 = scmp.eq.s32.totalorder %s19, 0
      %p81 = por %p79, %p80
      %p82 = scmp.ne.s32.totalorder %s74, %s76
      %p83 = scmp.eq.s32.totalorder %s24, 1
      %p84 = por %p82, %p83
      %p85 = scmp.ne.s32.totalorder %s76, %s77
      %p86 = scmp.eq.s32.totalorder %s24, 0
      %p87 = por %p85, %p86
      %p88 = scmp.ne.s32.totalorder %s76, %s77
      %p89 = scmp.eq.s32.totalorder %s25, 1
      %p90 = por %p88, %p89
      %p92 = scmp.ne.s32.totalorder %s77, %s91
      %p93 = scmp.eq.s32.totalorder %s25, 0
      %p94 = por %p92, %p93
      %s96 = sadd.s32 %s95, 1
      %p99 = scmp.eq.s32.totalorder %s19, 1
      %p100 = scmp.ne.s32.totalorder %s95, %s97
      %p101 = scmp.eq.s32.totalorder %s19, 0
      %p102 = por %p100, %p101
      %p103 = scmp.ne.s32.totalorder %s95, %s97
      %p104 = scmp.eq.s32.totalorder %s24, 1
      %p105 = por %p103, %p104
      %p106 = scmp.ne.s32.totalorder %s97, %s98
      %p107 = scmp.eq.s32.totalorder %s24, 0
      %p108 = por %p106, %p107
      %p109 = scmp.ne.s32.totalorder %s97, %s98
      %p110 = scmp.eq.s32.totalorder %s25, 1
      %p111 = por %p109, %p110
      %p113 = scmp.ne.s32.totalorder %s98, %s112
      %p114 = scmp.eq.s32.totalorder %s25, 0
      %p115 = por %p113, %p114
      %s117 = sadd.s32 %s116, 1
      %p120 = scmp.eq.s32.totalorder %s19, 1
      %p121 = scmp.ne.s32.totalorder %s116, %s118
      %p122 = scmp.eq.s32.totalorder %s19, 0
      %p123 = por %p121, %p122
      %p124 = scmp.ne.s32.totalorder %s116, %s118
      %p125 = scmp.eq.s32.totalorder %s24, 1
      %p126 = por %p124, %p125
      %p127 = scmp.ne.s32.totalorder %s118, %s119
      %p128 = scmp.eq.s32.totalorder %s24, 0
      %p129 = por %p127, %p128
      %p130 = scmp.ne.s32.totalorder %s118, %s119
      %p131 = scmp.eq.s32.totalorder %s25, 1
      %p132 = por %p130, %p131
      %p134 = scmp.ne.s32.totalorder %s119, %s133
      %p135 = scmp.eq.s32.totalorder %s25, 0
      %p136 = por %p134, %p135
      %s138 = sadd.s32 %s137, 1
      %p141 = scmp.eq.s32.totalorder %s19, 1
      %p142 = scmp.ne.s32.totalorder %s137, %s139
      %p143 = scmp.eq.s32.totalorder %s19, 0
      %p144 = por %p142, %p143
      %p145 = scmp.ne.s32.totalorder %s137, %s139
      %p146 = scmp.eq.s32.totalorder %s24, 1
      %p147 = por %p145, %p146
      %p148 = scmp.ne.s32.totalorder %s139, %s140
      %p149 = scmp.eq.s32.totalorder %s24, 0
      %p150 = por %p148, %p149
      %p151 = scmp.ne.s32.totalorder %s139, %s140
      %p152 = scmp.eq.s32.totalorder %s25, 1
      %p153 = por %p151, %p152
      %p155 = scmp.ne.s32.totalorder %s140, %s154
      %p156 = scmp.eq.s32.totalorder %s25, 0
      %p157 = por %p155, %p156
      %s159 = sadd.s32 %s158, 1
      %p162 = scmp.eq.s32.totalorder %s19, 1
      %p163 = scmp.ne.s32.totalorder %s158, %s160
      %p164 = scmp.eq.s32.totalorder %s19, 0
      %p165 = por %p163, %p164
      %p166 = scmp.ne.s32.totalorder %s158, %s160
      %p167 = scmp.eq.s32.totalorder %s24, 1
      %p168 = por %p166, %p167
      %p169 = scmp.ne.s32.totalorder %s160, %s161
      %p170 = scmp.eq.s32.totalorder %s24, 0
      %p171 = por %p169, %p170
      %p172 = scmp.ne.s32.totalorder %s160, %s161
      %p173 = scmp.eq.s32.totalorder %s25, 1
      %p174 = por %p172, %p173
      %p176 = scmp.ne.s32.totalorder %s161, %s175
      %p177 = scmp.eq.s32.totalorder %s25, 0
      %p178 = por %p176, %p177
      %s179 = ssub.s32 %s19, %s26
      %p180 = scmp.eq.s32.totalorder %s179, 0
      %s182 = sadd.s32 %s181, 1
      %s183 = scalar_select %p180, %s181, %s182
      %p186 = pneg %p180
      %p187 = scmp.eq.s32.totalorder %s19, 1
      %p188 = por %p186, %p187
      %p189 = scmp.ne.s32.totalorder %s181, %s184
      %p190 = scmp.eq.s32.totalorder %s19, 0
      %p191 = por %p189, %p190
      %p192 = scmp.ne.s32.totalorder %s181, %s184
      %p193 = scmp.eq.s32.totalorder %s24, 1
      %p194 = por %p192, %p193
      %p195 = scmp.ne.s32.totalorder %s184, %s185
      %p196 = scmp.eq.s32.totalorder %s24, 0
      %p197 = por %p195, %p196
      %p198 = scmp.ne.s32.totalorder %s184, %s185
      %p199 = scmp.eq.s32.totalorder %s25, 1
      %p200 = por %p198, %p199
      %p202 = scmp.ne.s32.totalorder %s185, %s201
      %p203 = scmp.eq.s32.totalorder %s25, 0
      %p204 = por %p202, %p203
      %p205 = scmp.le.s32.totalorder 1, %s19
      %p206 = scmp.lt.s32.totalorder %s19, 3
      %p207 = pnand %p205, %p206
      %p208 = pneg %p207
      // Predicated region
      $region9: #{tpu_custom_call.1} parent=5 // pred_check
        _
      $region10: #{tpu_custom_call.1} parent=5 // pred_check_branch
        %210 = sbr.rel (%p207) target = $region12
      $region11: #{tpu_custom_call.1} parent=5 // pred_region
        %s211 = ssub.s32 %s19, 1
        // Predicated region
        $region13: #{tpu_custom_call.1} parent=11 // pred_check
          %p212 = pneg %p66
        $region14: #{tpu_custom_call.1} parent=11 // pred_check_branch
          %214 = sbr.rel (%p212) target = $region16
        $region15: #{tpu_custom_call.1} parent=11 // pred_region
          _
        $region16: #{tpu_custom_call.1} parent=11 // pred_fallthru
          _
        // Predicated region
        $region17: #{tpu_custom_call.1} parent=11 // pred_check
          %p215 = pneg %p87
        $region18: #{tpu_custom_call.1} parent=11 // pred_check_branch
          %217 = sbr.rel (%p215) target = $region20
        $region19: #{tpu_custom_call.1} parent=11 // pred_region
          _
        $region20: #{tpu_custom_call.1} parent=11 // pred_fallthru
          _
        // Predicated region
        $region21: #{tpu_custom_call.1} parent=11 // pred_check
          %p218 = pneg %p108
        $region22: #{tpu_custom_call.1} parent=11 // pred_check_branch
          %220 = sbr.rel (%p218) target = $region24
        $region23: #{tpu_custom_call.1} parent=11 // pred_region
          _
        $region24: #{tpu_custom_call.1} parent=11 // pred_fallthru
          _
        // Predicated region
        $region25: #{tpu_custom_call.1} parent=11 // pred_check
          %p221 = pneg %p129
        $region26: #{tpu_custom_call.1} parent=11 // pred_check_branch
          %223 = sbr.rel (%p221) target = $region28
        $region27: #{tpu_custom_call.1} parent=11 // pred_region
          _
        $region28: #{tpu_custom_call.1} parent=11 // pred_fallthru
          _
        // Predicated region
        $region29: #{tpu_custom_call.1} parent=11 // pred_check
          %p224 = pneg %p150
        $region30: #{tpu_custom_call.1} parent=11 // pred_check_branch
          %226 = sbr.rel (%p224) target = $region32
        $region31: #{tpu_custom_call.1} parent=11 // pred_region
          _
        $region32: #{tpu_custom_call.1} parent=11 // pred_fallthru
          _
        // Predicated region
        $region33: #{tpu_custom_call.1} parent=11 // pred_check
          %p227 = pneg %p171
        $region34: #{tpu_custom_call.1} parent=11 // pred_check_branch
          %229 = sbr.rel (%p227) target = $region36
        $region35: #{tpu_custom_call.1} parent=11 // pred_region
          _
        $region36: #{tpu_custom_call.1} parent=11 // pred_fallthru
          _
      $region12: #{tpu_custom_call.1} parent=5 // pred_fallthru
        _
      %p230 = scmp.lt.s32.totalorder %s19, 2
      // Predicated region
      $region37: #{tpu_custom_call.1} parent=5 // pred_check
        %p231 = pneg %p230
      $region38: #{tpu_custom_call.1} parent=5 // pred_check_branch
        %233 = sbr.rel (%p231) target = $region40
      $region39: #{tpu_custom_call.1} parent=5 // pred_region
        // Predicated region
        $region41: #{tpu_custom_call.1} parent=39 // pred_check
          %p234 = pneg %p39
        $region42: #{tpu_custom_call.1} parent=39 // pred_check_branch
          %236 = sbr.rel (%p234) target = $region44
        $region43: #{tpu_custom_call.1} parent=39 // pred_region
          %s237 = sand.u32 %s29, 1
          %s238 = scalar_lea.sflag [#allocation5], %s237
          %s239 = sand.u32 %s29, 1
          %s240 = smul.addr %s239, 256
          %s241 = scalar_lea.vmem [#allocation4], %s240
          %s243 = ssub.s32 4096, 4096
          %244 = vsyncadd %s238, %s243
          %s245 = smul.addr %s19, 32
          %s246 = smul.addr %s245, 128
          %s247 = scalar_lea.hbm %s0, %s246
          %s248 = sshll.u32 %s241, 4
          %s249 = int_to_ptr.vmem [resolvable:$true] %s248
          %254 = dma.hbm_to_vmem [thread:$0]  %s247, 4096, %s249, %s238, 128, 128, 8
        $region44: #{tpu_custom_call.1} parent=39 // pred_fallthru
          _
      $region40: #{tpu_custom_call.1} parent=5 // pred_fallthru
        _
      %p255 = scmp.le.s32.totalorder 1, %s19
      %p256 = scmp.lt.s32.totalorder %s19, 3
      %p257 = pnand %p255, %p256
      %p258 = pneg %p257
      // Predicated region
      $region45: #{tpu_custom_call.1} parent=5 // pred_check
        _
      $region46: #{tpu_custom_call.1} parent=5 // pred_check_branch
        %260 = sbr.rel (%p257) target = $region48
      $region47: #{tpu_custom_call.1} parent=5 // pred_region
        %s261 = ssub.s32 %s19, 1
        %s262 = sand.u32 %s32, 1
        %s263 = scalar_lea.sflag [#allocation5], %s262
        %s264 = sand.u32 %s32, 1
        %s265 = smul.addr %s264, 256
        %s266 = scalar_lea.vmem [#allocation4], %s265
        // Predicated region
        $region49: #{tpu_custom_call.1} parent=47 // pred_check
          %p267 = pneg %p45
        $region50: #{tpu_custom_call.1} parent=47 // pred_check_branch
          %269 = sbr.rel (%p267) target = $region52
        $region51: #{tpu_custom_call.1} parent=47 // pred_region
          %270 = dma.done %s263, 4096
        $region52: #{tpu_custom_call.1} parent=47 // pred_fallthru
          _
        %s271 = sand.u32 %s32, 1
        %s272 = scalar_lea.sflag [#allocation5], %s271
        %s273 = sand.u32 %s32, 1
        %s274 = smul.addr %s273, 256
        %s275 = scalar_lea.vmem [#allocation4], %s274
        %p276 = pneg %p45
        %p277 = pneg %p42
        %p278 = pneg %p66
        %p279 = pneg %p63
        %p280 = pneg %p87
        %p281 = pneg %p84
        %p282 = pneg %p108
        %p283 = pneg %p105
        %p284 = pneg %p129
        %p285 = pneg %p126
        %p286 = pneg %p150
        %p287 = pneg %p147
        %p288 = pneg %p171
        %p289 = pneg %p168
        %p290 = pneg %p197
        %p291 = pneg %p194
        %s292 = sand.u32 %s184, 1
        %s293 = scalar_lea.sflag [#allocation6], %s292
        %s294 = sand.u32 %s184, 1
        %s295 = smul.addr %s294, 256
        %s296 = scalar_lea.vmem [#allocation7], %s295
        %v297 = vld [vmem:[%s266] sm:$0xff]
        %v298 = vld [vmem:[%s266 + $0x8] sm:$0xff]
        %v299 = vld [vmem:[%s266 + $0x10] sm:$0xff]
        %v300 = vld [vmem:[%s266 + $0x18] sm:$0xff]
        %v301 = vld [vmem:[%s266 + $0x20] sm:$0xff]
        %v302 = vld [vmem:[%s266 + $0x28] sm:$0xff]
        %v303 = vld [vmem:[%s266 + $0x30] sm:$0xff]
        %v304 = vld [vmem:[%s266 + $0x38] sm:$0xff]
        %v305 = vld [vmem:[%s266 + $0x40] sm:$0xff]
        %v306 = vld [vmem:[%s266 + $0x48] sm:$0xff]
        %v307 = vld [vmem:[%s266 + $0x50] sm:$0xff]
        %v308 = vld [vmem:[%s266 + $0x58] sm:$0xff]
        %v309 = vld [vmem:[%s266 + $0x60] sm:$0xff]
        %v310 = vld [vmem:[%s266 + $0x68] sm:$0xff]
        %v311 = vld [vmem:[%s266 + $0x70] sm:$0xff]
        %v312 = vld [vmem:[%s266 + $0x78] sm:$0xff]
        %v313 = vld [vmem:[%s266 + $0x80] sm:$0xff]
        %v314 = vld [vmem:[%s266 + $0x88] sm:$0xff]
        %v315 = vld [vmem:[%s266 + $0x90] sm:$0xff]
        %v316 = vld [vmem:[%s266 + $0x98] sm:$0xff]
        %v317 = vld [vmem:[%s266 + $0xa0] sm:$0xff]
        %v318 = vld [vmem:[%s266 + $0xa8] sm:$0xff]
        %v319 = vld [vmem:[%s266 + $0xb0] sm:$0xff]
        %v320 = vld [vmem:[%s266 + $0xb8] sm:$0xff]
        %v321 = vld [vmem:[%s266 + $0xc0] sm:$0xff]
        %v322 = vld [vmem:[%s266 + $0xc8] sm:$0xff]
        %v323 = vld [vmem:[%s266 + $0xd0] sm:$0xff]
        %v324 = vld [vmem:[%s266 + $0xd8] sm:$0xff]
        %v325 = vld [vmem:[%s266 + $0xe0] sm:$0xff]
        %v326 = vld [vmem:[%s266 + $0xe8] sm:$0xff]
        %v327 = vld [vmem:[%s266 + $0xf0] sm:$0xff]
        %v328 = vld [vmem:[%s266 + $0xf8] sm:$0xff]
        %v329 = vld [vmem:[%s1] sm:$0xff]
        %v330 = vld [vmem:[%s1 + $0x8] sm:$0xff]
        %v331 = vld [vmem:[%s1 + $0x10] sm:$0xff]
        %v332 = vld [vmem:[%s1 + $0x18] sm:$0xff]
        %v333 = vld [vmem:[%s2] sm:$0x1]
        %v335 = vlaneseq
        %v336 = vshrl.u32 %v335, 7
        %v337 = vsub.s32 0, %v336
        %v338 = vrot.slane %v333, %v337
        %vm340 = vcmask 261120
        %v342 = vsel %vm340, %v297, 0
        %v345 = vsel %vm340, %v298, 0
        %v348 = vsel %vm340, %v299, 0
        %v351 = vsel %vm340, %v300, 0
        %v354 = vsel %vm340, %v301, 0
        %v357 = vsel %vm340, %v302, 0
        %v360 = vsel %vm340, %v303, 0
        %v363 = vsel %vm340, %v304, 0
        %v366 = vsel %vm340, %v305, 0
        %v369 = vsel %vm340, %v306, 0
        %v372 = vsel %vm340, %v307, 0
        %v375 = vsel %vm340, %v308, 0
        %v378 = vsel %vm340, %v309, 0
        %v381 = vsel %vm340, %v310, 0
        %v384 = vsel %vm340, %v311, 0
        %v387 = vsel %vm340, %v312, 0
        %v390 = vsel %vm340, %v313, 0
        %v393 = vsel %vm340, %v314, 0
        %v396 = vsel %vm340, %v315, 0
        %v399 = vsel %vm340, %v316, 0
        %v402 = vsel %vm340, %v317, 0
        %v405 = vsel %vm340, %v318, 0
        %v408 = vsel %vm340, %v319, 0
        %v411 = vsel %vm340, %v320, 0
        %v414 = vsel %vm340, %v321, 0
        %v417 = vsel %vm340, %v322, 0
        %v420 = vsel %vm340, %v323, 0
        %v423 = vsel %vm340, %v324, 0
        %v426 = vsel %vm340, %v325, 0
        %v429 = vsel %vm340, %v326, 0
        %v432 = vsel %vm340, %v327, 0
        %v435 = vsel %vm340, %v328, 0
        %437 = vmatprep.subr.mxu0 0.0
        %438 = vmatpush1.msra.mxu0 0.0
        %439 = vmatprep.subr.mxu0 0.0
        %440 = vmatpush1.msra.mxu0 0.0
        %441 = vmatprep.subr.mxu0 0.0
        %442 = vmatpush1.msra.mxu0 0.0
        %443 = vmatprep.subr.mxu0 0.0
        %444 = vmatpush1.msra.mxu0 0.0
        %445 = vmatprep.subr.mxu0 0.0
        %446 = vmatpush1.msra.mxu0 0.0
        %447 = vmatprep.subr.mxu0 0.0
        %448 = vmatpush1.msra.mxu0 0.0
        %449 = vmatprep.subr.mxu0 0.0
        %450 = vmatpush1.msra.mxu0 0.0
        %451 = vmatprep.subr.mxu0 0.0
        %452 = vmatpush1.msra.mxu0 0.0
        %453 = vmatprep.subr.mxu0 0.0
        %454 = vmatpush1.msra.mxu0 0.0
        %455 = vmatprep.subr.mxu0 0.0
        %456 = vmatpush1.msra.mxu0 0.0
        %457 = vmatprep.subr.mxu0 0.0
        %458 = vmatpush1.msra.mxu0 0.0
        %459 = vmatprep.subr.mxu0 0.0
        %460 = vmatpush1.msra.mxu0 0.0
        %461 = vmatprep.subr.mxu0 0.0
        %462 = vmatpush1.msra.mxu0 %v332
        %463 = vmatprep.subr.mxu0 0.0
        %464 = vmatpush1.msra.mxu0 %v331
        %465 = vmatprep.subr.mxu0 0.0
        %466 = vmatpush1.msra.mxu0 %v330
        %467 = vmatprep.subr.mxu0 0.0
        %468 = vmatpush1.msra.mxu0 %v329
        %469 = vmatprep.subr.mxu0 0.0
        %470 = vmatpush2.msra.mxu0 0.0
        %471 = vmatprep.subr.mxu0 0.0
        %472 = vmatpush2.msra.mxu0 0.0
        %473 = vmatprep.subr.mxu0 0.0
        %474 = vmatpush2.msra.mxu0 0.0
        %475 = vmatprep.subr.mxu0 0.0
        %476 = vmatpush2.msra.mxu0 0.0
        %477 = vmatprep.subr.mxu0 0.0
        %478 = vmatpush2.msra.mxu0 0.0
        %479 = vmatprep.subr.mxu0 0.0
        %480 = vmatpush2.msra.mxu0 0.0
        %481 = vmatprep.subr.mxu0 0.0
        %482 = vmatpush2.msra.mxu0 0.0
        %483 = vmatprep.subr.mxu0 0.0
        %484 = vmatpush2.msra.mxu0 0.0
        %485 = vmatprep.subr.mxu0 0.0
        %486 = vmatpush2.msra.mxu0 0.0
        %487 = vmatprep.subr.mxu0 0.0
        %488 = vmatpush2.msra.mxu0 0.0
        %489 = vmatprep.subr.mxu0 0.0
        %490 = vmatpush2.msra.mxu0 0.0
        %491 = vmatprep.subr.mxu0 0.0
        %492 = vmatpush2.msra.mxu0 0.0
        %493 = vmatprep.subr.mxu0 0.0
        %494 = vmatpush2.msra.mxu0 0.0
        %495 = vmatprep.subr.mxu0 0.0
        %496 = vmatpush2.msra.mxu0 0.0
        %497 = vmatprep.subr.mxu0 0.0
        %498 = vmatpush2.msra.mxu0 0.0
        %499 = vmatprep.subr.mxu0 0.0
        %500 = vmatpush2.msra.mxu0 0.0
        %501 = vmatprep.mubr.f32.mxu0 0.0
        %502 = vmatmul.mubr.f32.gmra.mxu0 %v342
        %v503 = vpop.f32.mrf.mxu0
        %v504 = vadd.f32 %v338, %v503
        %v505 = vpop.f32.mrf.mxu0
        %506 = vmatprep.mubr.f32.mxu0 0.0
        %507 = vmatmul.mubr.f32.gmra.mxu0 %v345
        %v508 = vpop.f32.mrf.mxu0
        %v509 = vadd.f32 %v338, %v508
        %v510 = vpop.f32.mrf.mxu0
        %511 = vmatprep.mubr.f32.mxu0 0.0
        %512 = vmatmul.mubr.f32.gmra.mxu0 %v348
        %v513 = vpop.f32.mrf.mxu0
        %v514 = vadd.f32 %v338, %v513
        %v515 = vpop.f32.mrf.mxu0
        %516 = vmatprep.mubr.f32.mxu0 0.0
        %517 = vmatmul.mubr.f32.gmra.mxu0 %v351
        %v518 = vpop.f32.mrf.mxu0
        %v519 = vadd.f32 %v338, %v518
        %v520 = vpop.f32.mrf.mxu0
        %521 = vmatprep.mubr.f32.mxu0 0.0
        %522 = vmatmul.mubr.f32.gmra.mxu0 %v354
        %v523 = vpop.f32.mrf.mxu0
        %v524 = vadd.f32 %v338, %v523
        %v525 = vpop.f32.mrf.mxu0
        %526 = vmatprep.mubr.f32.mxu0 0.0
        %527 = vmatmul.mubr.f32.gmra.mxu0 %v357
        %v528 = vpop.f32.mrf.mxu0
        %v529 = vadd.f32 %v338, %v528
        %v530 = vpop.f32.mrf.mxu0
        %531 = vmatprep.mubr.f32.mxu0 0.0
        %532 = vmatmul.mubr.f32.gmra.mxu0 %v360
        %v533 = vpop.f32.mrf.mxu0
        %v534 = vadd.f32 %v338, %v533
        %v535 = vpop.f32.mrf.mxu0
        %536 = vmatprep.mubr.f32.mxu0 0.0
        %537 = vmatmul.mubr.f32.gmra.mxu0 %v363
        %v538 = vpop.f32.mrf.mxu0
        %v539 = vadd.f32 %v338, %v538
        %v540 = vpop.f32.mrf.mxu0
        %541 = vmatprep.mubr.f32.mxu0 0.0
        %542 = vmatmul.mubr.f32.gmra.mxu0 %v366
        %v543 = vpop.f32.mrf.mxu0
        %v544 = vadd.f32 %v338, %v543
        %v545 = vpop.f32.mrf.mxu0
        %546 = vmatprep.mubr.f32.mxu0 0.0
        %547 = vmatmul.mubr.f32.gmra.mxu0 %v369
        %v548 = vpop.f32.mrf.mxu0
        %v549 = vadd.f32 %v338, %v548
        %v550 = vpop.f32.mrf.mxu0
        %551 = vmatprep.mubr.f32.mxu0 0.0
        %552 = vmatmul.mubr.f32.gmra.mxu0 %v372
        %v553 = vpop.f32.mrf.mxu0
        %v554 = vadd.f32 %v338, %v553
        %v555 = vpop.f32.mrf.mxu0
        %556 = vmatprep.mubr.f32.mxu0 0.0
        %557 = vmatmul.mubr.f32.gmra.mxu0 %v375
        %v558 = vpop.f32.mrf.mxu0
        %v559 = vadd.f32 %v338, %v558
        %v560 = vpop.f32.mrf.mxu0
        %561 = vmatprep.mubr.f32.mxu0 0.0
        %562 = vmatmul.mubr.f32.gmra.mxu0 %v378
        %v563 = vpop.f32.mrf.mxu0
        %v564 = vadd.f32 %v338, %v563
        %v565 = vpop.f32.mrf.mxu0
        %566 = vmatprep.mubr.f32.mxu0 0.0
        %567 = vmatmul.mubr.f32.gmra.mxu0 %v381
        %v568 = vpop.f32.mrf.mxu0
        %v569 = vadd.f32 %v338, %v568
        %v570 = vpop.f32.mrf.mxu0
        %571 = vmatprep.mubr.f32.mxu0 0.0
        %572 = vmatmul.mubr.f32.gmra.mxu0 %v384
        %v573 = vpop.f32.mrf.mxu0
        %v574 = vadd.f32 %v338, %v573
        %v575 = vpop.f32.mrf.mxu0
        %576 = vmatprep.mubr.f32.mxu0 0.0
        %577 = vmatmul.mubr.f32.gmra.mxu0 %v387
        %v578 = vpop.f32.mrf.mxu0
        %v579 = vadd.f32 %v338, %v578
        %v580 = vpop.f32.mrf.mxu0
        %581 = vmatprep.mubr.f32.mxu0 0.0
        %582 = vmatmul.mubr.f32.gmra.mxu0 %v390
        %v583 = vpop.f32.mrf.mxu0
        %v584 = vadd.f32 %v338, %v583
        %v585 = vpop.f32.mrf.mxu0
        %586 = vmatprep.mubr.f32.mxu0 0.0
        %587 = vmatmul.mubr.f32.gmra.mxu0 %v393
        %v588 = vpop.f32.mrf.mxu0
        %v589 = vadd.f32 %v338, %v588
        %v590 = vpop.f32.mrf.mxu0
        %591 = vmatprep.mubr.f32.mxu0 0.0
        %592 = vmatmul.mubr.f32.gmra.mxu0 %v396
        %v593 = vpop.f32.mrf.mxu0
        %v594 = vadd.f32 %v338, %v593
        %v595 = vpop.f32.mrf.mxu0
        %596 = vmatprep.mubr.f32.mxu0 0.0
        %597 = vmatmul.mubr.f32.gmra.mxu0 %v399
        %v598 = vpop.f32.mrf.mxu0
        %v599 = vadd.f32 %v338, %v598
        %v600 = vpop.f32.mrf.mxu0
        %601 = vmatprep.mubr.f32.mxu0 0.0
        %602 = vmatmul.mubr.f32.gmra.mxu0 %v402
        %v603 = vpop.f32.mrf.mxu0
        %v604 = vadd.f32 %v338, %v603
        %v605 = vpop.f32.mrf.mxu0
        %606 = vmatprep.mubr.f32.mxu0 0.0
        %607 = vmatmul.mubr.f32.gmra.mxu0 %v405
        %v608 = vpop.f32.mrf.mxu0
        %v609 = vadd.f32 %v338, %v608
        %v610 = vpop.f32.mrf.mxu0
        %611 = vmatprep.mubr.f32.mxu0 0.0
        %612 = vmatmul.mubr.f32.gmra.mxu0 %v408
        %v613 = vpop.f32.mrf.mxu0
        %v614 = vadd.f32 %v338, %v613
        %v615 = vpop.f32.mrf.mxu0
        %616 = vmatprep.mubr.f32.mxu0 0.0
        %617 = vmatmul.mubr.f32.gmra.mxu0 %v411
        %v618 = vpop.f32.mrf.mxu0
        %v619 = vadd.f32 %v338, %v618
        %v620 = vpop.f32.mrf.mxu0
        %621 = vmatprep.mubr.f32.mxu0 0.0
        %622 = vmatmul.mubr.f32.gmra.mxu0 %v414
        %v623 = vpop.f32.mrf.mxu0
        %v624 = vadd.f32 %v338, %v623
        %v625 = vpop.f32.mrf.mxu0
        %626 = vmatprep.mubr.f32.mxu0 0.0
        %627 = vmatmul.mubr.f32.gmra.mxu0 %v417
        %v628 = vpop.f32.mrf.mxu0
        %v629 = vadd.f32 %v338, %v628
        %v630 = vpop.f32.mrf.mxu0
        %631 = vmatprep.mubr.f32.mxu0 0.0
        %632 = vmatmul.mubr.f32.gmra.mxu0 %v420
        %v633 = vpop.f32.mrf.mxu0
        %v634 = vadd.f32 %v338, %v633
        %v635 = vpop.f32.mrf.mxu0
        %636 = vmatprep.mubr.f32.mxu0 0.0
        %637 = vmatmul.mubr.f32.gmra.mxu0 %v423
        %v638 = vpop.f32.mrf.mxu0
        %v639 = vadd.f32 %v338, %v638
        %v640 = vpop.f32.mrf.mxu0
        %641 = vmatprep.mubr.f32.mxu0 0.0
        %642 = vmatmul.mubr.f32.gmra.mxu0 %v426
        %v643 = vpop.f32.mrf.mxu0
        %v644 = vadd.f32 %v338, %v643
        %v645 = vpop.f32.mrf.mxu0
        %646 = vmatprep.mubr.f32.mxu0 0.0
        %647 = vmatmul.mubr.f32.gmra.mxu0 %v429
        %v648 = vpop.f32.mrf.mxu0
        %v649 = vadd.f32 %v338, %v648
        %v650 = vpop.f32.mrf.mxu0
        %651 = vmatprep.mubr.f32.mxu0 0.0
        %652 = vmatmul.mubr.f32.gmra.mxu0 %v432
        %v653 = vpop.f32.mrf.mxu0
        %v654 = vadd.f32 %v338, %v653
        %v655 = vpop.f32.mrf.mxu0
        %656 = vmatprep.mubr.f32.mxu0 0.0
        %657 = vmatmul.mubr.f32.gmra.mxu0 %v435
        %v658 = vpop.f32.mrf.mxu0
        %v659 = vadd.f32 %v338, %v658
        %v660 = vpop.f32.mrf.mxu0
        %661 = vdwg.mxu0
        %s662 = scalar_lea.vmem %s1, 32
        %v663 = vld [vmem:[%s662] sm:$0xff]
        %v664 = vld [vmem:[%s662 + $0x8] sm:$0xff]
        %v665 = vld [vmem:[%s662 + $0x10] sm:$0xff]
        %v666 = vld [vmem:[%s662 + $0x18] sm:$0xff]
        %s667 = scalar_lea.vmem %s2, 1
        %v668 = vld [vmem:[%s667] sm:$0x1]
        %v670 = vlaneseq
        %v671 = vshrl.u32 %v670, 7
        %v672 = vsub.s32 0, %v671
        %v673 = vrot.slane %v668, %v672
        %675 = vmatprep.subr.mxu0 0.0
        %676 = vmatpush1.msra.mxu0 0.0
        %677 = vmatprep.subr.mxu0 0.0
        %678 = vmatpush1.msra.mxu0 0.0
        %679 = vmatprep.subr.mxu0 0.0
        %680 = vmatpush1.msra.mxu0 0.0
        %681 = vmatprep.subr.mxu0 0.0
        %682 = vmatpush1.msra.mxu0 0.0
        %683 = vmatprep.subr.mxu0 0.0
        %684 = vmatpush1.msra.mxu0 0.0
        %685 = vmatprep.subr.mxu0 0.0
        %686 = vmatpush1.msra.mxu0 0.0
        %687 = vmatprep.subr.mxu0 0.0
        %688 = vmatpush1.msra.mxu0 0.0
        %689 = vmatprep.subr.mxu0 0.0
        %690 = vmatpush1.msra.mxu0 0.0
        %691 = vmatprep.subr.mxu0 0.0
        %692 = vmatpush1.msra.mxu0 0.0
        %693 = vmatprep.subr.mxu0 0.0
        %694 = vmatpush1.msra.mxu0 0.0
        %695 = vmatprep.subr.mxu0 0.0
        %696 = vmatpush1.msra.mxu0 0.0
        %697 = vmatprep.subr.mxu0 0.0
        %698 = vmatpush1.msra.mxu0 0.0
        %699 = vmatprep.subr.mxu0 0.0
        %700 = vmatpush1.msra.mxu0 %v666
        %701 = vmatprep.subr.mxu0 0.0
        %702 = vmatpush1.msra.mxu0 %v665
        %703 = vmatprep.subr.mxu0 0.0
        %704 = vmatpush1.msra.mxu0 %v664
        %705 = vmatprep.subr.mxu0 0.0
        %706 = vmatpush1.msra.mxu0 %v663
        %707 = vmatprep.subr.mxu0 0.0
        %708 = vmatpush2.msra.mxu0 0.0
        %709 = vmatprep.subr.mxu0 0.0
        %710 = vmatpush2.msra.mxu0 0.0
        %711 = vmatprep.subr.mxu0 0.0
        %712 = vmatpush2.msra.mxu0 0.0
        %713 = vmatprep.subr.mxu0 0.0
        %714 = vmatpush2.msra.mxu0 0.0
        %715 = vmatprep.subr.mxu0 0.0
        %716 = vmatpush2.msra.mxu0 0.0
        %717 = vmatprep.subr.mxu0 0.0
        %718 = vmatpush2.msra.mxu0 0.0
        %719 = vmatprep.subr.mxu0 0.0
        %720 = vmatpush2.msra.mxu0 0.0
        %721 = vmatprep.subr.mxu0 0.0
        %722 = vmatpush2.msra.mxu0 0.0
        %723 = vmatprep.subr.mxu0 0.0
        %724 = vmatpush2.msra.mxu0 0.0
        %725 = vmatprep.subr.mxu0 0.0
        %726 = vmatpush2.msra.mxu0 0.0
        %727 = vmatprep.subr.mxu0 0.0
        %728 = vmatpush2.msra.mxu0 0.0
        %729 = vmatprep.subr.mxu0 0.0
        %730 = vmatpush2.msra.mxu0 0.0
        %731 = vmatprep.subr.mxu0 0.0
        %732 = vmatpush2.msra.mxu0 0.0
        %733 = vmatprep.subr.mxu0 0.0
        %734 = vmatpush2.msra.mxu0 0.0
        %735 = vmatprep.subr.mxu0 0.0
        %736 = vmatpush2.msra.mxu0 0.0
        %737 = vmatprep.subr.mxu0 0.0
        %738 = vmatpush2.msra.mxu0 0.0
        %739 = vmatprep.mubr.f32.mxu0 0.0
        %740 = vmatmul.mubr.f32.gmra.mxu0 %v342
        %v741 = vpop.f32.mrf.mxu0
        %v742 = vadd.f32 %v673, %v741
        %v743 = vpop.f32.mrf.mxu0
        %744 = vmatprep.mubr.f32.mxu0 0.0
        %745 = vmatmul.mubr.f32.gmra.mxu0 %v345
        %v746 = vpop.f32.mrf.mxu0
        %v747 = vadd.f32 %v673, %v746
        %v748 = vpop.f32.mrf.mxu0
        %749 = vmatprep.mubr.f32.mxu0 0.0
        %750 = vmatmul.mubr.f32.gmra.mxu0 %v348
        %v751 = vpop.f32.mrf.mxu0
        %v752 = vadd.f32 %v673, %v751
        %v753 = vpop.f32.mrf.mxu0
        %754 = vmatprep.mubr.f32.mxu0 0.0
        %755 = vmatmul.mubr.f32.gmra.mxu0 %v351
        %v756 = vpop.f32.mrf.mxu0
        %v757 = vadd.f32 %v673, %v756
        %v758 = vpop.f32.mrf.mxu0
        %759 = vmatprep.mubr.f32.mxu0 0.0
        %760 = vmatmul.mubr.f32.gmra.mxu0 %v354
        %v761 = vpop.f32.mrf.mxu0
        %v762 = vadd.f32 %v673, %v761
        %v763 = vpop.f32.mrf.mxu0
        %764 = vmatprep.mubr.f32.mxu0 0.0
        %765 = vmatmul.mubr.f32.gmra.mxu0 %v357
        %v766 = vpop.f32.mrf.mxu0
        %v767 = vadd.f32 %v673, %v766
        %v768 = vpop.f32.mrf.mxu0
        %769 = vmatprep.mubr.f32.mxu0 0.0
        %770 = vmatmul.mubr.f32.gmra.mxu0 %v360
        %v771 = vpop.f32.mrf.mxu0
        %v772 = vadd.f32 %v673, %v771
        %v773 = vpop.f32.mrf.mxu0
        %774 = vmatprep.mubr.f32.mxu0 0.0
        %775 = vmatmul.mubr.f32.gmra.mxu0 %v363
        %v776 = vpop.f32.mrf.mxu0
        %v777 = vadd.f32 %v673, %v776
        %v778 = vpop.f32.mrf.mxu0
        %779 = vmatprep.mubr.f32.mxu0 0.0
        %780 = vmatmul.mubr.f32.gmra.mxu0 %v366
        %v781 = vpop.f32.mrf.mxu0
        %v782 = vadd.f32 %v673, %v781
        %v783 = vpop.f32.mrf.mxu0
        %784 = vmatprep.mubr.f32.mxu0 0.0
        %785 = vmatmul.mubr.f32.gmra.mxu0 %v369
        %v786 = vpop.f32.mrf.mxu0
        %v787 = vadd.f32 %v673, %v786
        %v788 = vpop.f32.mrf.mxu0
        %789 = vmatprep.mubr.f32.mxu0 0.0
        %790 = vmatmul.mubr.f32.gmra.mxu0 %v372
        %v791 = vpop.f32.mrf.mxu0
        %v792 = vadd.f32 %v673, %v791
        %v793 = vpop.f32.mrf.mxu0
        %794 = vmatprep.mubr.f32.mxu0 0.0
        %795 = vmatmul.mubr.f32.gmra.mxu0 %v375
        %v796 = vpop.f32.mrf.mxu0
        %v797 = vadd.f32 %v673, %v796
        %v798 = vpop.f32.mrf.mxu0
        %799 = vmatprep.mubr.f32.mxu0 0.0
        %800 = vmatmul.mubr.f32.gmra.mxu0 %v378
        %v801 = vpop.f32.mrf.mxu0
        %v802 = vadd.f32 %v673, %v801
        %v803 = vpop.f32.mrf.mxu0
        %804 = vmatprep.mubr.f32.mxu0 0.0
        %805 = vmatmul.mubr.f32.gmra.mxu0 %v381
        %v806 = vpop.f32.mrf.mxu0
        %v807 = vadd.f32 %v673, %v806
        %v808 = vpop.f32.mrf.mxu0
        %809 = vmatprep.mubr.f32.mxu0 0.0
        %810 = vmatmul.mubr.f32.gmra.mxu0 %v384
        %v811 = vpop.f32.mrf.mxu0
        %v812 = vadd.f32 %v673, %v811
        %v813 = vpop.f32.mrf.mxu0
        %814 = vmatprep.mubr.f32.mxu0 0.0
        %815 = vmatmul.mubr.f32.gmra.mxu0 %v387
        %v816 = vpop.f32.mrf.mxu0
        %v817 = vadd.f32 %v673, %v816
        %v818 = vpop.f32.mrf.mxu0
        %819 = vmatprep.mubr.f32.mxu0 0.0
        %820 = vmatmul.mubr.f32.gmra.mxu0 %v390
        %v821 = vpop.f32.mrf.mxu0
        %v822 = vadd.f32 %v673, %v821
        %v823 = vpop.f32.mrf.mxu0
        %824 = vmatprep.mubr.f32.mxu0 0.0
        %825 = vmatmul.mubr.f32.gmra.mxu0 %v393
        %v826 = vpop.f32.mrf.mxu0
        %v827 = vadd.f32 %v673, %v826
        %v828 = vpop.f32.mrf.mxu0
        %829 = vmatprep.mubr.f32.mxu0 0.0
        %830 = vmatmul.mubr.f32.gmra.mxu0 %v396
        %v831 = vpop.f32.mrf.mxu0
        %v832 = vadd.f32 %v673, %v831
        %v833 = vpop.f32.mrf.mxu0
        %834 = vmatprep.mubr.f32.mxu0 0.0
        %835 = vmatmul.mubr.f32.gmra.mxu0 %v399
        %v836 = vpop.f32.mrf.mxu0
        %v837 = vadd.f32 %v673, %v836
        %v838 = vpop.f32.mrf.mxu0
        %839 = vmatprep.mubr.f32.mxu0 0.0
        %840 = vmatmul.mubr.f32.gmra.mxu0 %v402
        %v841 = vpop.f32.mrf.mxu0
        %v842 = vadd.f32 %v673, %v841
        %v843 = vpop.f32.mrf.mxu0
        %844 = vmatprep.mubr.f32.mxu0 0.0
        %845 = vmatmul.mubr.f32.gmra.mxu0 %v405
        %v846 = vpop.f32.mrf.mxu0
        %v847 = vadd.f32 %v673, %v846
        %v848 = vpop.f32.mrf.mxu0
        %849 = vmatprep.mubr.f32.mxu0 0.0
        %850 = vmatmul.mubr.f32.gmra.mxu0 %v408
        %v851 = vpop.f32.mrf.mxu0
        %v852 = vadd.f32 %v673, %v851
        %v853 = vpop.f32.mrf.mxu0
        %854 = vmatprep.mubr.f32.mxu0 0.0
        %855 = vmatmul.mubr.f32.gmra.mxu0 %v411
        %v856 = vpop.f32.mrf.mxu0
        %v857 = vadd.f32 %v673, %v856
        %v858 = vpop.f32.mrf.mxu0
        %859 = vmatprep.mubr.f32.mxu0 0.0
        %860 = vmatmul.mubr.f32.gmra.mxu0 %v414
        %v861 = vpop.f32.mrf.mxu0
        %v862 = vadd.f32 %v673, %v861
        %v863 = vpop.f32.mrf.mxu0
        %864 = vmatprep.mubr.f32.mxu0 0.0
        %865 = vmatmul.mubr.f32.gmra.mxu0 %v417
        %v866 = vpop.f32.mrf.mxu0
        %v867 = vadd.f32 %v673, %v866
        %v868 = vpop.f32.mrf.mxu0
        %869 = vmatprep.mubr.f32.mxu0 0.0
        %870 = vmatmul.mubr.f32.gmra.mxu0 %v420
        %v871 = vpop.f32.mrf.mxu0
        %v872 = vadd.f32 %v673, %v871
        %v873 = vpop.f32.mrf.mxu0
        %874 = vmatprep.mubr.f32.mxu0 0.0
        %875 = vmatmul.mubr.f32.gmra.mxu0 %v423
        %v876 = vpop.f32.mrf.mxu0
        %v877 = vadd.f32 %v673, %v876
        %v878 = vpop.f32.mrf.mxu0
        %879 = vmatprep.mubr.f32.mxu0 0.0
        %880 = vmatmul.mubr.f32.gmra.mxu0 %v426
        %v881 = vpop.f32.mrf.mxu0
        %v882 = vadd.f32 %v673, %v881
        %v883 = vpop.f32.mrf.mxu0
        %884 = vmatprep.mubr.f32.mxu0 0.0
        %885 = vmatmul.mubr.f32.gmra.mxu0 %v429
        %v886 = vpop.f32.mrf.mxu0
        %v887 = vadd.f32 %v673, %v886
        %v888 = vpop.f32.mrf.mxu0
        %889 = vmatprep.mubr.f32.mxu0 0.0
        %890 = vmatmul.mubr.f32.gmra.mxu0 %v432
        %v891 = vpop.f32.mrf.mxu0
        %v892 = vadd.f32 %v673, %v891
        %v893 = vpop.f32.mrf.mxu0
        %894 = vmatprep.mubr.f32.mxu0 0.0
        %895 = vmatmul.mubr.f32.gmra.mxu0 %v435
        %v896 = vpop.f32.mrf.mxu0
        %v897 = vadd.f32 %v673, %v896
        %v898 = vpop.f32.mrf.mxu0
        %899 = vdwg.mxu0
        %v900 = vld [vmem:[%s3] sm:$0xff]
        %v901 = vld [vmem:[%s3 + $0x8] sm:$0x1]
        %v902 = vld [vmem:[%s4] sm:$0x1]
        %vm903 = vcmask 523264
        %904 = vst.msk [vmem:[#allocation2] sm:$0xff] %vm903, 0.0
        %905 = vst.msk [vmem:[#allocation2 + $0x8] sm:$0xff] %vm903, 0.0
        %vm906 = vcmask 517120
        %907 = vst.msk [vmem:[#allocation2 + $0x10] sm:$0x3] %vm906, 0.0
        %908 = vst.msk [vmem:[#allocation2 + $0x18] sm:$0xff] %vm903, 0.0
        %909 = vst.msk [vmem:[#allocation2 + $0x20] sm:$0xff] %vm903, 0.0
        %910 = vst.msk [vmem:[#allocation2 + $0x28] sm:$0x3] %vm906, 0.0
        %911 = vst.msk [vmem:[#allocation2 + $0x30] sm:$0xff] %vm903, 0.0
        %912 = vst.msk [vmem:[#allocation2 + $0x38] sm:$0xff] %vm903, 0.0
        %913 = vst.msk [vmem:[#allocation2 + $0x40] sm:$0x3] %vm906, 0.0
        %914 = vst.msk [vmem:[#allocation2 + $0x48] sm:$0xff] %vm903, 0.0
        %915 = vst.msk [vmem:[#allocation2 + $0x50] sm:$0xff] %vm903, 0.0
        %916 = vst.msk [vmem:[#allocation2 + $0x58] sm:$0x3] %vm906, 0.0
        %917 = vst.msk [vmem:[#allocation2 + $0x60] sm:$0xff] %vm903, 0.0
        %918 = vst.msk [vmem:[#allocation2 + $0x68] sm:$0xff] %vm903, 0.0
        %919 = vst.msk [vmem:[#allocation2 + $0x70] sm:$0x3] %vm906, 0.0
        %920 = vst.msk [vmem:[#allocation2 + $0x78] sm:$0xff] %vm903, 0.0
        %921 = vst.msk [vmem:[#allocation2 + $0x80] sm:$0xff] %vm903, 0.0
        %922 = vst.msk [vmem:[#allocation2 + $0x88] sm:$0x3] %vm906, 0.0
        %923 = vst.msk [vmem:[#allocation2 + $0x90] sm:$0xff] %vm903, 0.0
        %924 = vst.msk [vmem:[#allocation2 + $0x98] sm:$0xff] %vm903, 0.0
        %925 = vst.msk [vmem:[#allocation2 + $0xa0] sm:$0x3] %vm906, 0.0
        %926 = vst.msk [vmem:[#allocation2 + $0xa8] sm:$0xff] %vm903, 0.0
        %927 = vst.msk [vmem:[#allocation2 + $0xb0] sm:$0xff] %vm903, 0.0
        %928 = vst.msk [vmem:[#allocation2 + $0xb8] sm:$0x3] %vm906, 0.0
        %929 = vst.msk [vmem:[#allocation2 + $0xc0] sm:$0xff] %vm903, 0.0
        %930 = vst.msk [vmem:[#allocation2 + $0xc8] sm:$0xff] %vm903, 0.0
        %931 = vst.msk [vmem:[#allocation2 + $0xd0] sm:$0x3] %vm906, 0.0
        %932 = vst.msk [vmem:[#allocation2 + $0xd8] sm:$0xff] %vm903, 0.0
        %933 = vst.msk [vmem:[#allocation2 + $0xe0] sm:$0xff] %vm903, 0.0
        %934 = vst.msk [vmem:[#allocation2 + $0xe8] sm:$0x3] %vm906, 0.0
        %935 = vst.msk [vmem:[#allocation2 + $0xf0] sm:$0xff] %vm903, 0.0
        %936 = vst.msk [vmem:[#allocation2 + $0xf8] sm:$0xff] %vm903, 0.0
        %937 = vst.msk [vmem:[#allocation2 + $0x100] sm:$0x3] %vm906, 0.0
        %938 = vst.msk [vmem:[#allocation2 + $0x108] sm:$0xff] %vm903, 0.0
        %939 = vst.msk [vmem:[#allocation2 + $0x110] sm:$0xff] %vm903, 0.0
        %940 = vst.msk [vmem:[#allocation2 + $0x118] sm:$0x3] %vm906, 0.0
        %941 = vst.msk [vmem:[#allocation2 + $0x120] sm:$0xff] %vm903, 0.0
        %942 = vst.msk [vmem:[#allocation2 + $0x128] sm:$0xff] %vm903, 0.0
        %943 = vst.msk [vmem:[#allocation2 + $0x130] sm:$0x3] %vm906, 0.0
        %944 = vst.msk [vmem:[#allocation2 + $0x138] sm:$0xff] %vm903, 0.0
        %945 = vst.msk [vmem:[#allocation2 + $0x140] sm:$0xff] %vm903, 0.0
        %946 = vst.msk [vmem:[#allocation2 + $0x148] sm:$0x3] %vm906, 0.0
        %947 = vst.msk [vmem:[#allocation2 + $0x150] sm:$0xff] %vm903, 0.0
        %948 = vst.msk [vmem:[#allocation2 + $0x158] sm:$0xff] %vm903, 0.0
        %949 = vst.msk [vmem:[#allocation2 + $0x160] sm:$0x3] %vm906, 0.0
        %950 = vst.msk [vmem:[#allocation2 + $0x168] sm:$0xff] %vm903, 0.0
        %951 = vst.msk [vmem:[#allocation2 + $0x170] sm:$0xff] %vm903, 0.0
        %952 = vst.msk [vmem:[#allocation2 + $0x178] sm:$0x3] %vm906, 0.0
        %953 = vst.msk [vmem:[#allocation2 + $0x180] sm:$0xff] %vm903, 0.0
        %954 = vst.msk [vmem:[#allocation2 + $0x188] sm:$0xff] %vm903, 0.0
        %955 = vst.msk [vmem:[#allocation2 + $0x190] sm:$0x3] %vm906, 0.0
        %956 = vst.msk [vmem:[#allocation2 + $0x198] sm:$0xff] %vm903, 0.0
        %957 = vst.msk [vmem:[#allocation2 + $0x1a0] sm:$0xff] %vm903, 0.0
        %958 = vst.msk [vmem:[#allocation2 + $0x1a8] sm:$0x3] %vm906, 0.0
        %s959 = scalar_lea.vmem [#allocation2], 24
        %960 = vst.msk [vmem:[%s959 + $0x1] sm:$0xff] %vm903, %v504
        %961 = vst.msk [vmem:[%s959 + $0x9] sm:$0xff] %vm903, %v509
        %962 = vst.msk [vmem:[%s959 + $0x19] sm:$0xff] %vm903, %v514
        %963 = vst.msk [vmem:[%s959 + $0x21] sm:$0xff] %vm903, %v519
        %964 = vst.msk [vmem:[%s959 + $0x31] sm:$0xff] %vm903, %v524
        %965 = vst.msk [vmem:[%s959 + $0x39] sm:$0xff] %vm903, %v529
        %966 = vst.msk [vmem:[%s959 + $0x49] sm:$0xff] %vm903, %v534
        %967 = vst.msk [vmem:[%s959 + $0x51] sm:$0xff] %vm903, %v539
        %968 = vst.msk [vmem:[%s959 + $0x61] sm:$0xff] %vm903, %v544
        %969 = vst.msk [vmem:[%s959 + $0x69] sm:$0xff] %vm903, %v549
        %970 = vst.msk [vmem:[%s959 + $0x79] sm:$0xff] %vm903, %v554
        %971 = vst.msk [vmem:[%s959 + $0x81] sm:$0xff] %vm903, %v559
        %972 = vst.msk [vmem:[%s959 + $0x91] sm:$0xff] %vm903, %v564
        %973 = vst.msk [vmem:[%s959 + $0x99] sm:$0xff] %vm903, %v569
        %974 = vst.msk [vmem:[%s959 + $0xa9] sm:$0xff] %vm903, %v574
        %975 = vst.msk [vmem:[%s959 + $0xb1] sm:$0xff] %vm903, %v579
        %976 = vst.msk [vmem:[%s959 + $0xc1] sm:$0xff] %vm903, %v584
        %977 = vst.msk [vmem:[%s959 + $0xc9] sm:$0xff] %vm903, %v589
        %978 = vst.msk [vmem:[%s959 + $0xd9] sm:$0xff] %vm903, %v594
        %979 = vst.msk [vmem:[%s959 + $0xe1] sm:$0xff] %vm903, %v599
        %980 = vst.msk [vmem:[%s959 + $0xf1] sm:$0xff] %vm903, %v604
        %981 = vst.msk [vmem:[%s959 + $0xf9] sm:$0xff] %vm903, %v609
        %982 = vst.msk [vmem:[%s959 + $0x109] sm:$0xff] %vm903, %v614
        %983 = vst.msk [vmem:[%s959 + $0x111] sm:$0xff] %vm903, %v619
        %984 = vst.msk [vmem:[%s959 + $0x121] sm:$0xff] %vm903, %v624
        %985 = vst.msk [vmem:[%s959 + $0x129] sm:$0xff] %vm903, %v629
        %986 = vst.msk [vmem:[%s959 + $0x139] sm:$0xff] %vm903, %v634
        %987 = vst.msk [vmem:[%s959 + $0x141] sm:$0xff] %vm903, %v639
        %988 = vst.msk [vmem:[%s959 + $0x151] sm:$0xff] %vm903, %v644
        %989 = vst.msk [vmem:[%s959 + $0x159] sm:$0xff] %vm903, %v649
        %990 = vst.msk [vmem:[%s959 + $0x169] sm:$0xff] %vm903, %v654
        %991 = vst.msk [vmem:[%s959 + $0x171] sm:$0xff] %vm903, %v659
        %v992 = vld [vmem:[#allocation2] sm:$0xff]
        %v993 = vld [vmem:[#allocation2 + $0x8] sm:$0xff]
        %v994 = vld [vmem:[#allocation2 + $0x18] sm:$0xff]
        %v995 = vld [vmem:[#allocation2 + $0x20] sm:$0xff]
        %v996 = vld [vmem:[#allocation2 + $0x30] sm:$0xff]
        %v997 = vld [vmem:[#allocation2 + $0x38] sm:$0xff]
        %v998 = vld [vmem:[#allocation2 + $0x48] sm:$0xff]
        %v999 = vld [vmem:[#allocation2 + $0x50] sm:$0xff]
        %v1000 = vld [vmem:[#allocation2 + $0x60] sm:$0xff]
        %v1001 = vld [vmem:[#allocation2 + $0x68] sm:$0xff]
        %v1002 = vld [vmem:[#allocation2 + $0x78] sm:$0xff]
        %v1003 = vld [vmem:[#allocation2 + $0x80] sm:$0xff]
        %v1004 = vld [vmem:[#allocation2 + $0x90] sm:$0xff]
        %v1005 = vld [vmem:[#allocation2 + $0x98] sm:$0xff]
        %v1006 = vld [vmem:[#allocation2 + $0xa8] sm:$0xff]
        %v1007 = vld [vmem:[#allocation2 + $0xb0] sm:$0xff]
        %v1008 = vld [vmem:[#allocation2 + $0xc0] sm:$0xff]
        %v1009 = vld [vmem:[#allocation2 + $0xc8] sm:$0xff]
        %v1010 = vld [vmem:[#allocation2 + $0xd8] sm:$0xff]
        %v1011 = vld [vmem:[#allocation2 + $0xe0] sm:$0xff]
        %v1012 = vld [vmem:[#allocation2 + $0xf0] sm:$0xff]
        %v1013 = vld [vmem:[#allocation2 + $0xf8] sm:$0xff]
        %v1014 = vld [vmem:[#allocation2 + $0x108] sm:$0xff]
        %v1015 = vld [vmem:[#allocation2 + $0x110] sm:$0xff]
        %v1016 = vld [vmem:[#allocation2 + $0x120] sm:$0xff]
        %v1017 = vld [vmem:[#allocation2 + $0x128] sm:$0xff]
        %v1018 = vld [vmem:[#allocation2 + $0x138] sm:$0xff]
        %v1019 = vld [vmem:[#allocation2 + $0x140] sm:$0xff]
        %v1020 = vld [vmem:[#allocation2 + $0x150] sm:$0xff]
        %v1021 = vld [vmem:[#allocation2 + $0x158] sm:$0xff]
        %v1022 = vld [vmem:[#allocation2 + $0x168] sm:$0xff]
        %v1023 = vld [vmem:[#allocation2 + $0x170] sm:$0xff]
        %v1024 = vlaneseq
        %v1025 = vshrl.u32 %v1024, 7
        %v1026 = vsub.s32 0, %v1025
        %v1027 = vrot.slane %v900, %v1026
        %v1028 = vmul.f32 %v992, %v1027
        %v1029 = vmul.f32 %v993, %v1027
        %v1030 = vmul.f32 %v994, %v1027
        %v1031 = vmul.f32 %v995, %v1027
        %v1032 = vmul.f32 %v996, %v1027
        %v1033 = vmul.f32 %v997, %v1027
        %v1034 = vmul.f32 %v998, %v1027
        %v1035 = vmul.f32 %v999, %v1027
        %v1036 = vmul.f32 %v1000, %v1027
        %v1037 = vmul.f32 %v1001, %v1027
        %v1038 = vmul.f32 %v1002, %v1027
        %v1039 = vmul.f32 %v1003, %v1027
        %v1040 = vmul.f32 %v1004, %v1027
        %v1041 = vmul.f32 %v1005, %v1027
        %v1042 = vmul.f32 %v1006, %v1027
        %v1043 = vmul.f32 %v1007, %v1027
        %v1044 = vmul.f32 %v1008, %v1027
        %v1045 = vmul.f32 %v1009, %v1027
        %v1046 = vmul.f32 %v1010, %v1027
        %v1047 = vmul.f32 %v1011, %v1027
        %v1048 = vmul.f32 %v1012, %v1027
        %v1049 = vmul.f32 %v1013, %v1027
        %v1050 = vmul.f32 %v1014, %v1027
        %v1051 = vmul.f32 %v1015, %v1027
        %v1052 = vmul.f32 %v1016, %v1027
        %v1053 = vmul.f32 %v1017, %v1027
        %v1054 = vmul.f32 %v1018, %v1027
        %v1055 = vmul.f32 %v1019, %v1027
        %v1056 = vmul.f32 %v1020, %v1027
        %v1057 = vmul.f32 %v1021, %v1027
        %v1058 = vmul.f32 %v1022, %v1027
        %v1059 = vmul.f32 %v1023, %v1027
        %v1060 = vadd.f32 %v1028, 0.0
        %v1061 = vadd.f32 %v1029, 0.0
        %v1062 = vadd.f32 %v1030, 0.0
        %v1063 = vadd.f32 %v1031, 0.0
        %v1064 = vadd.f32 %v1032, 0.0
        %v1065 = vadd.f32 %v1033, 0.0
        %v1066 = vadd.f32 %v1034, 0.0
        %v1067 = vadd.f32 %v1035, 0.0
        %v1068 = vadd.f32 %v1036, 0.0
        %v1069 = vadd.f32 %v1037, 0.0
        %v1070 = vadd.f32 %v1038, 0.0
        %v1071 = vadd.f32 %v1039, 0.0
        %v1072 = vadd.f32 %v1040, 0.0
        %v1073 = vadd.f32 %v1041, 0.0
        %v1074 = vadd.f32 %v1042, 0.0
        %v1075 = vadd.f32 %v1043, 0.0
        %v1076 = vadd.f32 %v1044, 0.0
        %v1077 = vadd.f32 %v1045, 0.0
        %v1078 = vadd.f32 %v1046, 0.0
        %v1079 = vadd.f32 %v1047, 0.0
        %v1080 = vadd.f32 %v1048, 0.0
        %v1081 = vadd.f32 %v1049, 0.0
        %v1082 = vadd.f32 %v1050, 0.0
        %v1083 = vadd.f32 %v1051, 0.0
        %v1084 = vadd.f32 %v1052, 0.0
        %v1085 = vadd.f32 %v1053, 0.0
        %v1086 = vadd.f32 %v1054, 0.0
        %v1087 = vadd.f32 %v1055, 0.0
        %v1088 = vadd.f32 %v1056, 0.0
        %v1089 = vadd.f32 %v1057, 0.0
        %v1090 = vadd.f32 %v1058, 0.0
        %v1091 = vadd.f32 %v1059, 0.0
        %v1092 = vld [vmem:[#allocation2 + $0x1] sm:$0xff]
        %v1093 = vld [vmem:[#allocation2 + $0x9] sm:$0xff]
        %v1094 = vld [vmem:[#allocation2 + $0x19] sm:$0xff]
        %v1095 = vld [vmem:[#allocation2 + $0x21] sm:$0xff]
        %v1096 = vld [vmem:[#allocation2 + $0x31] sm:$0xff]
        %v1097 = vld [vmem:[#allocation2 + $0x39] sm:$0xff]
        %v1098 = vld [vmem:[#allocation2 + $0x49] sm:$0xff]
        %v1099 = vld [vmem:[#allocation2 + $0x51] sm:$0xff]
        %v1100 = vld [vmem:[#allocation2 + $0x61] sm:$0xff]
        %v1101 = vld [vmem:[#allocation2 + $0x69] sm:$0xff]
        %v1102 = vld [vmem:[#allocation2 + $0x79] sm:$0xff]
        %v1103 = vld [vmem:[#allocation2 + $0x81] sm:$0xff]
        %v1104 = vld [vmem:[#allocation2 + $0x91] sm:$0xff]
        %v1105 = vld [vmem:[#allocation2 + $0x99] sm:$0xff]
        %v1106 = vld [vmem:[#allocation2 + $0xa9] sm:$0xff]
        %v1107 = vld [vmem:[#allocation2 + $0xb1] sm:$0xff]
        %v1108 = vld [vmem:[#allocation2 + $0xc1] sm:$0xff]
        %v1109 = vld [vmem:[#allocation2 + $0xc9] sm:$0xff]
        %v1110 = vld [vmem:[#allocation2 + $0xd9] sm:$0xff]
        %v1111 = vld [vmem:[#allocation2 + $0xe1] sm:$0xff]
        %v1112 = vld [vmem:[#allocation2 + $0xf1] sm:$0xff]
        %v1113 = vld [vmem:[#allocation2 + $0xf9] sm:$0xff]
        %v1114 = vld [vmem:[#allocation2 + $0x109] sm:$0xff]
        %v1115 = vld [vmem:[#allocation2 + $0x111] sm:$0xff]
        %v1116 = vld [vmem:[#allocation2 + $0x121] sm:$0xff]
        %v1117 = vld [vmem:[#allocation2 + $0x129] sm:$0xff]
        %v1118 = vld [vmem:[#allocation2 + $0x139] sm:$0xff]
        %v1119 = vld [vmem:[#allocation2 + $0x141] sm:$0xff]
        %v1120 = vld [vmem:[#allocation2 + $0x151] sm:$0xff]
        %v1121 = vld [vmem:[#allocation2 + $0x159] sm:$0xff]
        %v1122 = vld [vmem:[#allocation2 + $0x169] sm:$0xff]
        %v1123 = vld [vmem:[#allocation2 + $0x171] sm:$0xff]
        %v1124 = vlaneseq
        %v1125 = vshrl.u32 %v1124, 7
        %v1126 = vsub.s32 1, %v1125
        %v1127 = vrot.slane %v900, %v1126
        %v1128 = vmul.f32 %v1092, %v1127
        %v1129 = vmul.f32 %v1093, %v1127
        %v1130 = vmul.f32 %v1094, %v1127
        %v1131 = vmul.f32 %v1095, %v1127
        %v1132 = vmul.f32 %v1096, %v1127
        %v1133 = vmul.f32 %v1097, %v1127
        %v1134 = vmul.f32 %v1098, %v1127
        %v1135 = vmul.f32 %v1099, %v1127
        %v1136 = vmul.f32 %v1100, %v1127
        %v1137 = vmul.f32 %v1101, %v1127
        %v1138 = vmul.f32 %v1102, %v1127
        %v1139 = vmul.f32 %v1103, %v1127
        %v1140 = vmul.f32 %v1104, %v1127
        %v1141 = vmul.f32 %v1105, %v1127
        %v1142 = vmul.f32 %v1106, %v1127
        %v1143 = vmul.f32 %v1107, %v1127
        %v1144 = vmul.f32 %v1108, %v1127
        %v1145 = vmul.f32 %v1109, %v1127
        %v1146 = vmul.f32 %v1110, %v1127
        %v1147 = vmul.f32 %v1111, %v1127
        %v1148 = vmul.f32 %v1112, %v1127
        %v1149 = vmul.f32 %v1113, %v1127
        %v1150 = vmul.f32 %v1114, %v1127
        %v1151 = vmul.f32 %v1115, %v1127
        %v1152 = vmul.f32 %v1116, %v1127
        %v1153 = vmul.f32 %v1117, %v1127
        %v1154 = vmul.f32 %v1118, %v1127
        %v1155 = vmul.f32 %v1119, %v1127
        %v1156 = vmul.f32 %v1120, %v1127
        %v1157 = vmul.f32 %v1121, %v1127
        %v1158 = vmul.f32 %v1122, %v1127
        %v1159 = vmul.f32 %v1123, %v1127
        %v1160 = vadd.f32 %v1060, %v1128
        %v1161 = vadd.f32 %v1061, %v1129
        %v1162 = vadd.f32 %v1062, %v1130
        %v1163 = vadd.f32 %v1063, %v1131
        %v1164 = vadd.f32 %v1064, %v1132
        %v1165 = vadd.f32 %v1065, %v1133
        %v1166 = vadd.f32 %v1066, %v1134
        %v1167 = vadd.f32 %v1067, %v1135
        %v1168 = vadd.f32 %v1068, %v1136
        %v1169 = vadd.f32 %v1069, %v1137
        %v1170 = vadd.f32 %v1070, %v1138
        %v1171 = vadd.f32 %v1071, %v1139
        %v1172 = vadd.f32 %v1072, %v1140
        %v1173 = vadd.f32 %v1073, %v1141
        %v1174 = vadd.f32 %v1074, %v1142
        %v1175 = vadd.f32 %v1075, %v1143
        %v1176 = vadd.f32 %v1076, %v1144
        %v1177 = vadd.f32 %v1077, %v1145
        %v1178 = vadd.f32 %v1078, %v1146
        %v1179 = vadd.f32 %v1079, %v1147
        %v1180 = vadd.f32 %v1080, %v1148
        %v1181 = vadd.f32 %v1081, %v1149
        %v1182 = vadd.f32 %v1082, %v1150
        %v1183 = vadd.f32 %v1083, %v1151
        %v1184 = vadd.f32 %v1084, %v1152
        %v1185 = vadd.f32 %v1085, %v1153
        %v1186 = vadd.f32 %v1086, %v1154
        %v1187 = vadd.f32 %v1087, %v1155
        %v1188 = vadd.f32 %v1088, %v1156
        %v1189 = vadd.f32 %v1089, %v1157
        %v1190 = vadd.f32 %v1090, %v1158
        %v1191 = vadd.f32 %v1091, %v1159
        %v1192 = vld [vmem:[#allocation2 + $0x2] sm:$0xff]
        %v1193 = vld [vmem:[#allocation2 + $0xa] sm:$0xff]
        %v1194 = vld [vmem:[#allocation2 + $0x1a] sm:$0xff]
        %v1195 = vld [vmem:[#allocation2 + $0x22] sm:$0xff]
        %v1196 = vld [vmem:[#allocation2 + $0x32] sm:$0xff]
        %v1197 = vld [vmem:[#allocation2 + $0x3a] sm:$0xff]
        %v1198 = vld [vmem:[#allocation2 + $0x4a] sm:$0xff]
        %v1199 = vld [vmem:[#allocation2 + $0x52] sm:$0xff]
        %v1200 = vld [vmem:[#allocation2 + $0x62] sm:$0xff]
        %v1201 = vld [vmem:[#allocation2 + $0x6a] sm:$0xff]
        %v1202 = vld [vmem:[#allocation2 + $0x7a] sm:$0xff]
        %v1203 = vld [vmem:[#allocation2 + $0x82] sm:$0xff]
        %v1204 = vld [vmem:[#allocation2 + $0x92] sm:$0xff]
        %v1205 = vld [vmem:[#allocation2 + $0x9a] sm:$0xff]
        %v1206 = vld [vmem:[#allocation2 + $0xaa] sm:$0xff]
        %v1207 = vld [vmem:[#allocation2 + $0xb2] sm:$0xff]
        %v1208 = vld [vmem:[#allocation2 + $0xc2] sm:$0xff]
        %v1209 = vld [vmem:[#allocation2 + $0xca] sm:$0xff]
        %v1210 = vld [vmem:[#allocation2 + $0xda] sm:$0xff]
        %v1211 = vld [vmem:[#allocation2 + $0xe2] sm:$0xff]
        %v1212 = vld [vmem:[#allocation2 + $0xf2] sm:$0xff]
        %v1213 = vld [vmem:[#allocation2 + $0xfa] sm:$0xff]
        %v1214 = vld [vmem:[#allocation2 + $0x10a] sm:$0xff]
        %v1215 = vld [vmem:[#allocation2 + $0x112] sm:$0xff]
        %v1216 = vld [vmem:[#allocation2 + $0x122] sm:$0xff]
        %v1217 = vld [vmem:[#allocation2 + $0x12a] sm:$0xff]
        %v1218 = vld [vmem:[#allocation2 + $0x13a] sm:$0xff]
        %v1219 = vld [vmem:[#allocation2 + $0x142] sm:$0xff]
        %v1220 = vld [vmem:[#allocation2 + $0x152] sm:$0xff]
        %v1221 = vld [vmem:[#allocation2 + $0x15a] sm:$0xff]
        %v1222 = vld [vmem:[#allocation2 + $0x16a] sm:$0xff]
        %v1223 = vld [vmem:[#allocation2 + $0x172] sm:$0xff]
        %v1224 = vlaneseq
        %v1225 = vshrl.u32 %v1224, 7
        %v1226 = vsub.s32 2, %v1225
        %v1227 = vrot.slane %v900, %v1226
        %v1228 = vmul.f32 %v1192, %v1227
        %v1229 = vmul.f32 %v1193, %v1227
        %v1230 = vmul.f32 %v1194, %v1227
        %v1231 = vmul.f32 %v1195, %v1227
        %v1232 = vmul.f32 %v1196, %v1227
        %v1233 = vmul.f32 %v1197, %v1227
        %v1234 = vmul.f32 %v1198, %v1227
        %v1235 = vmul.f32 %v1199, %v1227
        %v1236 = vmul.f32 %v1200, %v1227
        %v1237 = vmul.f32 %v1201, %v1227
        %v1238 = vmul.f32 %v1202, %v1227
        %v1239 = vmul.f32 %v1203, %v1227
        %v1240 = vmul.f32 %v1204, %v1227
        %v1241 = vmul.f32 %v1205, %v1227
        %v1242 = vmul.f32 %v1206, %v1227
        %v1243 = vmul.f32 %v1207, %v1227
        %v1244 = vmul.f32 %v1208, %v1227
        %v1245 = vmul.f32 %v1209, %v1227
        %v1246 = vmul.f32 %v1210, %v1227
        %v1247 = vmul.f32 %v1211, %v1227
        %v1248 = vmul.f32 %v1212, %v1227
        %v1249 = vmul.f32 %v1213, %v1227
        %v1250 = vmul.f32 %v1214, %v1227
        %v1251 = vmul.f32 %v1215, %v1227
        %v1252 = vmul.f32 %v1216, %v1227
        %v1253 = vmul.f32 %v1217, %v1227
        %v1254 = vmul.f32 %v1218, %v1227
        %v1255 = vmul.f32 %v1219, %v1227
        %v1256 = vmul.f32 %v1220, %v1227
        %v1257 = vmul.f32 %v1221, %v1227
        %v1258 = vmul.f32 %v1222, %v1227
        %v1259 = vmul.f32 %v1223, %v1227
        %v1260 = vadd.f32 %v1160, %v1228
        %v1261 = vadd.f32 %v1161, %v1229
        %v1262 = vadd.f32 %v1162, %v1230
        %v1263 = vadd.f32 %v1163, %v1231
        %v1264 = vadd.f32 %v1164, %v1232
        %v1265 = vadd.f32 %v1165, %v1233
        %v1266 = vadd.f32 %v1166, %v1234
        %v1267 = vadd.f32 %v1167, %v1235
        %v1268 = vadd.f32 %v1168, %v1236
        %v1269 = vadd.f32 %v1169, %v1237
        %v1270 = vadd.f32 %v1170, %v1238
        %v1271 = vadd.f32 %v1171, %v1239
        %v1272 = vadd.f32 %v1172, %v1240
        %v1273 = vadd.f32 %v1173, %v1241
        %v1274 = vadd.f32 %v1174, %v1242
        %v1275 = vadd.f32 %v1175, %v1243
        %v1276 = vadd.f32 %v1176, %v1244
        %v1277 = vadd.f32 %v1177, %v1245
        %v1278 = vadd.f32 %v1178, %v1246
        %v1279 = vadd.f32 %v1179, %v1247
        %v1280 = vadd.f32 %v1180, %v1248
        %v1281 = vadd.f32 %v1181, %v1249
        %v1282 = vadd.f32 %v1182, %v1250
        %v1283 = vadd.f32 %v1183, %v1251
        %v1284 = vadd.f32 %v1184, %v1252
        %v1285 = vadd.f32 %v1185, %v1253
        %v1286 = vadd.f32 %v1186, %v1254
        %v1287 = vadd.f32 %v1187, %v1255
        %v1288 = vadd.f32 %v1188, %v1256
        %v1289 = vadd.f32 %v1189, %v1257
        %v1290 = vadd.f32 %v1190, %v1258
        %v1291 = vadd.f32 %v1191, %v1259
        %v1292 = vld [vmem:[%s959] sm:$0xff]
        %v1293 = vld [vmem:[%s959 + $0x8] sm:$0xff]
        %v1294 = vld [vmem:[%s959 + $0x18] sm:$0xff]
        %v1295 = vld [vmem:[%s959 + $0x20] sm:$0xff]
        %v1296 = vld [vmem:[%s959 + $0x30] sm:$0xff]
        %v1297 = vld [vmem:[%s959 + $0x38] sm:$0xff]
        %v1298 = vld [vmem:[%s959 + $0x48] sm:$0xff]
        %v1299 = vld [vmem:[%s959 + $0x50] sm:$0xff]
        %v1300 = vld [vmem:[%s959 + $0x60] sm:$0xff]
        %v1301 = vld [vmem:[%s959 + $0x68] sm:$0xff]
        %v1302 = vld [vmem:[%s959 + $0x78] sm:$0xff]
        %v1303 = vld [vmem:[%s959 + $0x80] sm:$0xff]
        %v1304 = vld [vmem:[%s959 + $0x90] sm:$0xff]
        %v1305 = vld [vmem:[%s959 + $0x98] sm:$0xff]
        %v1306 = vld [vmem:[%s959 + $0xa8] sm:$0xff]
        %v1307 = vld [vmem:[%s959 + $0xb0] sm:$0xff]
        %v1308 = vld [vmem:[%s959 + $0xc0] sm:$0xff]
        %v1309 = vld [vmem:[%s959 + $0xc8] sm:$0xff]
        %v1310 = vld [vmem:[%s959 + $0xd8] sm:$0xff]
        %v1311 = vld [vmem:[%s959 + $0xe0] sm:$0xff]
        %v1312 = vld [vmem:[%s959 + $0xf0] sm:$0xff]
        %v1313 = vld [vmem:[%s959 + $0xf8] sm:$0xff]
        %v1314 = vld [vmem:[%s959 + $0x108] sm:$0xff]
        %v1315 = vld [vmem:[%s959 + $0x110] sm:$0xff]
        %v1316 = vld [vmem:[%s959 + $0x120] sm:$0xff]
        %v1317 = vld [vmem:[%s959 + $0x128] sm:$0xff]
        %v1318 = vld [vmem:[%s959 + $0x138] sm:$0xff]
        %v1319 = vld [vmem:[%s959 + $0x140] sm:$0xff]
        %v1320 = vld [vmem:[%s959 + $0x150] sm:$0xff]
        %v1321 = vld [vmem:[%s959 + $0x158] sm:$0xff]
        %v1322 = vld [vmem:[%s959 + $0x168] sm:$0xff]
        %v1323 = vld [vmem:[%s959 + $0x170] sm:$0xff]
        %v1324 = vlaneseq
        %v1325 = vshrl.u32 %v1324, 7
        %v1326 = vsub.s32 3, %v1325
        %v1327 = vrot.slane %v900, %v1326
        %v1328 = vmul.f32 %v1292, %v1327
        %v1329 = vmul.f32 %v1293, %v1327
        %v1330 = vmul.f32 %v1294, %v1327
        %v1331 = vmul.f32 %v1295, %v1327
        %v1332 = vmul.f32 %v1296, %v1327
        %v1333 = vmul.f32 %v1297, %v1327
        %v1334 = vmul.f32 %v1298, %v1327
        %v1335 = vmul.f32 %v1299, %v1327
        %v1336 = vmul.f32 %v1300, %v1327
        %v1337 = vmul.f32 %v1301, %v1327
        %v1338 = vmul.f32 %v1302, %v1327
        %v1339 = vmul.f32 %v1303, %v1327
        %v1340 = vmul.f32 %v1304, %v1327
        %v1341 = vmul.f32 %v1305, %v1327
        %v1342 = vmul.f32 %v1306, %v1327
        %v1343 = vmul.f32 %v1307, %v1327
        %v1344 = vmul.f32 %v1308, %v1327
        %v1345 = vmul.f32 %v1309, %v1327
        %v1346 = vmul.f32 %v1310, %v1327
        %v1347 = vmul.f32 %v1311, %v1327
        %v1348 = vmul.f32 %v1312, %v1327
        %v1349 = vmul.f32 %v1313, %v1327
        %v1350 = vmul.f32 %v1314, %v1327
        %v1351 = vmul.f32 %v1315, %v1327
        %v1352 = vmul.f32 %v1316, %v1327
        %v1353 = vmul.f32 %v1317, %v1327
        %v1354 = vmul.f32 %v1318, %v1327
        %v1355 = vmul.f32 %v1319, %v1327
        %v1356 = vmul.f32 %v1320, %v1327
        %v1357 = vmul.f32 %v1321, %v1327
        %v1358 = vmul.f32 %v1322, %v1327
        %v1359 = vmul.f32 %v1323, %v1327
        %v1360 = vadd.f32 %v1260, %v1328
        %v1361 = vadd.f32 %v1261, %v1329
        %v1362 = vadd.f32 %v1262, %v1330
        %v1363 = vadd.f32 %v1263, %v1331
        %v1364 = vadd.f32 %v1264, %v1332
        %v1365 = vadd.f32 %v1265, %v1333
        %v1366 = vadd.f32 %v1266, %v1334
        %v1367 = vadd.f32 %v1267, %v1335
        %v1368 = vadd.f32 %v1268, %v1336
        %v1369 = vadd.f32 %v1269, %v1337
        %v1370 = vadd.f32 %v1270, %v1338
        %v1371 = vadd.f32 %v1271, %v1339
        %v1372 = vadd.f32 %v1272, %v1340
        %v1373 = vadd.f32 %v1273, %v1341
        %v1374 = vadd.f32 %v1274, %v1342
        %v1375 = vadd.f32 %v1275, %v1343
        %v1376 = vadd.f32 %v1276, %v1344
        %v1377 = vadd.f32 %v1277, %v1345
        %v1378 = vadd.f32 %v1278, %v1346
        %v1379 = vadd.f32 %v1279, %v1347
        %v1380 = vadd.f32 %v1280, %v1348
        %v1381 = vadd.f32 %v1281, %v1349
        %v1382 = vadd.f32 %v1282, %v1350
        %v1383 = vadd.f32 %v1283, %v1351
        %v1384 = vadd.f32 %v1284, %v1352
        %v1385 = vadd.f32 %v1285, %v1353
        %v1386 = vadd.f32 %v1286, %v1354
        %v1387 = vadd.f32 %v1287, %v1355
        %v1388 = vadd.f32 %v1288, %v1356
        %v1389 = vadd.f32 %v1289, %v1357
        %v1390 = vadd.f32 %v1290, %v1358
        %v1391 = vadd.f32 %v1291, %v1359
        %v1392 = vld [vmem:[%s959 + $0x1] sm:$0xff]
        %v1393 = vld [vmem:[%s959 + $0x9] sm:$0xff]
        %v1394 = vld [vmem:[%s959 + $0x19] sm:$0xff]
        %v1395 = vld [vmem:[%s959 + $0x21] sm:$0xff]
        %v1396 = vld [vmem:[%s959 + $0x31] sm:$0xff]
        %v1397 = vld [vmem:[%s959 + $0x39] sm:$0xff]
        %v1398 = vld [vmem:[%s959 + $0x49] sm:$0xff]
        %v1399 = vld [vmem:[%s959 + $0x51] sm:$0xff]
        %v1400 = vld [vmem:[%s959 + $0x61] sm:$0xff]
        %v1401 = vld [vmem:[%s959 + $0x69] sm:$0xff]
        %v1402 = vld [vmem:[%s959 + $0x79] sm:$0xff]
        %v1403 = vld [vmem:[%s959 + $0x81] sm:$0xff]
        %v1404 = vld [vmem:[%s959 + $0x91] sm:$0xff]
        %v1405 = vld [vmem:[%s959 + $0x99] sm:$0xff]
        %v1406 = vld [vmem:[%s959 + $0xa9] sm:$0xff]
        %v1407 = vld [vmem:[%s959 + $0xb1] sm:$0xff]
        %v1408 = vld [vmem:[%s959 + $0xc1] sm:$0xff]
        %v1409 = vld [vmem:[%s959 + $0xc9] sm:$0xff]
        %v1410 = vld [vmem:[%s959 + $0xd9] sm:$0xff]
        %v1411 = vld [vmem:[%s959 + $0xe1] sm:$0xff]
        %v1412 = vld [vmem:[%s959 + $0xf1] sm:$0xff]
        %v1413 = vld [vmem:[%s959 + $0xf9] sm:$0xff]
        %v1414 = vld [vmem:[%s959 + $0x109] sm:$0xff]
        %v1415 = vld [vmem:[%s959 + $0x111] sm:$0xff]
        %v1416 = vld [vmem:[%s959 + $0x121] sm:$0xff]
        %v1417 = vld [vmem:[%s959 + $0x129] sm:$0xff]
        %v1418 = vld [vmem:[%s959 + $0x139] sm:$0xff]
        %v1419 = vld [vmem:[%s959 + $0x141] sm:$0xff]
        %v1420 = vld [vmem:[%s959 + $0x151] sm:$0xff]
        %v1421 = vld [vmem:[%s959 + $0x159] sm:$0xff]
        %v1422 = vld [vmem:[%s959 + $0x169] sm:$0xff]
        %v1423 = vld [vmem:[%s959 + $0x171] sm:$0xff]
        %v1424 = vlaneseq
        %v1425 = vshrl.u32 %v1424, 7
        %v1426 = vsub.s32 4, %v1425
        %v1427 = vrot.slane %v900, %v1426
        %v1428 = vmul.f32 %v1392, %v1427
        %v1429 = vmul.f32 %v1393, %v1427
        %v1430 = vmul.f32 %v1394, %v1427
        %v1431 = vmul.f32 %v1395, %v1427
        %v1432 = vmul.f32 %v1396, %v1427
        %v1433 = vmul.f32 %v1397, %v1427
        %v1434 = vmul.f32 %v1398, %v1427
        %v1435 = vmul.f32 %v1399, %v1427
        %v1436 = vmul.f32 %v1400, %v1427
        %v1437 = vmul.f32 %v1401, %v1427
        %v1438 = vmul.f32 %v1402, %v1427
        %v1439 = vmul.f32 %v1403, %v1427
        %v1440 = vmul.f32 %v1404, %v1427
        %v1441 = vmul.f32 %v1405, %v1427
        %v1442 = vmul.f32 %v1406, %v1427
        %v1443 = vmul.f32 %v1407, %v1427
        %v1444 = vmul.f32 %v1408, %v1427
        %v1445 = vmul.f32 %v1409, %v1427
        %v1446 = vmul.f32 %v1410, %v1427
        %v1447 = vmul.f32 %v1411, %v1427
        %v1448 = vmul.f32 %v1412, %v1427
        %v1449 = vmul.f32 %v1413, %v1427
        %v1450 = vmul.f32 %v1414, %v1427
        %v1451 = vmul.f32 %v1415, %v1427
        %v1452 = vmul.f32 %v1416, %v1427
        %v1453 = vmul.f32 %v1417, %v1427
        %v1454 = vmul.f32 %v1418, %v1427
        %v1455 = vmul.f32 %v1419, %v1427
        %v1456 = vmul.f32 %v1420, %v1427
        %v1457 = vmul.f32 %v1421, %v1427
        %v1458 = vmul.f32 %v1422, %v1427
        %v1459 = vmul.f32 %v1423, %v1427
        %v1460 = vadd.f32 %v1360, %v1428
        %v1461 = vadd.f32 %v1361, %v1429
        %v1462 = vadd.f32 %v1362, %v1430
        %v1463 = vadd.f32 %v1363, %v1431
        %v1464 = vadd.f32 %v1364, %v1432
        %v1465 = vadd.f32 %v1365, %v1433
        %v1466 = vadd.f32 %v1366, %v1434
        %v1467 = vadd.f32 %v1367, %v1435
        %v1468 = vadd.f32 %v1368, %v1436
        %v1469 = vadd.f32 %v1369, %v1437
        %v1470 = vadd.f32 %v1370, %v1438
        %v1471 = vadd.f32 %v1371, %v1439
        %v1472 = vadd.f32 %v1372, %v1440
        %v1473 = vadd.f32 %v1373, %v1441
        %v1474 = vadd.f32 %v1374, %v1442
        %v1475 = vadd.f32 %v1375, %v1443
        %v1476 = vadd.f32 %v1376, %v1444
        %v1477 = vadd.f32 %v1377, %v1445
        %v1478 = vadd.f32 %v1378, %v1446
        %v1479 = vadd.f32 %v1379, %v1447
        %v1480 = vadd.f32 %v1380, %v1448
        %v1481 = vadd.f32 %v1381, %v1449
        %v1482 = vadd.f32 %v1382, %v1450
        %v1483 = vadd.f32 %v1383, %v1451
        %v1484 = vadd.f32 %v1384, %v1452
        %v1485 = vadd.f32 %v1385, %v1453
        %v1486 = vadd.f32 %v1386, %v1454
        %v1487 = vadd.f32 %v1387, %v1455
        %v1488 = vadd.f32 %v1388, %v1456
        %v1489 = vadd.f32 %v1389, %v1457
        %v1490 = vadd.f32 %v1390, %v1458
        %v1491 = vadd.f32 %v1391, %v1459
        %v1492 = vld [vmem:[%s959 + $0x2] sm:$0xff]
        %v1493 = vld [vmem:[%s959 + $0xa] sm:$0xff]
        %v1494 = vld [vmem:[%s959 + $0x1a] sm:$0xff]
        %v1495 = vld [vmem:[%s959 + $0x22] sm:$0xff]
        %v1496 = vld [vmem:[%s959 + $0x32] sm:$0xff]
        %v1497 = vld [vmem:[%s959 + $0x3a] sm:$0xff]
        %v1498 = vld [vmem:[%s959 + $0x4a] sm:$0xff]
        %v1499 = vld [vmem:[%s959 + $0x52] sm:$0xff]
        %v1500 = vld [vmem:[%s959 + $0x62] sm:$0xff]
        %v1501 = vld [vmem:[%s959 + $0x6a] sm:$0xff]
        %v1502 = vld [vmem:[%s959 + $0x7a] sm:$0xff]
        %v1503 = vld [vmem:[%s959 + $0x82] sm:$0xff]
        %v1504 = vld [vmem:[%s959 + $0x92] sm:$0xff]
        %v1505 = vld [vmem:[%s959 + $0x9a] sm:$0xff]
        %v1506 = vld [vmem:[%s959 + $0xaa] sm:$0xff]
        %v1507 = vld [vmem:[%s959 + $0xb2] sm:$0xff]
        %v1508 = vld [vmem:[%s959 + $0xc2] sm:$0xff]
        %v1509 = vld [vmem:[%s959 + $0xca] sm:$0xff]
        %v1510 = vld [vmem:[%s959 + $0xda] sm:$0xff]
        %v1511 = vld [vmem:[%s959 + $0xe2] sm:$0xff]
        %v1512 = vld [vmem:[%s959 + $0xf2] sm:$0xff]
        %v1513 = vld [vmem:[%s959 + $0xfa] sm:$0xff]
        %v1514 = vld [vmem:[%s959 + $0x10a] sm:$0xff]
        %v1515 = vld [vmem:[%s959 + $0x112] sm:$0xff]
        %v1516 = vld [vmem:[%s959 + $0x122] sm:$0xff]
        %v1517 = vld [vmem:[%s959 + $0x12a] sm:$0xff]
        %v1518 = vld [vmem:[%s959 + $0x13a] sm:$0xff]
        %v1519 = vld [vmem:[%s959 + $0x142] sm:$0xff]
        %v1520 = vld [vmem:[%s959 + $0x152] sm:$0xff]
        %v1521 = vld [vmem:[%s959 + $0x15a] sm:$0xff]
        %v1522 = vld [vmem:[%s959 + $0x16a] sm:$0xff]
        %v1523 = vld [vmem:[%s959 + $0x172] sm:$0xff]
        %v1524 = vlaneseq
        %v1525 = vshrl.u32 %v1524, 7
        %v1526 = vsub.s32 5, %v1525
        %v1527 = vrot.slane %v900, %v1526
        %v1528 = vmul.f32 %v1492, %v1527
        %v1529 = vmul.f32 %v1493, %v1527
        %v1530 = vmul.f32 %v1494, %v1527
        %v1531 = vmul.f32 %v1495, %v1527
        %v1532 = vmul.f32 %v1496, %v1527
        %v1533 = vmul.f32 %v1497, %v1527
        %v1534 = vmul.f32 %v1498, %v1527
        %v1535 = vmul.f32 %v1499, %v1527
        %v1536 = vmul.f32 %v1500, %v1527
        %v1537 = vmul.f32 %v1501, %v1527
        %v1538 = vmul.f32 %v1502, %v1527
        %v1539 = vmul.f32 %v1503, %v1527
        %v1540 = vmul.f32 %v1504, %v1527
        %v1541 = vmul.f32 %v1505, %v1527
        %v1542 = vmul.f32 %v1506, %v1527
        %v1543 = vmul.f32 %v1507, %v1527
        %v1544 = vmul.f32 %v1508, %v1527
        %v1545 = vmul.f32 %v1509, %v1527
        %v1546 = vmul.f32 %v1510, %v1527
        %v1547 = vmul.f32 %v1511, %v1527
        %v1548 = vmul.f32 %v1512, %v1527
        %v1549 = vmul.f32 %v1513, %v1527
        %v1550 = vmul.f32 %v1514, %v1527
        %v1551 = vmul.f32 %v1515, %v1527
        %v1552 = vmul.f32 %v1516, %v1527
        %v1553 = vmul.f32 %v1517, %v1527
        %v1554 = vmul.f32 %v1518, %v1527
        %v1555 = vmul.f32 %v1519, %v1527
        %v1556 = vmul.f32 %v1520, %v1527
        %v1557 = vmul.f32 %v1521, %v1527
        %v1558 = vmul.f32 %v1522, %v1527
        %v1559 = vmul.f32 %v1523, %v1527
        %v1560 = vadd.f32 %v1460, %v1528
        %v1561 = vadd.f32 %v1461, %v1529
        %v1562 = vadd.f32 %v1462, %v1530
        %v1563 = vadd.f32 %v1463, %v1531
        %v1564 = vadd.f32 %v1464, %v1532
        %v1565 = vadd.f32 %v1465, %v1533
        %v1566 = vadd.f32 %v1466, %v1534
        %v1567 = vadd.f32 %v1467, %v1535
        %v1568 = vadd.f32 %v1468, %v1536
        %v1569 = vadd.f32 %v1469, %v1537
        %v1570 = vadd.f32 %v1470, %v1538
        %v1571 = vadd.f32 %v1471, %v1539
        %v1572 = vadd.f32 %v1472, %v1540
        %v1573 = vadd.f32 %v1473, %v1541
        %v1574 = vadd.f32 %v1474, %v1542
        %v1575 = vadd.f32 %v1475, %v1543
        %v1576 = vadd.f32 %v1476, %v1544
        %v1577 = vadd.f32 %v1477, %v1545
        %v1578 = vadd.f32 %v1478, %v1546
        %v1579 = vadd.f32 %v1479, %v1547
        %v1580 = vadd.f32 %v1480, %v1548
        %v1581 = vadd.f32 %v1481, %v1549
        %v1582 = vadd.f32 %v1482, %v1550
        %v1583 = vadd.f32 %v1483, %v1551
        %v1584 = vadd.f32 %v1484, %v1552
        %v1585 = vadd.f32 %v1485, %v1553
        %v1586 = vadd.f32 %v1486, %v1554
        %v1587 = vadd.f32 %v1487, %v1555
        %v1588 = vadd.f32 %v1488, %v1556
        %v1589 = vadd.f32 %v1489, %v1557
        %v1590 = vadd.f32 %v1490, %v1558
        %v1591 = vadd.f32 %v1491, %v1559
        %s1592 = scalar_lea.vmem [#allocation2], 48
        %v1593 = vld [vmem:[%s1592] sm:$0xff]
        %v1594 = vld [vmem:[%s1592 + $0x8] sm:$0xff]
        %v1595 = vld [vmem:[%s1592 + $0x18] sm:$0xff]
        %v1596 = vld [vmem:[%s1592 + $0x20] sm:$0xff]
        %v1597 = vld [vmem:[%s1592 + $0x30] sm:$0xff]
        %v1598 = vld [vmem:[%s1592 + $0x38] sm:$0xff]
        %v1599 = vld [vmem:[%s1592 + $0x48] sm:$0xff]
        %v1600 = vld [vmem:[%s1592 + $0x50] sm:$0xff]
        %v1601 = vld [vmem:[%s1592 + $0x60] sm:$0xff]
        %v1602 = vld [vmem:[%s1592 + $0x68] sm:$0xff]
        %v1603 = vld [vmem:[%s1592 + $0x78] sm:$0xff]
        %v1604 = vld [vmem:[%s1592 + $0x80] sm:$0xff]
        %v1605 = vld [vmem:[%s1592 + $0x90] sm:$0xff]
        %v1606 = vld [vmem:[%s1592 + $0x98] sm:$0xff]
        %v1607 = vld [vmem:[%s1592 + $0xa8] sm:$0xff]
        %v1608 = vld [vmem:[%s1592 + $0xb0] sm:$0xff]
        %v1609 = vld [vmem:[%s1592 + $0xc0] sm:$0xff]
        %v1610 = vld [vmem:[%s1592 + $0xc8] sm:$0xff]
        %v1611 = vld [vmem:[%s1592 + $0xd8] sm:$0xff]
        %v1612 = vld [vmem:[%s1592 + $0xe0] sm:$0xff]
        %v1613 = vld [vmem:[%s1592 + $0xf0] sm:$0xff]
        %v1614 = vld [vmem:[%s1592 + $0xf8] sm:$0xff]
        %v1615 = vld [vmem:[%s1592 + $0x108] sm:$0xff]
        %v1616 = vld [vmem:[%s1592 + $0x110] sm:$0xff]
        %v1617 = vld [vmem:[%s1592 + $0x120] sm:$0xff]
        %v1618 = vld [vmem:[%s1592 + $0x128] sm:$0xff]
        %v1619 = vld [vmem:[%s1592 + $0x138] sm:$0xff]
        %v1620 = vld [vmem:[%s1592 + $0x140] sm:$0xff]
        %v1621 = vld [vmem:[%s1592 + $0x150] sm:$0xff]
        %v1622 = vld [vmem:[%s1592 + $0x158] sm:$0xff]
        %v1623 = vld [vmem:[%s1592 + $0x168] sm:$0xff]
        %v1624 = vld [vmem:[%s1592 + $0x170] sm:$0xff]
        %v1625 = vlaneseq
        %v1626 = vshrl.u32 %v1625, 7
        %v1627 = vsub.s32 6, %v1626
        %v1628 = vrot.slane %v900, %v1627
        %v1629 = vmul.f32 %v1593, %v1628
        %v1630 = vmul.f32 %v1594, %v1628
        %v1631 = vmul.f32 %v1595, %v1628
        %v1632 = vmul.f32 %v1596, %v1628
        %v1633 = vmul.f32 %v1597, %v1628
        %v1634 = vmul.f32 %v1598, %v1628
        %v1635 = vmul.f32 %v1599, %v1628
        %v1636 = vmul.f32 %v1600, %v1628
        %v1637 = vmul.f32 %v1601, %v1628
        %v1638 = vmul.f32 %v1602, %v1628
        %v1639 = vmul.f32 %v1603, %v1628
        %v1640 = vmul.f32 %v1604, %v1628
        %v1641 = vmul.f32 %v1605, %v1628
        %v1642 = vmul.f32 %v1606, %v1628
        %v1643 = vmul.f32 %v1607, %v1628
        %v1644 = vmul.f32 %v1608, %v1628
        %v1645 = vmul.f32 %v1609, %v1628
        %v1646 = vmul.f32 %v1610, %v1628
        %v1647 = vmul.f32 %v1611, %v1628
        %v1648 = vmul.f32 %v1612, %v1628
        %v1649 = vmul.f32 %v1613, %v1628
        %v1650 = vmul.f32 %v1614, %v1628
        %v1651 = vmul.f32 %v1615, %v1628
        %v1652 = vmul.f32 %v1616, %v1628
        %v1653 = vmul.f32 %v1617, %v1628
        %v1654 = vmul.f32 %v1618, %v1628
        %v1655 = vmul.f32 %v1619, %v1628
        %v1656 = vmul.f32 %v1620, %v1628
        %v1657 = vmul.f32 %v1621, %v1628
        %v1658 = vmul.f32 %v1622, %v1628
        %v1659 = vmul.f32 %v1623, %v1628
        %v1660 = vmul.f32 %v1624, %v1628
        %v1661 = vadd.f32 %v1560, %v1629
        %v1662 = vadd.f32 %v1561, %v1630
        %v1663 = vadd.f32 %v1562, %v1631
        %v1664 = vadd.f32 %v1563, %v1632
        %v1665 = vadd.f32 %v1564, %v1633
        %v1666 = vadd.f32 %v1565, %v1634
        %v1667 = vadd.f32 %v1566, %v1635
        %v1668 = vadd.f32 %v1567, %v1636
        %v1669 = vadd.f32 %v1568, %v1637
        %v1670 = vadd.f32 %v1569, %v1638
        %v1671 = vadd.f32 %v1570, %v1639
        %v1672 = vadd.f32 %v1571, %v1640
        %v1673 = vadd.f32 %v1572, %v1641
        %v1674 = vadd.f32 %v1573, %v1642
        %v1675 = vadd.f32 %v1574, %v1643
        %v1676 = vadd.f32 %v1575, %v1644
        %v1677 = vadd.f32 %v1576, %v1645
        %v1678 = vadd.f32 %v1577, %v1646
        %v1679 = vadd.f32 %v1578, %v1647
        %v1680 = vadd.f32 %v1579, %v1648
        %v1681 = vadd.f32 %v1580, %v1649
        %v1682 = vadd.f32 %v1581, %v1650
        %v1683 = vadd.f32 %v1582, %v1651
        %v1684 = vadd.f32 %v1583, %v1652
        %v1685 = vadd.f32 %v1584, %v1653
        %v1686 = vadd.f32 %v1585, %v1654
        %v1687 = vadd.f32 %v1586, %v1655
        %v1688 = vadd.f32 %v1587, %v1656
        %v1689 = vadd.f32 %v1588, %v1657
        %v1690 = vadd.f32 %v1589, %v1658
        %v1691 = vadd.f32 %v1590, %v1659
        %v1692 = vadd.f32 %v1591, %v1660
        %v1693 = vld [vmem:[%s1592 + $0x1] sm:$0xff]
        %v1694 = vld [vmem:[%s1592 + $0x9] sm:$0xff]
        %v1695 = vld [vmem:[%s1592 + $0x19] sm:$0xff]
        %v1696 = vld [vmem:[%s1592 + $0x21] sm:$0xff]
        %v1697 = vld [vmem:[%s1592 + $0x31] sm:$0xff]
        %v1698 = vld [vmem:[%s1592 + $0x39] sm:$0xff]
        %v1699 = vld [vmem:[%s1592 + $0x49] sm:$0xff]
        %v1700 = vld [vmem:[%s1592 + $0x51] sm:$0xff]
        %v1701 = vld [vmem:[%s1592 + $0x61] sm:$0xff]
        %v1702 = vld [vmem:[%s1592 + $0x69] sm:$0xff]
        %v1703 = vld [vmem:[%s1592 + $0x79] sm:$0xff]
        %v1704 = vld [vmem:[%s1592 + $0x81] sm:$0xff]
        %v1705 = vld [vmem:[%s1592 + $0x91] sm:$0xff]
        %v1706 = vld [vmem:[%s1592 + $0x99] sm:$0xff]
        %v1707 = vld [vmem:[%s1592 + $0xa9] sm:$0xff]
        %v1708 = vld [vmem:[%s1592 + $0xb1] sm:$0xff]
        %v1709 = vld [vmem:[%s1592 + $0xc1] sm:$0xff]
        %v1710 = vld [vmem:[%s1592 + $0xc9] sm:$0xff]
        %v1711 = vld [vmem:[%s1592 + $0xd9] sm:$0xff]
        %v1712 = vld [vmem:[%s1592 + $0xe1] sm:$0xff]
        %v1713 = vld [vmem:[%s1592 + $0xf1] sm:$0xff]
        %v1714 = vld [vmem:[%s1592 + $0xf9] sm:$0xff]
        %v1715 = vld [vmem:[%s1592 + $0x109] sm:$0xff]
        %v1716 = vld [vmem:[%s1592 + $0x111] sm:$0xff]
        %v1717 = vld [vmem:[%s1592 + $0x121] sm:$0xff]
        %v1718 = vld [vmem:[%s1592 + $0x129] sm:$0xff]
        %v1719 = vld [vmem:[%s1592 + $0x139] sm:$0xff]
        %v1720 = vld [vmem:[%s1592 + $0x141] sm:$0xff]
        %v1721 = vld [vmem:[%s1592 + $0x151] sm:$0xff]
        %v1722 = vld [vmem:[%s1592 + $0x159] sm:$0xff]
        %v1723 = vld [vmem:[%s1592 + $0x169] sm:$0xff]
        %v1724 = vld [vmem:[%s1592 + $0x171] sm:$0xff]
        %v1725 = vlaneseq
        %v1726 = vshrl.u32 %v1725, 7
        %v1727 = vsub.s32 7, %v1726
        %v1728 = vrot.slane %v900, %v1727
        %v1729 = vmul.f32 %v1693, %v1728
        %v1730 = vmul.f32 %v1694, %v1728
        %v1731 = vmul.f32 %v1695, %v1728
        %v1732 = vmul.f32 %v1696, %v1728
        %v1733 = vmul.f32 %v1697, %v1728
        %v1734 = vmul.f32 %v1698, %v1728
        %v1735 = vmul.f32 %v1699, %v1728
        %v1736 = vmul.f32 %v1700, %v1728
        %v1737 = vmul.f32 %v1701, %v1728
        %v1738 = vmul.f32 %v1702, %v1728
        %v1739 = vmul.f32 %v1703, %v1728
        %v1740 = vmul.f32 %v1704, %v1728
        %v1741 = vmul.f32 %v1705, %v1728
        %v1742 = vmul.f32 %v1706, %v1728
        %v1743 = vmul.f32 %v1707, %v1728
        %v1744 = vmul.f32 %v1708, %v1728
        %v1745 = vmul.f32 %v1709, %v1728
        %v1746 = vmul.f32 %v1710, %v1728
        %v1747 = vmul.f32 %v1711, %v1728
        %v1748 = vmul.f32 %v1712, %v1728
        %v1749 = vmul.f32 %v1713, %v1728
        %v1750 = vmul.f32 %v1714, %v1728
        %v1751 = vmul.f32 %v1715, %v1728
        %v1752 = vmul.f32 %v1716, %v1728
        %v1753 = vmul.f32 %v1717, %v1728
        %v1754 = vmul.f32 %v1718, %v1728
        %v1755 = vmul.f32 %v1719, %v1728
        %v1756 = vmul.f32 %v1720, %v1728
        %v1757 = vmul.f32 %v1721, %v1728
        %v1758 = vmul.f32 %v1722, %v1728
        %v1759 = vmul.f32 %v1723, %v1728
        %v1760 = vmul.f32 %v1724, %v1728
        %v1761 = vadd.f32 %v1661, %v1729
        %v1762 = vadd.f32 %v1662, %v1730
        %v1763 = vadd.f32 %v1663, %v1731
        %v1764 = vadd.f32 %v1664, %v1732
        %v1765 = vadd.f32 %v1665, %v1733
        %v1766 = vadd.f32 %v1666, %v1734
        %v1767 = vadd.f32 %v1667, %v1735
        %v1768 = vadd.f32 %v1668, %v1736
        %v1769 = vadd.f32 %v1669, %v1737
        %v1770 = vadd.f32 %v1670, %v1738
        %v1771 = vadd.f32 %v1671, %v1739
        %v1772 = vadd.f32 %v1672, %v1740
        %v1773 = vadd.f32 %v1673, %v1741
        %v1774 = vadd.f32 %v1674, %v1742
        %v1775 = vadd.f32 %v1675, %v1743
        %v1776 = vadd.f32 %v1676, %v1744
        %v1777 = vadd.f32 %v1677, %v1745
        %v1778 = vadd.f32 %v1678, %v1746
        %v1779 = vadd.f32 %v1679, %v1747
        %v1780 = vadd.f32 %v1680, %v1748
        %v1781 = vadd.f32 %v1681, %v1749
        %v1782 = vadd.f32 %v1682, %v1750
        %v1783 = vadd.f32 %v1683, %v1751
        %v1784 = vadd.f32 %v1684, %v1752
        %v1785 = vadd.f32 %v1685, %v1753
        %v1786 = vadd.f32 %v1686, %v1754
        %v1787 = vadd.f32 %v1687, %v1755
        %v1788 = vadd.f32 %v1688, %v1756
        %v1789 = vadd.f32 %v1689, %v1757
        %v1790 = vadd.f32 %v1690, %v1758
        %v1791 = vadd.f32 %v1691, %v1759
        %v1792 = vadd.f32 %v1692, %v1760
        %v1793 = vld [vmem:[%s1592 + $0x2] sm:$0xff]
        %v1794 = vld [vmem:[%s1592 + $0xa] sm:$0xff]
        %v1795 = vld [vmem:[%s1592 + $0x1a] sm:$0xff]
        %v1796 = vld [vmem:[%s1592 + $0x22] sm:$0xff]
        %v1797 = vld [vmem:[%s1592 + $0x32] sm:$0xff]
        %v1798 = vld [vmem:[%s1592 + $0x3a] sm:$0xff]
        %v1799 = vld [vmem:[%s1592 + $0x4a] sm:$0xff]
        %v1800 = vld [vmem:[%s1592 + $0x52] sm:$0xff]
        %v1801 = vld [vmem:[%s1592 + $0x62] sm:$0xff]
        %v1802 = vld [vmem:[%s1592 + $0x6a] sm:$0xff]
        %v1803 = vld [vmem:[%s1592 + $0x7a] sm:$0xff]
        %v1804 = vld [vmem:[%s1592 + $0x82] sm:$0xff]
        %v1805 = vld [vmem:[%s1592 + $0x92] sm:$0xff]
        %v1806 = vld [vmem:[%s1592 + $0x9a] sm:$0xff]
        %v1807 = vld [vmem:[%s1592 + $0xaa] sm:$0xff]
        %v1808 = vld [vmem:[%s1592 + $0xb2] sm:$0xff]
        %v1809 = vld [vmem:[%s1592 + $0xc2] sm:$0xff]
        %v1810 = vld [vmem:[%s1592 + $0xca] sm:$0xff]
        %v1811 = vld [vmem:[%s1592 + $0xda] sm:$0xff]
        %v1812 = vld [vmem:[%s1592 + $0xe2] sm:$0xff]
        %v1813 = vld [vmem:[%s1592 + $0xf2] sm:$0xff]
        %v1814 = vld [vmem:[%s1592 + $0xfa] sm:$0xff]
        %v1815 = vld [vmem:[%s1592 + $0x10a] sm:$0xff]
        %v1816 = vld [vmem:[%s1592 + $0x112] sm:$0xff]
        %v1817 = vld [vmem:[%s1592 + $0x122] sm:$0xff]
        %v1818 = vld [vmem:[%s1592 + $0x12a] sm:$0xff]
        %v1819 = vld [vmem:[%s1592 + $0x13a] sm:$0xff]
        %v1820 = vld [vmem:[%s1592 + $0x142] sm:$0xff]
        %v1821 = vld [vmem:[%s1592 + $0x152] sm:$0xff]
        %v1822 = vld [vmem:[%s1592 + $0x15a] sm:$0xff]
        %v1823 = vld [vmem:[%s1592 + $0x16a] sm:$0xff]
        %v1824 = vld [vmem:[%s1592 + $0x172] sm:$0xff]
        %v1825 = vlaneseq
        %v1826 = vshrl.u32 %v1825, 7
        %v1827 = vsub.s32 0, %v1826
        %v1828 = vrot.slane %v901, %v1827
        %v1829 = vmul.f32 %v1793, %v1828
        %v1830 = vmul.f32 %v1794, %v1828
        %v1831 = vmul.f32 %v1795, %v1828
        %v1832 = vmul.f32 %v1796, %v1828
        %v1833 = vmul.f32 %v1797, %v1828
        %v1834 = vmul.f32 %v1798, %v1828
        %v1835 = vmul.f32 %v1799, %v1828
        %v1836 = vmul.f32 %v1800, %v1828
        %v1837 = vmul.f32 %v1801, %v1828
        %v1838 = vmul.f32 %v1802, %v1828
        %v1839 = vmul.f32 %v1803, %v1828
        %v1840 = vmul.f32 %v1804, %v1828
        %v1841 = vmul.f32 %v1805, %v1828
        %v1842 = vmul.f32 %v1806, %v1828
        %v1843 = vmul.f32 %v1807, %v1828
        %v1844 = vmul.f32 %v1808, %v1828
        %v1845 = vmul.f32 %v1809, %v1828
        %v1846 = vmul.f32 %v1810, %v1828
        %v1847 = vmul.f32 %v1811, %v1828
        %v1848 = vmul.f32 %v1812, %v1828
        %v1849 = vmul.f32 %v1813, %v1828
        %v1850 = vmul.f32 %v1814, %v1828
        %v1851 = vmul.f32 %v1815, %v1828
        %v1852 = vmul.f32 %v1816, %v1828
        %v1853 = vmul.f32 %v1817, %v1828
        %v1854 = vmul.f32 %v1818, %v1828
        %v1855 = vmul.f32 %v1819, %v1828
        %v1856 = vmul.f32 %v1820, %v1828
        %v1857 = vmul.f32 %v1821, %v1828
        %v1858 = vmul.f32 %v1822, %v1828
        %v1859 = vmul.f32 %v1823, %v1828
        %v1860 = vmul.f32 %v1824, %v1828
        %v1861 = vadd.f32 %v1761, %v1829
        %v1862 = vadd.f32 %v1762, %v1830
        %v1863 = vadd.f32 %v1763, %v1831
        %v1864 = vadd.f32 %v1764, %v1832
        %v1865 = vadd.f32 %v1765, %v1833
        %v1866 = vadd.f32 %v1766, %v1834
        %v1867 = vadd.f32 %v1767, %v1835
        %v1868 = vadd.f32 %v1768, %v1836
        %v1869 = vadd.f32 %v1769, %v1837
        %v1870 = vadd.f32 %v1770, %v1838
        %v1871 = vadd.f32 %v1771, %v1839
        %v1872 = vadd.f32 %v1772, %v1840
        %v1873 = vadd.f32 %v1773, %v1841
        %v1874 = vadd.f32 %v1774, %v1842
        %v1875 = vadd.f32 %v1775, %v1843
        %v1876 = vadd.f32 %v1776, %v1844
        %v1877 = vadd.f32 %v1777, %v1845
        %v1878 = vadd.f32 %v1778, %v1846
        %v1879 = vadd.f32 %v1779, %v1847
        %v1880 = vadd.f32 %v1780, %v1848
        %v1881 = vadd.f32 %v1781, %v1849
        %v1882 = vadd.f32 %v1782, %v1850
        %v1883 = vadd.f32 %v1783, %v1851
        %v1884 = vadd.f32 %v1784, %v1852
        %v1885 = vadd.f32 %v1785, %v1853
        %v1886 = vadd.f32 %v1786, %v1854
        %v1887 = vadd.f32 %v1787, %v1855
        %v1888 = vadd.f32 %v1788, %v1856
        %v1889 = vadd.f32 %v1789, %v1857
        %v1890 = vadd.f32 %v1790, %v1858
        %v1891 = vadd.f32 %v1791, %v1859
        %v1892 = vadd.f32 %v1792, %v1860
        %v1894 = vlaneseq
        %v1895 = vshrl.u32 %v1894, 7
        %v1896 = vsub.s32 0, %v1895
        %v1897 = vrot.slane %v902, %v1896
        %v1899 = vadd.f32 %v1861, %v1897
        %v1900 = vadd.f32 %v1862, %v1897
        %v1901 = vadd.f32 %v1863, %v1897
        %v1902 = vadd.f32 %v1864, %v1897
        %v1903 = vadd.f32 %v1865, %v1897
        %v1904 = vadd.f32 %v1866, %v1897
        %v1905 = vadd.f32 %v1867, %v1897
        %v1906 = vadd.f32 %v1868, %v1897
        %v1907 = vadd.f32 %v1869, %v1897
        %v1908 = vadd.f32 %v1870, %v1897
        %v1909 = vadd.f32 %v1871, %v1897
        %v1910 = vadd.f32 %v1872, %v1897
        %v1911 = vadd.f32 %v1873, %v1897
        %v1912 = vadd.f32 %v1874, %v1897
        %v1913 = vadd.f32 %v1875, %v1897
        %v1914 = vadd.f32 %v1876, %v1897
        %v1915 = vadd.f32 %v1877, %v1897
        %v1916 = vadd.f32 %v1878, %v1897
        %v1917 = vadd.f32 %v1879, %v1897
        %v1918 = vadd.f32 %v1880, %v1897
        %v1919 = vadd.f32 %v1881, %v1897
        %v1920 = vadd.f32 %v1882, %v1897
        %v1921 = vadd.f32 %v1883, %v1897
        %v1922 = vadd.f32 %v1884, %v1897
        %v1923 = vadd.f32 %v1885, %v1897
        %v1924 = vadd.f32 %v1886, %v1897
        %v1925 = vadd.f32 %v1887, %v1897
        %v1926 = vadd.f32 %v1888, %v1897
        %v1927 = vadd.f32 %v1889, %v1897
        %v1928 = vadd.f32 %v1890, %v1897
        %v1929 = vadd.f32 %v1891, %v1897
        %v1930 = vadd.f32 %v1892, %v1897
        %s1931 = scalar_lea.vmem %s3, 16
        %v1932 = vld [vmem:[%s1931] sm:$0xff]
        %v1933 = vld [vmem:[%s1931 + $0x8] sm:$0x1]
        %s1934 = scalar_lea.vmem %s4, 1
        %v1935 = vld [vmem:[%s1934] sm:$0x1]
        %1936 = vst.msk [vmem:[#allocation3] sm:$0xff] %vm903, 0.0
        %1937 = vst.msk [vmem:[#allocation3 + $0x8] sm:$0xff] %vm903, 0.0
        %1938 = vst.msk [vmem:[#allocation3 + $0x10] sm:$0x3] %vm906, 0.0
        %1939 = vst.msk [vmem:[#allocation3 + $0x18] sm:$0xff] %vm903, 0.0
        %1940 = vst.msk [vmem:[#allocation3 + $0x20] sm:$0xff] %vm903, 0.0
        %1941 = vst.msk [vmem:[#allocation3 + $0x28] sm:$0x3] %vm906, 0.0
        %1942 = vst.msk [vmem:[#allocation3 + $0x30] sm:$0xff] %vm903, 0.0
        %1943 = vst.msk [vmem:[#allocation3 + $0x38] sm:$0xff] %vm903, 0.0
        %1944 = vst.msk [vmem:[#allocation3 + $0x40] sm:$0x3] %vm906, 0.0
        %1945 = vst.msk [vmem:[#allocation3 + $0x48] sm:$0xff] %vm903, 0.0
        %1946 = vst.msk [vmem:[#allocation3 + $0x50] sm:$0xff] %vm903, 0.0
        %1947 = vst.msk [vmem:[#allocation3 + $0x58] sm:$0x3] %vm906, 0.0
        %1948 = vst.msk [vmem:[#allocation3 + $0x60] sm:$0xff] %vm903, 0.0
        %1949 = vst.msk [vmem:[#allocation3 + $0x68] sm:$0xff] %vm903, 0.0
        %1950 = vst.msk [vmem:[#allocation3 + $0x70] sm:$0x3] %vm906, 0.0
        %1951 = vst.msk [vmem:[#allocation3 + $0x78] sm:$0xff] %vm903, 0.0
        %1952 = vst.msk [vmem:[#allocation3 + $0x80] sm:$0xff] %vm903, 0.0
        %1953 = vst.msk [vmem:[#allocation3 + $0x88] sm:$0x3] %vm906, 0.0
        %1954 = vst.msk [vmem:[#allocation3 + $0x90] sm:$0xff] %vm903, 0.0
        %1955 = vst.msk [vmem:[#allocation3 + $0x98] sm:$0xff] %vm903, 0.0
        %1956 = vst.msk [vmem:[#allocation3 + $0xa0] sm:$0x3] %vm906, 0.0
        %1957 = vst.msk [vmem:[#allocation3 + $0xa8] sm:$0xff] %vm903, 0.0
        %1958 = vst.msk [vmem:[#allocation3 + $0xb0] sm:$0xff] %vm903, 0.0
        %1959 = vst.msk [vmem:[#allocation3 + $0xb8] sm:$0x3] %vm906, 0.0
        %1960 = vst.msk [vmem:[#allocation3 + $0xc0] sm:$0xff] %vm903, 0.0
        %1961 = vst.msk [vmem:[#allocation3 + $0xc8] sm:$0xff] %vm903, 0.0
        %1962 = vst.msk [vmem:[#allocation3 + $0xd0] sm:$0x3] %vm906, 0.0
        %1963 = vst.msk [vmem:[#allocation3 + $0xd8] sm:$0xff] %vm903, 0.0
        %1964 = vst.msk [vmem:[#allocation3 + $0xe0] sm:$0xff] %vm903, 0.0
        %1965 = vst.msk [vmem:[#allocation3 + $0xe8] sm:$0x3] %vm906, 0.0
        %1966 = vst.msk [vmem:[#allocation3 + $0xf0] sm:$0xff] %vm903, 0.0
        %1967 = vst.msk [vmem:[#allocation3 + $0xf8] sm:$0xff] %vm903, 0.0
        %1968 = vst.msk [vmem:[#allocation3 + $0x100] sm:$0x3] %vm906, 0.0
        %1969 = vst.msk [vmem:[#allocation3 + $0x108] sm:$0xff] %vm903, 0.0
        %1970 = vst.msk [vmem:[#allocation3 + $0x110] sm:$0xff] %vm903, 0.0
        %1971 = vst.msk [vmem:[#allocation3 + $0x118] sm:$0x3] %vm906, 0.0
        %1972 = vst.msk [vmem:[#allocation3 + $0x120] sm:$0xff] %vm903, 0.0
        %1973 = vst.msk [vmem:[#allocation3 + $0x128] sm:$0xff] %vm903, 0.0
        %1974 = vst.msk [vmem:[#allocation3 + $0x130] sm:$0x3] %vm906, 0.0
        %1975 = vst.msk [vmem:[#allocation3 + $0x138] sm:$0xff] %vm903, 0.0
        %1976 = vst.msk [vmem:[#allocation3 + $0x140] sm:$0xff] %vm903, 0.0
        %1977 = vst.msk [vmem:[#allocation3 + $0x148] sm:$0x3] %vm906, 0.0
        %1978 = vst.msk [vmem:[#allocation3 + $0x150] sm:$0xff] %vm903, 0.0
        %1979 = vst.msk [vmem:[#allocation3 + $0x158] sm:$0xff] %vm903, 0.0
        %1980 = vst.msk [vmem:[#allocation3 + $0x160] sm:$0x3] %vm906, 0.0
        %1981 = vst.msk [vmem:[#allocation3 + $0x168] sm:$0xff] %vm903, 0.0
        %1982 = vst.msk [vmem:[#allocation3 + $0x170] sm:$0xff] %vm903, 0.0
        %1983 = vst.msk [vmem:[#allocation3 + $0x178] sm:$0x3] %vm906, 0.0
        %1984 = vst.msk [vmem:[#allocation3 + $0x180] sm:$0xff] %vm903, 0.0
        %1985 = vst.msk [vmem:[#allocation3 + $0x188] sm:$0xff] %vm903, 0.0
        %1986 = vst.msk [vmem:[#allocation3 + $0x190] sm:$0x3] %vm906, 0.0
        %1987 = vst.msk [vmem:[#allocation3 + $0x198] sm:$0xff] %vm903, 0.0
        %1988 = vst.msk [vmem:[#allocation3 + $0x1a0] sm:$0xff] %vm903, 0.0
        %1989 = vst.msk [vmem:[#allocation3 + $0x1a8] sm:$0x3] %vm906, 0.0
        %s1990 = scalar_lea.vmem [#allocation3], 24
        %1991 = vst.msk [vmem:[%s1990 + $0x1] sm:$0xff] %vm903, %v742
        %1992 = vst.msk [vmem:[%s1990 + $0x9] sm:$0xff] %vm903, %v747
        %1993 = vst.msk [vmem:[%s1990 + $0x19] sm:$0xff] %vm903, %v752
        %1994 = vst.msk [vmem:[%s1990 + $0x21] sm:$0xff] %vm903, %v757
        %1995 = vst.msk [vmem:[%s1990 + $0x31] sm:$0xff] %vm903, %v762
        %1996 = vst.msk [vmem:[%s1990 + $0x39] sm:$0xff] %vm903, %v767
        %1997 = vst.msk [vmem:[%s1990 + $0x49] sm:$0xff] %vm903, %v772
        %1998 = vst.msk [vmem:[%s1990 + $0x51] sm:$0xff] %vm903, %v777
        %1999 = vst.msk [vmem:[%s1990 + $0x61] sm:$0xff] %vm903, %v782
        %2000 = vst.msk [vmem:[%s1990 + $0x69] sm:$0xff] %vm903, %v787
        %2001 = vst.msk [vmem:[%s1990 + $0x79] sm:$0xff] %vm903, %v792
        %2002 = vst.msk [vmem:[%s1990 + $0x81] sm:$0xff] %vm903, %v797
        %2003 = vst.msk [vmem:[%s1990 + $0x91] sm:$0xff] %vm903, %v802
        %2004 = vst.msk [vmem:[%s1990 + $0x99] sm:$0xff] %vm903, %v807
        %2005 = vst.msk [vmem:[%s1990 + $0xa9] sm:$0xff] %vm903, %v812
        %2006 = vst.msk [vmem:[%s1990 + $0xb1] sm:$0xff] %vm903, %v817
        %2007 = vst.msk [vmem:[%s1990 + $0xc1] sm:$0xff] %vm903, %v822
        %2008 = vst.msk [vmem:[%s1990 + $0xc9] sm:$0xff] %vm903, %v827
        %2009 = vst.msk [vmem:[%s1990 + $0xd9] sm:$0xff] %vm903, %v832
        %2010 = vst.msk [vmem:[%s1990 + $0xe1] sm:$0xff] %vm903, %v837
        %2011 = vst.msk [vmem:[%s1990 + $0xf1] sm:$0xff] %vm903, %v842
        %2012 = vst.msk [vmem:[%s1990 + $0xf9] sm:$0xff] %vm903, %v847
        %2013 = vst.msk [vmem:[%s1990 + $0x109] sm:$0xff] %vm903, %v852
        %2014 = vst.msk [vmem:[%s1990 + $0x111] sm:$0xff] %vm903, %v857
        %2015 = vst.msk [vmem:[%s1990 + $0x121] sm:$0xff] %vm903, %v862
        %2016 = vst.msk [vmem:[%s1990 + $0x129] sm:$0xff] %vm903, %v867
        %2017 = vst.msk [vmem:[%s1990 + $0x139] sm:$0xff] %vm903, %v872
        %2018 = vst.msk [vmem:[%s1990 + $0x141] sm:$0xff] %vm903, %v877
        %2019 = vst.msk [vmem:[%s1990 + $0x151] sm:$0xff] %vm903, %v882
        %2020 = vst.msk [vmem:[%s1990 + $0x159] sm:$0xff] %vm903, %v887
        %2021 = vst.msk [vmem:[%s1990 + $0x169] sm:$0xff] %vm903, %v892
        %2022 = vst.msk [vmem:[%s1990 + $0x171] sm:$0xff] %vm903, %v897
        %v2023 = vld [vmem:[#allocation3] sm:$0xff]
        %v2024 = vld [vmem:[#allocation3 + $0x8] sm:$0xff]
        %v2025 = vld [vmem:[#allocation3 + $0x18] sm:$0xff]
        %v2026 = vld [vmem:[#allocation3 + $0x20] sm:$0xff]
        %v2027 = vld [vmem:[#allocation3 + $0x30] sm:$0xff]
        %v2028 = vld [vmem:[#allocation3 + $0x38] sm:$0xff]
        %v2029 = vld [vmem:[#allocation3 + $0x48] sm:$0xff]
        %v2030 = vld [vmem:[#allocation3 + $0x50] sm:$0xff]
        %v2031 = vld [vmem:[#allocation3 + $0x60] sm:$0xff]
        %v2032 = vld [vmem:[#allocation3 + $0x68] sm:$0xff]
        %v2033 = vld [vmem:[#allocation3 + $0x78] sm:$0xff]
        %v2034 = vld [vmem:[#allocation3 + $0x80] sm:$0xff]
        %v2035 = vld [vmem:[#allocation3 + $0x90] sm:$0xff]
        %v2036 = vld [vmem:[#allocation3 + $0x98] sm:$0xff]
        %v2037 = vld [vmem:[#allocation3 + $0xa8] sm:$0xff]
        %v2038 = vld [vmem:[#allocation3 + $0xb0] sm:$0xff]
        %v2039 = vld [vmem:[#allocation3 + $0xc0] sm:$0xff]
        %v2040 = vld [vmem:[#allocation3 + $0xc8] sm:$0xff]
        %v2041 = vld [vmem:[#allocation3 + $0xd8] sm:$0xff]
        %v2042 = vld [vmem:[#allocation3 + $0xe0] sm:$0xff]
        %v2043 = vld [vmem:[#allocation3 + $0xf0] sm:$0xff]
        %v2044 = vld [vmem:[#allocation3 + $0xf8] sm:$0xff]
        %v2045 = vld [vmem:[#allocation3 + $0x108] sm:$0xff]
        %v2046 = vld [vmem:[#allocation3 + $0x110] sm:$0xff]
        %v2047 = vld [vmem:[#allocation3 + $0x120] sm:$0xff]
        %v2048 = vld [vmem:[#allocation3 + $0x128] sm:$0xff]
        %v2049 = vld [vmem:[#allocation3 + $0x138] sm:$0xff]
        %v2050 = vld [vmem:[#allocation3 + $0x140] sm:$0xff]
        %v2051 = vld [vmem:[#allocation3 + $0x150] sm:$0xff]
        %v2052 = vld [vmem:[#allocation3 + $0x158] sm:$0xff]
        %v2053 = vld [vmem:[#allocation3 + $0x168] sm:$0xff]
        %v2054 = vld [vmem:[#allocation3 + $0x170] sm:$0xff]
        %v2055 = vlaneseq
        %v2056 = vshrl.u32 %v2055, 7
        %v2057 = vsub.s32 0, %v2056
        %v2058 = vrot.slane %v1932, %v2057
        %v2059 = vmul.f32 %v2023, %v2058
        %v2060 = vmul.f32 %v2024, %v2058
        %v2061 = vmul.f32 %v2025, %v2058
        %v2062 = vmul.f32 %v2026, %v2058
        %v2063 = vmul.f32 %v2027, %v2058
        %v2064 = vmul.f32 %v2028, %v2058
        %v2065 = vmul.f32 %v2029, %v2058
        %v2066 = vmul.f32 %v2030, %v2058
        %v2067 = vmul.f32 %v2031, %v2058
        %v2068 = vmul.f32 %v2032, %v2058
        %v2069 = vmul.f32 %v2033, %v2058
        %v2070 = vmul.f32 %v2034, %v2058
        %v2071 = vmul.f32 %v2035, %v2058
        %v2072 = vmul.f32 %v2036, %v2058
        %v2073 = vmul.f32 %v2037, %v2058
        %v2074 = vmul.f32 %v2038, %v2058
        %v2075 = vmul.f32 %v2039, %v2058
        %v2076 = vmul.f32 %v2040, %v2058
        %v2077 = vmul.f32 %v2041, %v2058
        %v2078 = vmul.f32 %v2042, %v2058
        %v2079 = vmul.f32 %v2043, %v2058
        %v2080 = vmul.f32 %v2044, %v2058
        %v2081 = vmul.f32 %v2045, %v2058
        %v2082 = vmul.f32 %v2046, %v2058
        %v2083 = vmul.f32 %v2047, %v2058
        %v2084 = vmul.f32 %v2048, %v2058
        %v2085 = vmul.f32 %v2049, %v2058
        %v2086 = vmul.f32 %v2050, %v2058
        %v2087 = vmul.f32 %v2051, %v2058
        %v2088 = vmul.f32 %v2052, %v2058
        %v2089 = vmul.f32 %v2053, %v2058
        %v2090 = vmul.f32 %v2054, %v2058
        %v2091 = vadd.f32 %v2059, 0.0
        %v2092 = vadd.f32 %v2060, 0.0
        %v2093 = vadd.f32 %v2061, 0.0
        %v2094 = vadd.f32 %v2062, 0.0
        %v2095 = vadd.f32 %v2063, 0.0
        %v2096 = vadd.f32 %v2064, 0.0
        %v2097 = vadd.f32 %v2065, 0.0
        %v2098 = vadd.f32 %v2066, 0.0
        %v2099 = vadd.f32 %v2067, 0.0
        %v2100 = vadd.f32 %v2068, 0.0
        %v2101 = vadd.f32 %v2069, 0.0
        %v2102 = vadd.f32 %v2070, 0.0
        %v2103 = vadd.f32 %v2071, 0.0
        %v2104 = vadd.f32 %v2072, 0.0
        %v2105 = vadd.f32 %v2073, 0.0
        %v2106 = vadd.f32 %v2074, 0.0
        %v2107 = vadd.f32 %v2075, 0.0
        %v2108 = vadd.f32 %v2076, 0.0
        %v2109 = vadd.f32 %v2077, 0.0
        %v2110 = vadd.f32 %v2078, 0.0
        %v2111 = vadd.f32 %v2079, 0.0
        %v2112 = vadd.f32 %v2080, 0.0
        %v2113 = vadd.f32 %v2081, 0.0
        %v2114 = vadd.f32 %v2082, 0.0
        %v2115 = vadd.f32 %v2083, 0.0
        %v2116 = vadd.f32 %v2084, 0.0
        %v2117 = vadd.f32 %v2085, 0.0
        %v2118 = vadd.f32 %v2086, 0.0
        %v2119 = vadd.f32 %v2087, 0.0
        %v2120 = vadd.f32 %v2088, 0.0
        %v2121 = vadd.f32 %v2089, 0.0
        %v2122 = vadd.f32 %v2090, 0.0
        %v2123 = vld [vmem:[#allocation3 + $0x1] sm:$0xff]
        %v2124 = vld [vmem:[#allocation3 + $0x9] sm:$0xff]
        %v2125 = vld [vmem:[#allocation3 + $0x19] sm:$0xff]
        %v2126 = vld [vmem:[#allocation3 + $0x21] sm:$0xff]
        %v2127 = vld [vmem:[#allocation3 + $0x31] sm:$0xff]
        %v2128 = vld [vmem:[#allocation3 + $0x39] sm:$0xff]
        %v2129 = vld [vmem:[#allocation3 + $0x49] sm:$0xff]
        %v2130 = vld [vmem:[#allocation3 + $0x51] sm:$0xff]
        %v2131 = vld [vmem:[#allocation3 + $0x61] sm:$0xff]
        %v2132 = vld [vmem:[#allocation3 + $0x69] sm:$0xff]
        %v2133 = vld [vmem:[#allocation3 + $0x79] sm:$0xff]
        %v2134 = vld [vmem:[#allocation3 + $0x81] sm:$0xff]
        %v2135 = vld [vmem:[#allocation3 + $0x91] sm:$0xff]
        %v2136 = vld [vmem:[#allocation3 + $0x99] sm:$0xff]
        %v2137 = vld [vmem:[#allocation3 + $0xa9] sm:$0xff]
        %v2138 = vld [vmem:[#allocation3 + $0xb1] sm:$0xff]
        %v2139 = vld [vmem:[#allocation3 + $0xc1] sm:$0xff]
        %v2140 = vld [vmem:[#allocation3 + $0xc9] sm:$0xff]
        %v2141 = vld [vmem:[#allocation3 + $0xd9] sm:$0xff]
        %v2142 = vld [vmem:[#allocation3 + $0xe1] sm:$0xff]
        %v2143 = vld [vmem:[#allocation3 + $0xf1] sm:$0xff]
        %v2144 = vld [vmem:[#allocation3 + $0xf9] sm:$0xff]
        %v2145 = vld [vmem:[#allocation3 + $0x109] sm:$0xff]
        %v2146 = vld [vmem:[#allocation3 + $0x111] sm:$0xff]
        %v2147 = vld [vmem:[#allocation3 + $0x121] sm:$0xff]
        %v2148 = vld [vmem:[#allocation3 + $0x129] sm:$0xff]
        %v2149 = vld [vmem:[#allocation3 + $0x139] sm:$0xff]
        %v2150 = vld [vmem:[#allocation3 + $0x141] sm:$0xff]
        %v2151 = vld [vmem:[#allocation3 + $0x151] sm:$0xff]
        %v2152 = vld [vmem:[#allocation3 + $0x159] sm:$0xff]
        %v2153 = vld [vmem:[#allocation3 + $0x169] sm:$0xff]
        %v2154 = vld [vmem:[#allocation3 + $0x171] sm:$0xff]
        %v2155 = vlaneseq
        %v2156 = vshrl.u32 %v2155, 7
        %v2157 = vsub.s32 1, %v2156
        %v2158 = vrot.slane %v1932, %v2157
        %v2159 = vmul.f32 %v2123, %v2158
        %v2160 = vmul.f32 %v2124, %v2158
        %v2161 = vmul.f32 %v2125, %v2158
        %v2162 = vmul.f32 %v2126, %v2158
        %v2163 = vmul.f32 %v2127, %v2158
        %v2164 = vmul.f32 %v2128, %v2158
        %v2165 = vmul.f32 %v2129, %v2158
        %v2166 = vmul.f32 %v2130, %v2158
        %v2167 = vmul.f32 %v2131, %v2158
        %v2168 = vmul.f32 %v2132, %v2158
        %v2169 = vmul.f32 %v2133, %v2158
        %v2170 = vmul.f32 %v2134, %v2158
        %v2171 = vmul.f32 %v2135, %v2158
        %v2172 = vmul.f32 %v2136, %v2158
        %v2173 = vmul.f32 %v2137, %v2158
        %v2174 = vmul.f32 %v2138, %v2158
        %v2175 = vmul.f32 %v2139, %v2158
        %v2176 = vmul.f32 %v2140, %v2158
        %v2177 = vmul.f32 %v2141, %v2158
        %v2178 = vmul.f32 %v2142, %v2158
        %v2179 = vmul.f32 %v2143, %v2158
        %v2180 = vmul.f32 %v2144, %v2158
        %v2181 = vmul.f32 %v2145, %v2158
        %v2182 = vmul.f32 %v2146, %v2158
        %v2183 = vmul.f32 %v2147, %v2158
        %v2184 = vmul.f32 %v2148, %v2158
        %v2185 = vmul.f32 %v2149, %v2158
        %v2186 = vmul.f32 %v2150, %v2158
        %v2187 = vmul.f32 %v2151, %v2158
        %v2188 = vmul.f32 %v2152, %v2158
        %v2189 = vmul.f32 %v2153, %v2158
        %v2190 = vmul.f32 %v2154, %v2158
        %v2191 = vadd.f32 %v2091, %v2159
        %v2192 = vadd.f32 %v2092, %v2160
        %v2193 = vadd.f32 %v2093, %v2161
        %v2194 = vadd.f32 %v2094, %v2162
        %v2195 = vadd.f32 %v2095, %v2163
        %v2196 = vadd.f32 %v2096, %v2164
        %v2197 = vadd.f32 %v2097, %v2165
        %v2198 = vadd.f32 %v2098, %v2166
        %v2199 = vadd.f32 %v2099, %v2167
        %v2200 = vadd.f32 %v2100, %v2168
        %v2201 = vadd.f32 %v2101, %v2169
        %v2202 = vadd.f32 %v2102, %v2170
        %v2203 = vadd.f32 %v2103, %v2171
        %v2204 = vadd.f32 %v2104, %v2172
        %v2205 = vadd.f32 %v2105, %v2173
        %v2206 = vadd.f32 %v2106, %v2174
        %v2207 = vadd.f32 %v2107, %v2175
        %v2208 = vadd.f32 %v2108, %v2176
        %v2209 = vadd.f32 %v2109, %v2177
        %v2210 = vadd.f32 %v2110, %v2178
        %v2211 = vadd.f32 %v2111, %v2179
        %v2212 = vadd.f32 %v2112, %v2180
        %v2213 = vadd.f32 %v2113, %v2181
        %v2214 = vadd.f32 %v2114, %v2182
        %v2215 = vadd.f32 %v2115, %v2183
        %v2216 = vadd.f32 %v2116, %v2184
        %v2217 = vadd.f32 %v2117, %v2185
        %v2218 = vadd.f32 %v2118, %v2186
        %v2219 = vadd.f32 %v2119, %v2187
        %v2220 = vadd.f32 %v2120, %v2188
        %v2221 = vadd.f32 %v2121, %v2189
        %v2222 = vadd.f32 %v2122, %v2190
        %v2223 = vld [vmem:[#allocation3 + $0x2] sm:$0xff]
        %v2224 = vld [vmem:[#allocation3 + $0xa] sm:$0xff]
        %v2225 = vld [vmem:[#allocation3 + $0x1a] sm:$0xff]
        %v2226 = vld [vmem:[#allocation3 + $0x22] sm:$0xff]
        %v2227 = vld [vmem:[#allocation3 + $0x32] sm:$0xff]
        %v2228 = vld [vmem:[#allocation3 + $0x3a] sm:$0xff]
        %v2229 = vld [vmem:[#allocation3 + $0x4a] sm:$0xff]
        %v2230 = vld [vmem:[#allocation3 + $0x52] sm:$0xff]
        %v2231 = vld [vmem:[#allocation3 + $0x62] sm:$0xff]
        %v2232 = vld [vmem:[#allocation3 + $0x6a] sm:$0xff]
        %v2233 = vld [vmem:[#allocation3 + $0x7a] sm:$0xff]
        %v2234 = vld [vmem:[#allocation3 + $0x82] sm:$0xff]
        %v2235 = vld [vmem:[#allocation3 + $0x92] sm:$0xff]
        %v2236 = vld [vmem:[#allocation3 + $0x9a] sm:$0xff]
        %v2237 = vld [vmem:[#allocation3 + $0xaa] sm:$0xff]
        %v2238 = vld [vmem:[#allocation3 + $0xb2] sm:$0xff]
        %v2239 = vld [vmem:[#allocation3 + $0xc2] sm:$0xff]
        %v2240 = vld [vmem:[#allocation3 + $0xca] sm:$0xff]
        %v2241 = vld [vmem:[#allocation3 + $0xda] sm:$0xff]
        %v2242 = vld [vmem:[#allocation3 + $0xe2] sm:$0xff]
        %v2243 = vld [vmem:[#allocation3 + $0xf2] sm:$0xff]
        %v2244 = vld [vmem:[#allocation3 + $0xfa] sm:$0xff]
        %v2245 = vld [vmem:[#allocation3 + $0x10a] sm:$0xff]
        %v2246 = vld [vmem:[#allocation3 + $0x112] sm:$0xff]
        %v2247 = vld [vmem:[#allocation3 + $0x122] sm:$0xff]
        %v2248 = vld [vmem:[#allocation3 + $0x12a] sm:$0xff]
        %v2249 = vld [vmem:[#allocation3 + $0x13a] sm:$0xff]
        %v2250 = vld [vmem:[#allocation3 + $0x142] sm:$0xff]
        %v2251 = vld [vmem:[#allocation3 + $0x152] sm:$0xff]
        %v2252 = vld [vmem:[#allocation3 + $0x15a] sm:$0xff]
        %v2253 = vld [vmem:[#allocation3 + $0x16a] sm:$0xff]
        %v2254 = vld [vmem:[#allocation3 + $0x172] sm:$0xff]
        %v2255 = vlaneseq
        %v2256 = vshrl.u32 %v2255, 7
        %v2257 = vsub.s32 2, %v2256
        %v2258 = vrot.slane %v1932, %v2257
        %v2259 = vmul.f32 %v2223, %v2258
        %v2260 = vmul.f32 %v2224, %v2258
        %v2261 = vmul.f32 %v2225, %v2258
        %v2262 = vmul.f32 %v2226, %v2258
        %v2263 = vmul.f32 %v2227, %v2258
        %v2264 = vmul.f32 %v2228, %v2258
        %v2265 = vmul.f32 %v2229, %v2258
        %v2266 = vmul.f32 %v2230, %v2258
        %v2267 = vmul.f32 %v2231, %v2258
        %v2268 = vmul.f32 %v2232, %v2258
        %v2269 = vmul.f32 %v2233, %v2258
        %v2270 = vmul.f32 %v2234, %v2258
        %v2271 = vmul.f32 %v2235, %v2258
        %v2272 = vmul.f32 %v2236, %v2258
        %v2273 = vmul.f32 %v2237, %v2258
        %v2274 = vmul.f32 %v2238, %v2258
        %v2275 = vmul.f32 %v2239, %v2258
        %v2276 = vmul.f32 %v2240, %v2258
        %v2277 = vmul.f32 %v2241, %v2258
        %v2278 = vmul.f32 %v2242, %v2258
        %v2279 = vmul.f32 %v2243, %v2258
        %v2280 = vmul.f32 %v2244, %v2258
        %v2281 = vmul.f32 %v2245, %v2258
        %v2282 = vmul.f32 %v2246, %v2258
        %v2283 = vmul.f32 %v2247, %v2258
        %v2284 = vmul.f32 %v2248, %v2258
        %v2285 = vmul.f32 %v2249, %v2258
        %v2286 = vmul.f32 %v2250, %v2258
        %v2287 = vmul.f32 %v2251, %v2258
        %v2288 = vmul.f32 %v2252, %v2258
        %v2289 = vmul.f32 %v2253, %v2258
        %v2290 = vmul.f32 %v2254, %v2258
        %v2291 = vadd.f32 %v2191, %v2259
        %v2292 = vadd.f32 %v2192, %v2260
        %v2293 = vadd.f32 %v2193, %v2261
        %v2294 = vadd.f32 %v2194, %v2262
        %v2295 = vadd.f32 %v2195, %v2263
        %v2296 = vadd.f32 %v2196, %v2264
        %v2297 = vadd.f32 %v2197, %v2265
        %v2298 = vadd.f32 %v2198, %v2266
        %v2299 = vadd.f32 %v2199, %v2267
        %v2300 = vadd.f32 %v2200, %v2268
        %v2301 = vadd.f32 %v2201, %v2269
        %v2302 = vadd.f32 %v2202, %v2270
        %v2303 = vadd.f32 %v2203, %v2271
        %v2304 = vadd.f32 %v2204, %v2272
        %v2305 = vadd.f32 %v2205, %v2273
        %v2306 = vadd.f32 %v2206, %v2274
        %v2307 = vadd.f32 %v2207, %v2275
        %v2308 = vadd.f32 %v2208, %v2276
        %v2309 = vadd.f32 %v2209, %v2277
        %v2310 = vadd.f32 %v2210, %v2278
        %v2311 = vadd.f32 %v2211, %v2279
        %v2312 = vadd.f32 %v2212, %v2280
        %v2313 = vadd.f32 %v2213, %v2281
        %v2314 = vadd.f32 %v2214, %v2282
        %v2315 = vadd.f32 %v2215, %v2283
        %v2316 = vadd.f32 %v2216, %v2284
        %v2317 = vadd.f32 %v2217, %v2285
        %v2318 = vadd.f32 %v2218, %v2286
        %v2319 = vadd.f32 %v2219, %v2287
        %v2320 = vadd.f32 %v2220, %v2288
        %v2321 = vadd.f32 %v2221, %v2289
        %v2322 = vadd.f32 %v2222, %v2290
        %v2323 = vld [vmem:[%s1990] sm:$0xff]
        %v2324 = vld [vmem:[%s1990 + $0x8] sm:$0xff]
        %v2325 = vld [vmem:[%s1990 + $0x18] sm:$0xff]
        %v2326 = vld [vmem:[%s1990 + $0x20] sm:$0xff]
        %v2327 = vld [vmem:[%s1990 + $0x30] sm:$0xff]
        %v2328 = vld [vmem:[%s1990 + $0x38] sm:$0xff]
        %v2329 = vld [vmem:[%s1990 + $0x48] sm:$0xff]
        %v2330 = vld [vmem:[%s1990 + $0x50] sm:$0xff]
        %v2331 = vld [vmem:[%s1990 + $0x60] sm:$0xff]
        %v2332 = vld [vmem:[%s1990 + $0x68] sm:$0xff]
        %v2333 = vld [vmem:[%s1990 + $0x78] sm:$0xff]
        %v2334 = vld [vmem:[%s1990 + $0x80] sm:$0xff]
        %v2335 = vld [vmem:[%s1990 + $0x90] sm:$0xff]
        %v2336 = vld [vmem:[%s1990 + $0x98] sm:$0xff]
        %v2337 = vld [vmem:[%s1990 + $0xa8] sm:$0xff]
        %v2338 = vld [vmem:[%s1990 + $0xb0] sm:$0xff]
        %v2339 = vld [vmem:[%s1990 + $0xc0] sm:$0xff]
        %v2340 = vld [vmem:[%s1990 + $0xc8] sm:$0xff]
        %v2341 = vld [vmem:[%s1990 + $0xd8] sm:$0xff]
        %v2342 = vld [vmem:[%s1990 + $0xe0] sm:$0xff]
        %v2343 = vld [vmem:[%s1990 + $0xf0] sm:$0xff]
        %v2344 = vld [vmem:[%s1990 + $0xf8] sm:$0xff]
        %v2345 = vld [vmem:[%s1990 + $0x108] sm:$0xff]
        %v2346 = vld [vmem:[%s1990 + $0x110] sm:$0xff]
        %v2347 = vld [vmem:[%s1990 + $0x120] sm:$0xff]
        %v2348 = vld [vmem:[%s1990 + $0x128] sm:$0xff]
        %v2349 = vld [vmem:[%s1990 + $0x138] sm:$0xff]
        %v2350 = vld [vmem:[%s1990 + $0x140] sm:$0xff]
        %v2351 = vld [vmem:[%s1990 + $0x150] sm:$0xff]
        %v2352 = vld [vmem:[%s1990 + $0x158] sm:$0xff]
        %v2353 = vld [vmem:[%s1990 + $0x168] sm:$0xff]
        %v2354 = vld [vmem:[%s1990 + $0x170] sm:$0xff]
        %v2355 = vlaneseq
        %v2356 = vshrl.u32 %v2355, 7
        %v2357 = vsub.s32 3, %v2356
        %v2358 = vrot.slane %v1932, %v2357
        %v2359 = vmul.f32 %v2323, %v2358
        %v2360 = vmul.f32 %v2324, %v2358
        %v2361 = vmul.f32 %v2325, %v2358
        %v2362 = vmul.f32 %v2326, %v2358
        %v2363 = vmul.f32 %v2327, %v2358
        %v2364 = vmul.f32 %v2328, %v2358
        %v2365 = vmul.f32 %v2329, %v2358
        %v2366 = vmul.f32 %v2330, %v2358
        %v2367 = vmul.f32 %v2331, %v2358
        %v2368 = vmul.f32 %v2332, %v2358
        %v2369 = vmul.f32 %v2333, %v2358
        %v2370 = vmul.f32 %v2334, %v2358
        %v2371 = vmul.f32 %v2335, %v2358
        %v2372 = vmul.f32 %v2336, %v2358
        %v2373 = vmul.f32 %v2337, %v2358
        %v2374 = vmul.f32 %v2338, %v2358
        %v2375 = vmul.f32 %v2339, %v2358
        %v2376 = vmul.f32 %v2340, %v2358
        %v2377 = vmul.f32 %v2341, %v2358
        %v2378 = vmul.f32 %v2342, %v2358
        %v2379 = vmul.f32 %v2343, %v2358
        %v2380 = vmul.f32 %v2344, %v2358
        %v2381 = vmul.f32 %v2345, %v2358
        %v2382 = vmul.f32 %v2346, %v2358
        %v2383 = vmul.f32 %v2347, %v2358
        %v2384 = vmul.f32 %v2348, %v2358
        %v2385 = vmul.f32 %v2349, %v2358
        %v2386 = vmul.f32 %v2350, %v2358
        %v2387 = vmul.f32 %v2351, %v2358
        %v2388 = vmul.f32 %v2352, %v2358
        %v2389 = vmul.f32 %v2353, %v2358
        %v2390 = vmul.f32 %v2354, %v2358
        %v2391 = vadd.f32 %v2291, %v2359
        %v2392 = vadd.f32 %v2292, %v2360
        %v2393 = vadd.f32 %v2293, %v2361
        %v2394 = vadd.f32 %v2294, %v2362
        %v2395 = vadd.f32 %v2295, %v2363
        %v2396 = vadd.f32 %v2296, %v2364
        %v2397 = vadd.f32 %v2297, %v2365
        %v2398 = vadd.f32 %v2298, %v2366
        %v2399 = vadd.f32 %v2299, %v2367
        %v2400 = vadd.f32 %v2300, %v2368
        %v2401 = vadd.f32 %v2301, %v2369
        %v2402 = vadd.f32 %v2302, %v2370
        %v2403 = vadd.f32 %v2303, %v2371
        %v2404 = vadd.f32 %v2304, %v2372
        %v2405 = vadd.f32 %v2305, %v2373
        %v2406 = vadd.f32 %v2306, %v2374
        %v2407 = vadd.f32 %v2307, %v2375
        %v2408 = vadd.f32 %v2308, %v2376
        %v2409 = vadd.f32 %v2309, %v2377
        %v2410 = vadd.f32 %v2310, %v2378
        %v2411 = vadd.f32 %v2311, %v2379
        %v2412 = vadd.f32 %v2312, %v2380
        %v2413 = vadd.f32 %v2313, %v2381
        %v2414 = vadd.f32 %v2314, %v2382
        %v2415 = vadd.f32 %v2315, %v2383
        %v2416 = vadd.f32 %v2316, %v2384
        %v2417 = vadd.f32 %v2317, %v2385
        %v2418 = vadd.f32 %v2318, %v2386
        %v2419 = vadd.f32 %v2319, %v2387
        %v2420 = vadd.f32 %v2320, %v2388
        %v2421 = vadd.f32 %v2321, %v2389
        %v2422 = vadd.f32 %v2322, %v2390
        %v2423 = vld [vmem:[%s1990 + $0x1] sm:$0xff]
        %v2424 = vld [vmem:[%s1990 + $0x9] sm:$0xff]
        %v2425 = vld [vmem:[%s1990 + $0x19] sm:$0xff]
        %v2426 = vld [vmem:[%s1990 + $0x21] sm:$0xff]
        %v2427 = vld [vmem:[%s1990 + $0x31] sm:$0xff]
        %v2428 = vld [vmem:[%s1990 + $0x39] sm:$0xff]
        %v2429 = vld [vmem:[%s1990 + $0x49] sm:$0xff]
        %v2430 = vld [vmem:[%s1990 + $0x51] sm:$0xff]
        %v2431 = vld [vmem:[%s1990 + $0x61] sm:$0xff]
        %v2432 = vld [vmem:[%s1990 + $0x69] sm:$0xff]
        %v2433 = vld [vmem:[%s1990 + $0x79] sm:$0xff]
        %v2434 = vld [vmem:[%s1990 + $0x81] sm:$0xff]
        %v2435 = vld [vmem:[%s1990 + $0x91] sm:$0xff]
        %v2436 = vld [vmem:[%s1990 + $0x99] sm:$0xff]
        %v2437 = vld [vmem:[%s1990 + $0xa9] sm:$0xff]
        %v2438 = vld [vmem:[%s1990 + $0xb1] sm:$0xff]
        %v2439 = vld [vmem:[%s1990 + $0xc1] sm:$0xff]
        %v2440 = vld [vmem:[%s1990 + $0xc9] sm:$0xff]
        %v2441 = vld [vmem:[%s1990 + $0xd9] sm:$0xff]
        %v2442 = vld [vmem:[%s1990 + $0xe1] sm:$0xff]
        %v2443 = vld [vmem:[%s1990 + $0xf1] sm:$0xff]
        %v2444 = vld [vmem:[%s1990 + $0xf9] sm:$0xff]
        %v2445 = vld [vmem:[%s1990 + $0x109] sm:$0xff]
        %v2446 = vld [vmem:[%s1990 + $0x111] sm:$0xff]
        %v2447 = vld [vmem:[%s1990 + $0x121] sm:$0xff]
        %v2448 = vld [vmem:[%s1990 + $0x129] sm:$0xff]
        %v2449 = vld [vmem:[%s1990 + $0x139] sm:$0xff]
        %v2450 = vld [vmem:[%s1990 + $0x141] sm:$0xff]
        %v2451 = vld [vmem:[%s1990 + $0x151] sm:$0xff]
        %v2452 = vld [vmem:[%s1990 + $0x159] sm:$0xff]
        %v2453 = vld [vmem:[%s1990 + $0x169] sm:$0xff]
        %v2454 = vld [vmem:[%s1990 + $0x171] sm:$0xff]
        %v2455 = vlaneseq
        %v2456 = vshrl.u32 %v2455, 7
        %v2457 = vsub.s32 4, %v2456
        %v2458 = vrot.slane %v1932, %v2457
        %v2459 = vmul.f32 %v2423, %v2458
        %v2460 = vmul.f32 %v2424, %v2458
        %v2461 = vmul.f32 %v2425, %v2458
        %v2462 = vmul.f32 %v2426, %v2458
        %v2463 = vmul.f32 %v2427, %v2458
        %v2464 = vmul.f32 %v2428, %v2458
        %v2465 = vmul.f32 %v2429, %v2458
        %v2466 = vmul.f32 %v2430, %v2458
        %v2467 = vmul.f32 %v2431, %v2458
        %v2468 = vmul.f32 %v2432, %v2458
        %v2469 = vmul.f32 %v2433, %v2458
        %v2470 = vmul.f32 %v2434, %v2458
        %v2471 = vmul.f32 %v2435, %v2458
        %v2472 = vmul.f32 %v2436, %v2458
        %v2473 = vmul.f32 %v2437, %v2458
        %v2474 = vmul.f32 %v2438, %v2458
        %v2475 = vmul.f32 %v2439, %v2458
        %v2476 = vmul.f32 %v2440, %v2458
        %v2477 = vmul.f32 %v2441, %v2458
        %v2478 = vmul.f32 %v2442, %v2458
        %v2479 = vmul.f32 %v2443, %v2458
        %v2480 = vmul.f32 %v2444, %v2458
        %v2481 = vmul.f32 %v2445, %v2458
        %v2482 = vmul.f32 %v2446, %v2458
        %v2483 = vmul.f32 %v2447, %v2458
        %v2484 = vmul.f32 %v2448, %v2458
        %v2485 = vmul.f32 %v2449, %v2458
        %v2486 = vmul.f32 %v2450, %v2458
        %v2487 = vmul.f32 %v2451, %v2458
        %v2488 = vmul.f32 %v2452, %v2458
        %v2489 = vmul.f32 %v2453, %v2458
        %v2490 = vmul.f32 %v2454, %v2458
        %v2491 = vadd.f32 %v2391, %v2459
        %v2492 = vadd.f32 %v2392, %v2460
        %v2493 = vadd.f32 %v2393, %v2461
        %v2494 = vadd.f32 %v2394, %v2462
        %v2495 = vadd.f32 %v2395, %v2463
        %v2496 = vadd.f32 %v2396, %v2464
        %v2497 = vadd.f32 %v2397, %v2465
        %v2498 = vadd.f32 %v2398, %v2466
        %v2499 = vadd.f32 %v2399, %v2467
        %v2500 = vadd.f32 %v2400, %v2468
        %v2501 = vadd.f32 %v2401, %v2469
        %v2502 = vadd.f32 %v2402, %v2470
        %v2503 = vadd.f32 %v2403, %v2471
        %v2504 = vadd.f32 %v2404, %v2472
        %v2505 = vadd.f32 %v2405, %v2473
        %v2506 = vadd.f32 %v2406, %v2474
        %v2507 = vadd.f32 %v2407, %v2475
        %v2508 = vadd.f32 %v2408, %v2476
        %v2509 = vadd.f32 %v2409, %v2477
        %v2510 = vadd.f32 %v2410, %v2478
        %v2511 = vadd.f32 %v2411, %v2479
        %v2512 = vadd.f32 %v2412, %v2480
        %v2513 = vadd.f32 %v2413, %v2481
        %v2514 = vadd.f32 %v2414, %v2482
        %v2515 = vadd.f32 %v2415, %v2483
        %v2516 = vadd.f32 %v2416, %v2484
        %v2517 = vadd.f32 %v2417, %v2485
        %v2518 = vadd.f32 %v2418, %v2486
        %v2519 = vadd.f32 %v2419, %v2487
        %v2520 = vadd.f32 %v2420, %v2488
        %v2521 = vadd.f32 %v2421, %v2489
        %v2522 = vadd.f32 %v2422, %v2490
        %v2523 = vld [vmem:[%s1990 + $0x2] sm:$0xff]
        %v2524 = vld [vmem:[%s1990 + $0xa] sm:$0xff]
        %v2525 = vld [vmem:[%s1990 + $0x1a] sm:$0xff]
        %v2526 = vld [vmem:[%s1990 + $0x22] sm:$0xff]
        %v2527 = vld [vmem:[%s1990 + $0x32] sm:$0xff]
        %v2528 = vld [vmem:[%s1990 + $0x3a] sm:$0xff]
        %v2529 = vld [vmem:[%s1990 + $0x4a] sm:$0xff]
        %v2530 = vld [vmem:[%s1990 + $0x52] sm:$0xff]
        %v2531 = vld [vmem:[%s1990 + $0x62] sm:$0xff]
        %v2532 = vld [vmem:[%s1990 + $0x6a] sm:$0xff]
        %v2533 = vld [vmem:[%s1990 + $0x7a] sm:$0xff]
        %v2534 = vld [vmem:[%s1990 + $0x82] sm:$0xff]
        %v2535 = vld [vmem:[%s1990 + $0x92] sm:$0xff]
        %v2536 = vld [vmem:[%s1990 + $0x9a] sm:$0xff]
        %v2537 = vld [vmem:[%s1990 + $0xaa] sm:$0xff]
        %v2538 = vld [vmem:[%s1990 + $0xb2] sm:$0xff]
        %v2539 = vld [vmem:[%s1990 + $0xc2] sm:$0xff]
        %v2540 = vld [vmem:[%s1990 + $0xca] sm:$0xff]
        %v2541 = vld [vmem:[%s1990 + $0xda] sm:$0xff]
        %v2542 = vld [vmem:[%s1990 + $0xe2] sm:$0xff]
        %v2543 = vld [vmem:[%s1990 + $0xf2] sm:$0xff]
        %v2544 = vld [vmem:[%s1990 + $0xfa] sm:$0xff]
        %v2545 = vld [vmem:[%s1990 + $0x10a] sm:$0xff]
        %v2546 = vld [vmem:[%s1990 + $0x112] sm:$0xff]
        %v2547 = vld [vmem:[%s1990 + $0x122] sm:$0xff]
        %v2548 = vld [vmem:[%s1990 + $0x12a] sm:$0xff]
        %v2549 = vld [vmem:[%s1990 + $0x13a] sm:$0xff]
        %v2550 = vld [vmem:[%s1990 + $0x142] sm:$0xff]
        %v2551 = vld [vmem:[%s1990 + $0x152] sm:$0xff]
        %v2552 = vld [vmem:[%s1990 + $0x15a] sm:$0xff]
        %v2553 = vld [vmem:[%s1990 + $0x16a] sm:$0xff]
        %v2554 = vld [vmem:[%s1990 + $0x172] sm:$0xff]
        %v2555 = vlaneseq
        %v2556 = vshrl.u32 %v2555, 7
        %v2557 = vsub.s32 5, %v2556
        %v2558 = vrot.slane %v1932, %v2557
        %v2559 = vmul.f32 %v2523, %v2558
        %v2560 = vmul.f32 %v2524, %v2558
        %v2561 = vmul.f32 %v2525, %v2558
        %v2562 = vmul.f32 %v2526, %v2558
        %v2563 = vmul.f32 %v2527, %v2558
        %v2564 = vmul.f32 %v2528, %v2558
        %v2565 = vmul.f32 %v2529, %v2558
        %v2566 = vmul.f32 %v2530, %v2558
        %v2567 = vmul.f32 %v2531, %v2558
        %v2568 = vmul.f32 %v2532, %v2558
        %v2569 = vmul.f32 %v2533, %v2558
        %v2570 = vmul.f32 %v2534, %v2558
        %v2571 = vmul.f32 %v2535, %v2558
        %v2572 = vmul.f32 %v2536, %v2558
        %v2573 = vmul.f32 %v2537, %v2558
        %v2574 = vmul.f32 %v2538, %v2558
        %v2575 = vmul.f32 %v2539, %v2558
        %v2576 = vmul.f32 %v2540, %v2558
        %v2577 = vmul.f32 %v2541, %v2558
        %v2578 = vmul.f32 %v2542, %v2558
        %v2579 = vmul.f32 %v2543, %v2558
        %v2580 = vmul.f32 %v2544, %v2558
        %v2581 = vmul.f32 %v2545, %v2558
        %v2582 = vmul.f32 %v2546, %v2558
        %v2583 = vmul.f32 %v2547, %v2558
        %v2584 = vmul.f32 %v2548, %v2558
        %v2585 = vmul.f32 %v2549, %v2558
        %v2586 = vmul.f32 %v2550, %v2558
        %v2587 = vmul.f32 %v2551, %v2558
        %v2588 = vmul.f32 %v2552, %v2558
        %v2589 = vmul.f32 %v2553, %v2558
        %v2590 = vmul.f32 %v2554, %v2558
        %v2591 = vadd.f32 %v2491, %v2559
        %v2592 = vadd.f32 %v2492, %v2560
        %v2593 = vadd.f32 %v2493, %v2561
        %v2594 = vadd.f32 %v2494, %v2562
        %v2595 = vadd.f32 %v2495, %v2563
        %v2596 = vadd.f32 %v2496, %v2564
        %v2597 = vadd.f32 %v2497, %v2565
        %v2598 = vadd.f32 %v2498, %v2566
        %v2599 = vadd.f32 %v2499, %v2567
        %v2600 = vadd.f32 %v2500, %v2568
        %v2601 = vadd.f32 %v2501, %v2569
        %v2602 = vadd.f32 %v2502, %v2570
        %v2603 = vadd.f32 %v2503, %v2571
        %v2604 = vadd.f32 %v2504, %v2572
        %v2605 = vadd.f32 %v2505, %v2573
        %v2606 = vadd.f32 %v2506, %v2574
        %v2607 = vadd.f32 %v2507, %v2575
        %v2608 = vadd.f32 %v2508, %v2576
        %v2609 = vadd.f32 %v2509, %v2577
        %v2610 = vadd.f32 %v2510, %v2578
        %v2611 = vadd.f32 %v2511, %v2579
        %v2612 = vadd.f32 %v2512, %v2580
        %v2613 = vadd.f32 %v2513, %v2581
        %v2614 = vadd.f32 %v2514, %v2582
        %v2615 = vadd.f32 %v2515, %v2583
        %v2616 = vadd.f32 %v2516, %v2584
        %v2617 = vadd.f32 %v2517, %v2585
        %v2618 = vadd.f32 %v2518, %v2586
        %v2619 = vadd.f32 %v2519, %v2587
        %v2620 = vadd.f32 %v2520, %v2588
        %v2621 = vadd.f32 %v2521, %v2589
        %v2622 = vadd.f32 %v2522, %v2590
        %s2623 = scalar_lea.vmem [#allocation3], 48
        %v2624 = vld [vmem:[%s2623] sm:$0xff]
        %v2625 = vld [vmem:[%s2623 + $0x8] sm:$0xff]
        %v2626 = vld [vmem:[%s2623 + $0x18] sm:$0xff]
        %v2627 = vld [vmem:[%s2623 + $0x20] sm:$0xff]
        %v2628 = vld [vmem:[%s2623 + $0x30] sm:$0xff]
        %v2629 = vld [vmem:[%s2623 + $0x38] sm:$0xff]
        %v2630 = vld [vmem:[%s2623 + $0x48] sm:$0xff]
        %v2631 = vld [vmem:[%s2623 + $0x50] sm:$0xff]
        %v2632 = vld [vmem:[%s2623 + $0x60] sm:$0xff]
        %v2633 = vld [vmem:[%s2623 + $0x68] sm:$0xff]
        %v2634 = vld [vmem:[%s2623 + $0x78] sm:$0xff]
        %v2635 = vld [vmem:[%s2623 + $0x80] sm:$0xff]
        %v2636 = vld [vmem:[%s2623 + $0x90] sm:$0xff]
        %v2637 = vld [vmem:[%s2623 + $0x98] sm:$0xff]
        %v2638 = vld [vmem:[%s2623 + $0xa8] sm:$0xff]
        %v2639 = vld [vmem:[%s2623 + $0xb0] sm:$0xff]
        %v2640 = vld [vmem:[%s2623 + $0xc0] sm:$0xff]
        %v2641 = vld [vmem:[%s2623 + $0xc8] sm:$0xff]
        %v2642 = vld [vmem:[%s2623 + $0xd8] sm:$0xff]
        %v2643 = vld [vmem:[%s2623 + $0xe0] sm:$0xff]
        %v2644 = vld [vmem:[%s2623 + $0xf0] sm:$0xff]
        %v2645 = vld [vmem:[%s2623 + $0xf8] sm:$0xff]
        %v2646 = vld [vmem:[%s2623 + $0x108] sm:$0xff]
        %v2647 = vld [vmem:[%s2623 + $0x110] sm:$0xff]
        %v2648 = vld [vmem:[%s2623 + $0x120] sm:$0xff]
        %v2649 = vld [vmem:[%s2623 + $0x128] sm:$0xff]
        %v2650 = vld [vmem:[%s2623 + $0x138] sm:$0xff]
        %v2651 = vld [vmem:[%s2623 + $0x140] sm:$0xff]
        %v2652 = vld [vmem:[%s2623 + $0x150] sm:$0xff]
        %v2653 = vld [vmem:[%s2623 + $0x158] sm:$0xff]
        %v2654 = vld [vmem:[%s2623 + $0x168] sm:$0xff]
        %v2655 = vld [vmem:[%s2623 + $0x170] sm:$0xff]
        %v2656 = vlaneseq
        %v2657 = vshrl.u32 %v2656, 7
        %v2658 = vsub.s32 6, %v2657
        %v2659 = vrot.slane %v1932, %v2658
        %v2660 = vmul.f32 %v2624, %v2659
        %v2661 = vmul.f32 %v2625, %v2659
        %v2662 = vmul.f32 %v2626, %v2659
        %v2663 = vmul.f32 %v2627, %v2659
        %v2664 = vmul.f32 %v2628, %v2659
        %v2665 = vmul.f32 %v2629, %v2659
        %v2666 = vmul.f32 %v2630, %v2659
        %v2667 = vmul.f32 %v2631, %v2659
        %v2668 = vmul.f32 %v2632, %v2659
        %v2669 = vmul.f32 %v2633, %v2659
        %v2670 = vmul.f32 %v2634, %v2659
        %v2671 = vmul.f32 %v2635, %v2659
        %v2672 = vmul.f32 %v2636, %v2659
        %v2673 = vmul.f32 %v2637, %v2659
        %v2674 = vmul.f32 %v2638, %v2659
        %v2675 = vmul.f32 %v2639, %v2659
        %v2676 = vmul.f32 %v2640, %v2659
        %v2677 = vmul.f32 %v2641, %v2659
        %v2678 = vmul.f32 %v2642, %v2659
        %v2679 = vmul.f32 %v2643, %v2659
        %v2680 = vmul.f32 %v2644, %v2659
        %v2681 = vmul.f32 %v2645, %v2659
        %v2682 = vmul.f32 %v2646, %v2659
        %v2683 = vmul.f32 %v2647, %v2659
        %v2684 = vmul.f32 %v2648, %v2659
        %v2685 = vmul.f32 %v2649, %v2659
        %v2686 = vmul.f32 %v2650, %v2659
        %v2687 = vmul.f32 %v2651, %v2659
        %v2688 = vmul.f32 %v2652, %v2659
        %v2689 = vmul.f32 %v2653, %v2659
        %v2690 = vmul.f32 %v2654, %v2659
        %v2691 = vmul.f32 %v2655, %v2659
        %v2692 = vadd.f32 %v2591, %v2660
        %v2693 = vadd.f32 %v2592, %v2661
        %v2694 = vadd.f32 %v2593, %v2662
        %v2695 = vadd.f32 %v2594, %v2663
        %v2696 = vadd.f32 %v2595, %v2664
        %v2697 = vadd.f32 %v2596, %v2665
        %v2698 = vadd.f32 %v2597, %v2666
        %v2699 = vadd.f32 %v2598, %v2667
        %v2700 = vadd.f32 %v2599, %v2668
        %v2701 = vadd.f32 %v2600, %v2669
        %v2702 = vadd.f32 %v2601, %v2670
        %v2703 = vadd.f32 %v2602, %v2671
        %v2704 = vadd.f32 %v2603, %v2672
        %v2705 = vadd.f32 %v2604, %v2673
        %v2706 = vadd.f32 %v2605, %v2674
        %v2707 = vadd.f32 %v2606, %v2675
        %v2708 = vadd.f32 %v2607, %v2676
        %v2709 = vadd.f32 %v2608, %v2677
        %v2710 = vadd.f32 %v2609, %v2678
        %v2711 = vadd.f32 %v2610, %v2679
        %v2712 = vadd.f32 %v2611, %v2680
        %v2713 = vadd.f32 %v2612, %v2681
        %v2714 = vadd.f32 %v2613, %v2682
        %v2715 = vadd.f32 %v2614, %v2683
        %v2716 = vadd.f32 %v2615, %v2684
        %v2717 = vadd.f32 %v2616, %v2685
        %v2718 = vadd.f32 %v2617, %v2686
        %v2719 = vadd.f32 %v2618, %v2687
        %v2720 = vadd.f32 %v2619, %v2688
        %v2721 = vadd.f32 %v2620, %v2689
        %v2722 = vadd.f32 %v2621, %v2690
        %v2723 = vadd.f32 %v2622, %v2691
        %v2724 = vld [vmem:[%s2623 + $0x1] sm:$0xff]
        %v2725 = vld [vmem:[%s2623 + $0x9] sm:$0xff]
        %v2726 = vld [vmem:[%s2623 + $0x19] sm:$0xff]
        %v2727 = vld [vmem:[%s2623 + $0x21] sm:$0xff]
        %v2728 = vld [vmem:[%s2623 + $0x31] sm:$0xff]
        %v2729 = vld [vmem:[%s2623 + $0x39] sm:$0xff]
        %v2730 = vld [vmem:[%s2623 + $0x49] sm:$0xff]
        %v2731 = vld [vmem:[%s2623 + $0x51] sm:$0xff]
        %v2732 = vld [vmem:[%s2623 + $0x61] sm:$0xff]
        %v2733 = vld [vmem:[%s2623 + $0x69] sm:$0xff]
        %v2734 = vld [vmem:[%s2623 + $0x79] sm:$0xff]
        %v2735 = vld [vmem:[%s2623 + $0x81] sm:$0xff]
        %v2736 = vld [vmem:[%s2623 + $0x91] sm:$0xff]
        %v2737 = vld [vmem:[%s2623 + $0x99] sm:$0xff]
        %v2738 = vld [vmem:[%s2623 + $0xa9] sm:$0xff]
        %v2739 = vld [vmem:[%s2623 + $0xb1] sm:$0xff]
        %v2740 = vld [vmem:[%s2623 + $0xc1] sm:$0xff]
        %v2741 = vld [vmem:[%s2623 + $0xc9] sm:$0xff]
        %v2742 = vld [vmem:[%s2623 + $0xd9] sm:$0xff]
        %v2743 = vld [vmem:[%s2623 + $0xe1] sm:$0xff]
        %v2744 = vld [vmem:[%s2623 + $0xf1] sm:$0xff]
        %v2745 = vld [vmem:[%s2623 + $0xf9] sm:$0xff]
        %v2746 = vld [vmem:[%s2623 + $0x109] sm:$0xff]
        %v2747 = vld [vmem:[%s2623 + $0x111] sm:$0xff]
        %v2748 = vld [vmem:[%s2623 + $0x121] sm:$0xff]
        %v2749 = vld [vmem:[%s2623 + $0x129] sm:$0xff]
        %v2750 = vld [vmem:[%s2623 + $0x139] sm:$0xff]
        %v2751 = vld [vmem:[%s2623 + $0x141] sm:$0xff]
        %v2752 = vld [vmem:[%s2623 + $0x151] sm:$0xff]
        %v2753 = vld [vmem:[%s2623 + $0x159] sm:$0xff]
        %v2754 = vld [vmem:[%s2623 + $0x169] sm:$0xff]
        %v2755 = vld [vmem:[%s2623 + $0x171] sm:$0xff]
        %v2756 = vlaneseq
        %v2757 = vshrl.u32 %v2756, 7
        %v2758 = vsub.s32 7, %v2757
        %v2759 = vrot.slane %v1932, %v2758
        %v2760 = vmul.f32 %v2724, %v2759
        %v2761 = vmul.f32 %v2725, %v2759
        %v2762 = vmul.f32 %v2726, %v2759
        %v2763 = vmul.f32 %v2727, %v2759
        %v2764 = vmul.f32 %v2728, %v2759
        %v2765 = vmul.f32 %v2729, %v2759
        %v2766 = vmul.f32 %v2730, %v2759
        %v2767 = vmul.f32 %v2731, %v2759
        %v2768 = vmul.f32 %v2732, %v2759
        %v2769 = vmul.f32 %v2733, %v2759
        %v2770 = vmul.f32 %v2734, %v2759
        %v2771 = vmul.f32 %v2735, %v2759
        %v2772 = vmul.f32 %v2736, %v2759
        %v2773 = vmul.f32 %v2737, %v2759
        %v2774 = vmul.f32 %v2738, %v2759
        %v2775 = vmul.f32 %v2739, %v2759
        %v2776 = vmul.f32 %v2740, %v2759
        %v2777 = vmul.f32 %v2741, %v2759
        %v2778 = vmul.f32 %v2742, %v2759
        %v2779 = vmul.f32 %v2743, %v2759
        %v2780 = vmul.f32 %v2744, %v2759
        %v2781 = vmul.f32 %v2745, %v2759
        %v2782 = vmul.f32 %v2746, %v2759
        %v2783 = vmul.f32 %v2747, %v2759
        %v2784 = vmul.f32 %v2748, %v2759
        %v2785 = vmul.f32 %v2749, %v2759
        %v2786 = vmul.f32 %v2750, %v2759
        %v2787 = vmul.f32 %v2751, %v2759
        %v2788 = vmul.f32 %v2752, %v2759
        %v2789 = vmul.f32 %v2753, %v2759
        %v2790 = vmul.f32 %v2754, %v2759
        %v2791 = vmul.f32 %v2755, %v2759
        %v2792 = vadd.f32 %v2692, %v2760
        %v2793 = vadd.f32 %v2693, %v2761
        %v2794 = vadd.f32 %v2694, %v2762
        %v2795 = vadd.f32 %v2695, %v2763
        %v2796 = vadd.f32 %v2696, %v2764
        %v2797 = vadd.f32 %v2697, %v2765
        %v2798 = vadd.f32 %v2698, %v2766
        %v2799 = vadd.f32 %v2699, %v2767
        %v2800 = vadd.f32 %v2700, %v2768
        %v2801 = vadd.f32 %v2701, %v2769
        %v2802 = vadd.f32 %v2702, %v2770
        %v2803 = vadd.f32 %v2703, %v2771
        %v2804 = vadd.f32 %v2704, %v2772
        %v2805 = vadd.f32 %v2705, %v2773
        %v2806 = vadd.f32 %v2706, %v2774
        %v2807 = vadd.f32 %v2707, %v2775
        %v2808 = vadd.f32 %v2708, %v2776
        %v2809 = vadd.f32 %v2709, %v2777
        %v2810 = vadd.f32 %v2710, %v2778
        %v2811 = vadd.f32 %v2711, %v2779
        %v2812 = vadd.f32 %v2712, %v2780
        %v2813 = vadd.f32 %v2713, %v2781
        %v2814 = vadd.f32 %v2714, %v2782
        %v2815 = vadd.f32 %v2715, %v2783
        %v2816 = vadd.f32 %v2716, %v2784
        %v2817 = vadd.f32 %v2717, %v2785
        %v2818 = vadd.f32 %v2718, %v2786
        %v2819 = vadd.f32 %v2719, %v2787
        %v2820 = vadd.f32 %v2720, %v2788
        %v2821 = vadd.f32 %v2721, %v2789
        %v2822 = vadd.f32 %v2722, %v2790
        %v2823 = vadd.f32 %v2723, %v2791
        %v2824 = vld [vmem:[%s2623 + $0x2] sm:$0xff]
        %v2825 = vld [vmem:[%s2623 + $0xa] sm:$0xff]
        %v2826 = vld [vmem:[%s2623 + $0x1a] sm:$0xff]
        %v2827 = vld [vmem:[%s2623 + $0x22] sm:$0xff]
        %v2828 = vld [vmem:[%s2623 + $0x32] sm:$0xff]
        %v2829 = vld [vmem:[%s2623 + $0x3a] sm:$0xff]
        %v2830 = vld [vmem:[%s2623 + $0x4a] sm:$0xff]
        %v2831 = vld [vmem:[%s2623 + $0x52] sm:$0xff]
        %v2832 = vld [vmem:[%s2623 + $0x62] sm:$0xff]
        %v2833 = vld [vmem:[%s2623 + $0x6a] sm:$0xff]
        %v2834 = vld [vmem:[%s2623 + $0x7a] sm:$0xff]
        %v2835 = vld [vmem:[%s2623 + $0x82] sm:$0xff]
        %v2836 = vld [vmem:[%s2623 + $0x92] sm:$0xff]
        %v2837 = vld [vmem:[%s2623 + $0x9a] sm:$0xff]
        %v2838 = vld [vmem:[%s2623 + $0xaa] sm:$0xff]
        %v2839 = vld [vmem:[%s2623 + $0xb2] sm:$0xff]
        %v2840 = vld [vmem:[%s2623 + $0xc2] sm:$0xff]
        %v2841 = vld [vmem:[%s2623 + $0xca] sm:$0xff]
        %v2842 = vld [vmem:[%s2623 + $0xda] sm:$0xff]
        %v2843 = vld [vmem:[%s2623 + $0xe2] sm:$0xff]
        %v2844 = vld [vmem:[%s2623 + $0xf2] sm:$0xff]
        %v2845 = vld [vmem:[%s2623 + $0xfa] sm:$0xff]
        %v2846 = vld [vmem:[%s2623 + $0x10a] sm:$0xff]
        %v2847 = vld [vmem:[%s2623 + $0x112] sm:$0xff]
        %v2848 = vld [vmem:[%s2623 + $0x122] sm:$0xff]
        %v2849 = vld [vmem:[%s2623 + $0x12a] sm:$0xff]
        %v2850 = vld [vmem:[%s2623 + $0x13a] sm:$0xff]
        %v2851 = vld [vmem:[%s2623 + $0x142] sm:$0xff]
        %v2852 = vld [vmem:[%s2623 + $0x152] sm:$0xff]
        %v2853 = vld [vmem:[%s2623 + $0x15a] sm:$0xff]
        %v2854 = vld [vmem:[%s2623 + $0x16a] sm:$0xff]
        %v2855 = vld [vmem:[%s2623 + $0x172] sm:$0xff]
        %v2856 = vlaneseq
        %v2857 = vshrl.u32 %v2856, 7
        %v2858 = vsub.s32 0, %v2857
        %v2859 = vrot.slane %v1933, %v2858
        %v2860 = vmul.f32 %v2824, %v2859
        %v2861 = vmul.f32 %v2825, %v2859
        %v2862 = vmul.f32 %v2826, %v2859
        %v2863 = vmul.f32 %v2827, %v2859
        %v2864 = vmul.f32 %v2828, %v2859
        %v2865 = vmul.f32 %v2829, %v2859
        %v2866 = vmul.f32 %v2830, %v2859
        %v2867 = vmul.f32 %v2831, %v2859
        %v2868 = vmul.f32 %v2832, %v2859
        %v2869 = vmul.f32 %v2833, %v2859
        %v2870 = vmul.f32 %v2834, %v2859
        %v2871 = vmul.f32 %v2835, %v2859
        %v2872 = vmul.f32 %v2836, %v2859
        %v2873 = vmul.f32 %v2837, %v2859
        %v2874 = vmul.f32 %v2838, %v2859
        %v2875 = vmul.f32 %v2839, %v2859
        %v2876 = vmul.f32 %v2840, %v2859
        %v2877 = vmul.f32 %v2841, %v2859
        %v2878 = vmul.f32 %v2842, %v2859
        %v2879 = vmul.f32 %v2843, %v2859
        %v2880 = vmul.f32 %v2844, %v2859
        %v2881 = vmul.f32 %v2845, %v2859
        %v2882 = vmul.f32 %v2846, %v2859
        %v2883 = vmul.f32 %v2847, %v2859
        %v2884 = vmul.f32 %v2848, %v2859
        %v2885 = vmul.f32 %v2849, %v2859
        %v2886 = vmul.f32 %v2850, %v2859
        %v2887 = vmul.f32 %v2851, %v2859
        %v2888 = vmul.f32 %v2852, %v2859
        %v2889 = vmul.f32 %v2853, %v2859
        %v2890 = vmul.f32 %v2854, %v2859
        %v2891 = vmul.f32 %v2855, %v2859
        %v2892 = vadd.f32 %v2792, %v2860
        %v2893 = vadd.f32 %v2793, %v2861
        %v2894 = vadd.f32 %v2794, %v2862
        %v2895 = vadd.f32 %v2795, %v2863
        %v2896 = vadd.f32 %v2796, %v2864
        %v2897 = vadd.f32 %v2797, %v2865
        %v2898 = vadd.f32 %v2798, %v2866
        %v2899 = vadd.f32 %v2799, %v2867
        %v2900 = vadd.f32 %v2800, %v2868
        %v2901 = vadd.f32 %v2801, %v2869
        %v2902 = vadd.f32 %v2802, %v2870
        %v2903 = vadd.f32 %v2803, %v2871
        %v2904 = vadd.f32 %v2804, %v2872
        %v2905 = vadd.f32 %v2805, %v2873
        %v2906 = vadd.f32 %v2806, %v2874
        %v2907 = vadd.f32 %v2807, %v2875
        %v2908 = vadd.f32 %v2808, %v2876
        %v2909 = vadd.f32 %v2809, %v2877
        %v2910 = vadd.f32 %v2810, %v2878
        %v2911 = vadd.f32 %v2811, %v2879
        %v2912 = vadd.f32 %v2812, %v2880
        %v2913 = vadd.f32 %v2813, %v2881
        %v2914 = vadd.f32 %v2814, %v2882
        %v2915 = vadd.f32 %v2815, %v2883
        %v2916 = vadd.f32 %v2816, %v2884
        %v2917 = vadd.f32 %v2817, %v2885
        %v2918 = vadd.f32 %v2818, %v2886
        %v2919 = vadd.f32 %v2819, %v2887
        %v2920 = vadd.f32 %v2820, %v2888
        %v2921 = vadd.f32 %v2821, %v2889
        %v2922 = vadd.f32 %v2822, %v2890
        %v2923 = vadd.f32 %v2823, %v2891
        %v2925 = vlaneseq
        %v2926 = vshrl.u32 %v2925, 7
        %v2927 = vsub.s32 0, %v2926
        %v2928 = vrot.slane %v1935, %v2927
        %v2930 = vadd.f32 %v2892, %v2928
        %v2931 = vadd.f32 %v2893, %v2928
        %v2932 = vadd.f32 %v2894, %v2928
        %v2933 = vadd.f32 %v2895, %v2928
        %v2934 = vadd.f32 %v2896, %v2928
        %v2935 = vadd.f32 %v2897, %v2928
        %v2936 = vadd.f32 %v2898, %v2928
        %v2937 = vadd.f32 %v2899, %v2928
        %v2938 = vadd.f32 %v2900, %v2928
        %v2939 = vadd.f32 %v2901, %v2928
        %v2940 = vadd.f32 %v2902, %v2928
        %v2941 = vadd.f32 %v2903, %v2928
        %v2942 = vadd.f32 %v2904, %v2928
        %v2943 = vadd.f32 %v2905, %v2928
        %v2944 = vadd.f32 %v2906, %v2928
        %v2945 = vadd.f32 %v2907, %v2928
        %v2946 = vadd.f32 %v2908, %v2928
        %v2947 = vadd.f32 %v2909, %v2928
        %v2948 = vadd.f32 %v2910, %v2928
        %v2949 = vadd.f32 %v2911, %v2928
        %v2950 = vadd.f32 %v2912, %v2928
        %v2951 = vadd.f32 %v2913, %v2928
        %v2952 = vadd.f32 %v2914, %v2928
        %v2953 = vadd.f32 %v2915, %v2928
        %v2954 = vadd.f32 %v2916, %v2928
        %v2955 = vadd.f32 %v2917, %v2928
        %v2956 = vadd.f32 %v2918, %v2928
        %v2957 = vadd.f32 %v2919, %v2928
        %v2958 = vadd.f32 %v2920, %v2928
        %v2959 = vadd.f32 %v2921, %v2928
        %v2960 = vadd.f32 %v2922, %v2928
        %v2961 = vadd.f32 %v2923, %v2928
        %v2962 = vmul.f32 %v2930, %v2930
        %v2963 = vmul.f32 %v2931, %v2931
        %v2964 = vmul.f32 %v2932, %v2932
        %v2965 = vmul.f32 %v2933, %v2933
        %v2966 = vmul.f32 %v2934, %v2934
        %v2967 = vmul.f32 %v2935, %v2935
        %v2968 = vmul.f32 %v2936, %v2936
        %v2969 = vmul.f32 %v2937, %v2937
        %v2970 = vmul.f32 %v2938, %v2938
        %v2971 = vmul.f32 %v2939, %v2939
        %v2972 = vmul.f32 %v2940, %v2940
        %v2973 = vmul.f32 %v2941, %v2941
        %v2974 = vmul.f32 %v2942, %v2942
        %v2975 = vmul.f32 %v2943, %v2943
        %v2976 = vmul.f32 %v2944, %v2944
        %v2977 = vmul.f32 %v2945, %v2945
        %v2978 = vmul.f32 %v2946, %v2946
        %v2979 = vmul.f32 %v2947, %v2947
        %v2980 = vmul.f32 %v2948, %v2948
        %v2981 = vmul.f32 %v2949, %v2949
        %v2982 = vmul.f32 %v2950, %v2950
        %v2983 = vmul.f32 %v2951, %v2951
        %v2984 = vmul.f32 %v2952, %v2952
        %v2985 = vmul.f32 %v2953, %v2953
        %v2986 = vmul.f32 %v2954, %v2954
        %v2987 = vmul.f32 %v2955, %v2955
        %v2988 = vmul.f32 %v2956, %v2956
        %v2989 = vmul.f32 %v2957, %v2957
        %v2990 = vmul.f32 %v2958, %v2958
        %v2991 = vmul.f32 %v2959, %v2959
        %v2992 = vmul.f32 %v2960, %v2960
        %v2993 = vmul.f32 %v2961, %v2961
        %v2994 = vmul.f32 %v2930, %v2962
        %v2995 = vmul.f32 %v2931, %v2963
        %v2996 = vmul.f32 %v2932, %v2964
        %v2997 = vmul.f32 %v2933, %v2965
        %v2998 = vmul.f32 %v2934, %v2966
        %v2999 = vmul.f32 %v2935, %v2967
        %v3000 = vmul.f32 %v2936, %v2968
        %v3001 = vmul.f32 %v2937, %v2969
        %v3002 = vmul.f32 %v2938, %v2970
        %v3003 = vmul.f32 %v2939, %v2971
        %v3004 = vmul.f32 %v2940, %v2972
        %v3005 = vmul.f32 %v2941, %v2973
        %v3006 = vmul.f32 %v2942, %v2974
        %v3007 = vmul.f32 %v2943, %v2975
        %v3008 = vmul.f32 %v2944, %v2976
        %v3009 = vmul.f32 %v2945, %v2977
        %v3010 = vmul.f32 %v2946, %v2978
        %v3011 = vmul.f32 %v2947, %v2979
        %v3012 = vmul.f32 %v2948, %v2980
        %v3013 = vmul.f32 %v2949, %v2981
        %v3014 = vmul.f32 %v2950, %v2982
        %v3015 = vmul.f32 %v2951, %v2983
        %v3016 = vmul.f32 %v2952, %v2984
        %v3017 = vmul.f32 %v2953, %v2985
        %v3018 = vmul.f32 %v2954, %v2986
        %v3019 = vmul.f32 %v2955, %v2987
        %v3020 = vmul.f32 %v2956, %v2988
        %v3021 = vmul.f32 %v2957, %v2989
        %v3022 = vmul.f32 %v2958, %v2990
        %v3023 = vmul.f32 %v2959, %v2991
        %v3024 = vmul.f32 %v2960, %v2992
        %v3025 = vmul.f32 %v2961, %v2993
        %v3026 = vmul.f32 %v2994, 0.044715
        %v3027 = vmul.f32 %v2995, 0.044715
        %v3028 = vmul.f32 %v2996, 0.044715
        %v3029 = vmul.f32 %v2997, 0.044715
        %v3030 = vmul.f32 %v2998, 0.044715
        %v3031 = vmul.f32 %v2999, 0.044715
        %v3032 = vmul.f32 %v3000, 0.044715
        %v3033 = vmul.f32 %v3001, 0.044715
        %v3034 = vmul.f32 %v3002, 0.044715
        %v3035 = vmul.f32 %v3003, 0.044715
        %v3036 = vmul.f32 %v3004, 0.044715
        %v3037 = vmul.f32 %v3005, 0.044715
        %v3038 = vmul.f32 %v3006, 0.044715
        %v3039 = vmul.f32 %v3007, 0.044715
        %v3040 = vmul.f32 %v3008, 0.044715
        %v3041 = vmul.f32 %v3009, 0.044715
        %v3042 = vmul.f32 %v3010, 0.044715
        %v3043 = vmul.f32 %v3011, 0.044715
        %v3044 = vmul.f32 %v3012, 0.044715
        %v3045 = vmul.f32 %v3013, 0.044715
        %v3046 = vmul.f32 %v3014, 0.044715
        %v3047 = vmul.f32 %v3015, 0.044715
        %v3048 = vmul.f32 %v3016, 0.044715
        %v3049 = vmul.f32 %v3017, 0.044715
        %v3050 = vmul.f32 %v3018, 0.044715
        %v3051 = vmul.f32 %v3019, 0.044715
        %v3052 = vmul.f32 %v3020, 0.044715
        %v3053 = vmul.f32 %v3021, 0.044715
        %v3054 = vmul.f32 %v3022, 0.044715
        %v3055 = vmul.f32 %v3023, 0.044715
        %v3056 = vmul.f32 %v3024, 0.044715
        %v3057 = vmul.f32 %v3025, 0.044715
        %v3058 = vadd.f32 %v2930, %v3026
        %v3059 = vadd.f32 %v2931, %v3027
        %v3060 = vadd.f32 %v2932, %v3028
        %v3061 = vadd.f32 %v2933, %v3029
        %v3062 = vadd.f32 %v2934, %v3030
        %v3063 = vadd.f32 %v2935, %v3031
        %v3064 = vadd.f32 %v2936, %v3032
        %v3065 = vadd.f32 %v2937, %v3033
        %v3066 = vadd.f32 %v2938, %v3034
        %v3067 = vadd.f32 %v2939, %v3035
        %v3068 = vadd.f32 %v2940, %v3036
        %v3069 = vadd.f32 %v2941, %v3037
        %v3070 = vadd.f32 %v2942, %v3038
        %v3071 = vadd.f32 %v2943, %v3039
        %v3072 = vadd.f32 %v2944, %v3040
        %v3073 = vadd.f32 %v2945, %v3041
        %v3074 = vadd.f32 %v2946, %v3042
        %v3075 = vadd.f32 %v2947, %v3043
        %v3076 = vadd.f32 %v2948, %v3044
        %v3077 = vadd.f32 %v2949, %v3045
        %v3078 = vadd.f32 %v2950, %v3046
        %v3079 = vadd.f32 %v2951, %v3047
        %v3080 = vadd.f32 %v2952, %v3048
        %v3081 = vadd.f32 %v2953, %v3049
        %v3082 = vadd.f32 %v2954, %v3050
        %v3083 = vadd.f32 %v2955, %v3051
        %v3084 = vadd.f32 %v2956, %v3052
        %v3085 = vadd.f32 %v2957, %v3053
        %v3086 = vadd.f32 %v2958, %v3054
        %v3087 = vadd.f32 %v2959, %v3055
        %v3088 = vadd.f32 %v2960, %v3056
        %v3089 = vadd.f32 %v2961, %v3057
        %v3090 = vmul.f32 %v3058, 0.7978846
        %v3091 = vmul.f32 %v3059, 0.7978846
        %v3092 = vmul.f32 %v3060, 0.7978846
        %v3093 = vmul.f32 %v3061, 0.7978846
        %v3094 = vmul.f32 %v3062, 0.7978846
        %v3095 = vmul.f32 %v3063, 0.7978846
        %v3096 = vmul.f32 %v3064, 0.7978846
        %v3097 = vmul.f32 %v3065, 0.7978846
        %v3098 = vmul.f32 %v3066, 0.7978846
        %v3099 = vmul.f32 %v3067, 0.7978846
        %v3100 = vmul.f32 %v3068, 0.7978846
        %v3101 = vmul.f32 %v3069, 0.7978846
        %v3102 = vmul.f32 %v3070, 0.7978846
        %v3103 = vmul.f32 %v3071, 0.7978846
        %v3104 = vmul.f32 %v3072, 0.7978846
        %v3105 = vmul.f32 %v3073, 0.7978846
        %v3106 = vmul.f32 %v3074, 0.7978846
        %v3107 = vmul.f32 %v3075, 0.7978846
        %v3108 = vmul.f32 %v3076, 0.7978846
        %v3109 = vmul.f32 %v3077, 0.7978846
        %v3110 = vmul.f32 %v3078, 0.7978846
        %v3111 = vmul.f32 %v3079, 0.7978846
        %v3112 = vmul.f32 %v3080, 0.7978846
        %v3113 = vmul.f32 %v3081, 0.7978846
        %v3114 = vmul.f32 %v3082, 0.7978846
        %v3115 = vmul.f32 %v3083, 0.7978846
        %v3116 = vmul.f32 %v3084, 0.7978846
        %v3117 = vmul.f32 %v3085, 0.7978846
        %v3118 = vmul.f32 %v3086, 0.7978846
        %v3119 = vmul.f32 %v3087, 0.7978846
        %v3120 = vmul.f32 %v3088, 0.7978846
        %v3121 = vmul.f32 %v3089, 0.7978846
        %v3122 = vtanh.pop %v3090
        %v3123 = vtanh.pop %v3091
        %v3124 = vtanh.pop %v3092
        %v3125 = vtanh.pop %v3093
        %v3126 = vtanh.pop %v3094
        %v3127 = vtanh.pop %v3095
        %v3128 = vtanh.pop %v3096
        %v3129 = vtanh.pop %v3097
        %v3130 = vtanh.pop %v3098
        %v3131 = vtanh.pop %v3099
        %v3132 = vtanh.pop %v3100
        %v3133 = vtanh.pop %v3101
        %v3134 = vtanh.pop %v3102
        %v3135 = vtanh.pop %v3103
        %v3136 = vtanh.pop %v3104
        %v3137 = vtanh.pop %v3105
        %v3138 = vtanh.pop %v3106
        %v3139 = vtanh.pop %v3107
        %v3140 = vtanh.pop %v3108
        %v3141 = vtanh.pop %v3109
        %v3142 = vtanh.pop %v3110
        %v3143 = vtanh.pop %v3111
        %v3144 = vtanh.pop %v3112
        %v3145 = vtanh.pop %v3113
        %v3146 = vtanh.pop %v3114
        %v3147 = vtanh.pop %v3115
        %v3148 = vtanh.pop %v3116
        %v3149 = vtanh.pop %v3117
        %v3150 = vtanh.pop %v3118
        %v3151 = vtanh.pop %v3119
        %v3152 = vtanh.pop %v3120
        %v3153 = vtanh.pop %v3121
        %v3154 = vadd.f32 %v3122, 1.0
        %v3155 = vadd.f32 %v3123, 1.0
        %v3156 = vadd.f32 %v3124, 1.0
        %v3157 = vadd.f32 %v3125, 1.0
        %v3158 = vadd.f32 %v3126, 1.0
        %v3159 = vadd.f32 %v3127, 1.0
        %v3160 = vadd.f32 %v3128, 1.0
        %v3161 = vadd.f32 %v3129, 1.0
        %v3162 = vadd.f32 %v3130, 1.0
        %v3163 = vadd.f32 %v3131, 1.0
        %v3164 = vadd.f32 %v3132, 1.0
        %v3165 = vadd.f32 %v3133, 1.0
        %v3166 = vadd.f32 %v3134, 1.0
        %v3167 = vadd.f32 %v3135, 1.0
        %v3168 = vadd.f32 %v3136, 1.0
        %v3169 = vadd.f32 %v3137, 1.0
        %v3170 = vadd.f32 %v3138, 1.0
        %v3171 = vadd.f32 %v3139, 1.0
        %v3172 = vadd.f32 %v3140, 1.0
        %v3173 = vadd.f32 %v3141, 1.0
        %v3174 = vadd.f32 %v3142, 1.0
        %v3175 = vadd.f32 %v3143, 1.0
        %v3176 = vadd.f32 %v3144, 1.0
        %v3177 = vadd.f32 %v3145, 1.0
        %v3178 = vadd.f32 %v3146, 1.0
        %v3179 = vadd.f32 %v3147, 1.0
        %v3180 = vadd.f32 %v3148, 1.0
        %v3181 = vadd.f32 %v3149, 1.0
        %v3182 = vadd.f32 %v3150, 1.0
        %v3183 = vadd.f32 %v3151, 1.0
        %v3184 = vadd.f32 %v3152, 1.0
        %v3185 = vadd.f32 %v3153, 1.0
        %v3186 = vmul.f32 %v3154, 0.5
        %v3187 = vmul.f32 %v3155, 0.5
        %v3188 = vmul.f32 %v3156, 0.5
        %v3189 = vmul.f32 %v3157, 0.5
        %v3190 = vmul.f32 %v3158, 0.5
        %v3191 = vmul.f32 %v3159, 0.5
        %v3192 = vmul.f32 %v3160, 0.5
        %v3193 = vmul.f32 %v3161, 0.5
        %v3194 = vmul.f32 %v3162, 0.5
        %v3195 = vmul.f32 %v3163, 0.5
        %v3196 = vmul.f32 %v3164, 0.5
        %v3197 = vmul.f32 %v3165, 0.5
        %v3198 = vmul.f32 %v3166, 0.5
        %v3199 = vmul.f32 %v3167, 0.5
        %v3200 = vmul.f32 %v3168, 0.5
        %v3201 = vmul.f32 %v3169, 0.5
        %v3202 = vmul.f32 %v3170, 0.5
        %v3203 = vmul.f32 %v3171, 0.5
        %v3204 = vmul.f32 %v3172, 0.5
        %v3205 = vmul.f32 %v3173, 0.5
        %v3206 = vmul.f32 %v3174, 0.5
        %v3207 = vmul.f32 %v3175, 0.5
        %v3208 = vmul.f32 %v3176, 0.5
        %v3209 = vmul.f32 %v3177, 0.5
        %v3210 = vmul.f32 %v3178, 0.5
        %v3211 = vmul.f32 %v3179, 0.5
        %v3212 = vmul.f32 %v3180, 0.5
        %v3213 = vmul.f32 %v3181, 0.5
        %v3214 = vmul.f32 %v3182, 0.5
        %v3215 = vmul.f32 %v3183, 0.5
        %v3216 = vmul.f32 %v3184, 0.5
        %v3217 = vmul.f32 %v3185, 0.5
        %v3218 = vmul.f32 %v2930, %v3186
        %v3219 = vmul.f32 %v2931, %v3187
        %v3220 = vmul.f32 %v2932, %v3188
        %v3221 = vmul.f32 %v2933, %v3189
        %v3222 = vmul.f32 %v2934, %v3190
        %v3223 = vmul.f32 %v2935, %v3191
        %v3224 = vmul.f32 %v2936, %v3192
        %v3225 = vmul.f32 %v2937, %v3193
        %v3226 = vmul.f32 %v2938, %v3194
        %v3227 = vmul.f32 %v2939, %v3195
        %v3228 = vmul.f32 %v2940, %v3196
        %v3229 = vmul.f32 %v2941, %v3197
        %v3230 = vmul.f32 %v2942, %v3198
        %v3231 = vmul.f32 %v2943, %v3199
        %v3232 = vmul.f32 %v2944, %v3200
        %v3233 = vmul.f32 %v2945, %v3201
        %v3234 = vmul.f32 %v2946, %v3202
        %v3235 = vmul.f32 %v2947, %v3203
        %v3236 = vmul.f32 %v2948, %v3204
        %v3237 = vmul.f32 %v2949, %v3205
        %v3238 = vmul.f32 %v2950, %v3206
        %v3239 = vmul.f32 %v2951, %v3207
        %v3240 = vmul.f32 %v2952, %v3208
        %v3241 = vmul.f32 %v2953, %v3209
        %v3242 = vmul.f32 %v2954, %v3210
        %v3243 = vmul.f32 %v2955, %v3211
        %v3244 = vmul.f32 %v2956, %v3212
        %v3245 = vmul.f32 %v2957, %v3213
        %v3246 = vmul.f32 %v2958, %v3214
        %v3247 = vmul.f32 %v2959, %v3215
        %v3248 = vmul.f32 %v2960, %v3216
        %v3249 = vmul.f32 %v2961, %v3217
        %v3250 = vmul.f32 %v3218, %v1899
        %v3251 = vmul.f32 %v3219, %v1900
        %v3252 = vmul.f32 %v3220, %v1901
        %v3253 = vmul.f32 %v3221, %v1902
        %v3254 = vmul.f32 %v3222, %v1903
        %v3255 = vmul.f32 %v3223, %v1904
        %v3256 = vmul.f32 %v3224, %v1905
        %v3257 = vmul.f32 %v3225, %v1906
        %v3258 = vmul.f32 %v3226, %v1907
        %v3259 = vmul.f32 %v3227, %v1908
        %v3260 = vmul.f32 %v3228, %v1909
        %v3261 = vmul.f32 %v3229, %v1910
        %v3262 = vmul.f32 %v3230, %v1911
        %v3263 = vmul.f32 %v3231, %v1912
        %v3264 = vmul.f32 %v3232, %v1913
        %v3265 = vmul.f32 %v3233, %v1914
        %v3266 = vmul.f32 %v3234, %v1915
        %v3267 = vmul.f32 %v3235, %v1916
        %v3268 = vmul.f32 %v3236, %v1917
        %v3269 = vmul.f32 %v3237, %v1918
        %v3270 = vmul.f32 %v3238, %v1919
        %v3271 = vmul.f32 %v3239, %v1920
        %v3272 = vmul.f32 %v3240, %v1921
        %v3273 = vmul.f32 %v3241, %v1922
        %v3274 = vmul.f32 %v3242, %v1923
        %v3275 = vmul.f32 %v3243, %v1924
        %v3276 = vmul.f32 %v3244, %v1925
        %v3277 = vmul.f32 %v3245, %v1926
        %v3278 = vmul.f32 %v3246, %v1927
        %v3279 = vmul.f32 %v3247, %v1928
        %v3280 = vmul.f32 %v3248, %v1929
        %v3281 = vmul.f32 %v3249, %v1930
        %v3282 = vmul.f32 %v1899, %v1899
        %v3283 = vmul.f32 %v1900, %v1900
        %v3284 = vmul.f32 %v1901, %v1901
        %v3285 = vmul.f32 %v1902, %v1902
        %v3286 = vmul.f32 %v1903, %v1903
        %v3287 = vmul.f32 %v1904, %v1904
        %v3288 = vmul.f32 %v1905, %v1905
        %v3289 = vmul.f32 %v1906, %v1906
        %v3290 = vmul.f32 %v1907, %v1907
        %v3291 = vmul.f32 %v1908, %v1908
        %v3292 = vmul.f32 %v1909, %v1909
        %v3293 = vmul.f32 %v1910, %v1910
        %v3294 = vmul.f32 %v1911, %v1911
        %v3295 = vmul.f32 %v1912, %v1912
        %v3296 = vmul.f32 %v1913, %v1913
        %v3297 = vmul.f32 %v1914, %v1914
        %v3298 = vmul.f32 %v1915, %v1915
        %v3299 = vmul.f32 %v1916, %v1916
        %v3300 = vmul.f32 %v1917, %v1917
        %v3301 = vmul.f32 %v1918, %v1918
        %v3302 = vmul.f32 %v1919, %v1919
        %v3303 = vmul.f32 %v1920, %v1920
        %v3304 = vmul.f32 %v1921, %v1921
        %v3305 = vmul.f32 %v1922, %v1922
        %v3306 = vmul.f32 %v1923, %v1923
        %v3307 = vmul.f32 %v1924, %v1924
        %v3308 = vmul.f32 %v1925, %v1925
        %v3309 = vmul.f32 %v1926, %v1926
        %v3310 = vmul.f32 %v1927, %v1927
        %v3311 = vmul.f32 %v1928, %v1928
        %v3312 = vmul.f32 %v1929, %v1929
        %v3313 = vmul.f32 %v1930, %v1930
        %v3314 = vmul.f32 %v1899, %v3282
        %v3315 = vmul.f32 %v1900, %v3283
        %v3316 = vmul.f32 %v1901, %v3284
        %v3317 = vmul.f32 %v1902, %v3285
        %v3318 = vmul.f32 %v1903, %v3286
        %v3319 = vmul.f32 %v1904, %v3287
        %v3320 = vmul.f32 %v1905, %v3288
        %v3321 = vmul.f32 %v1906, %v3289
        %v3322 = vmul.f32 %v1907, %v3290
        %v3323 = vmul.f32 %v1908, %v3291
        %v3324 = vmul.f32 %v1909, %v3292
        %v3325 = vmul.f32 %v1910, %v3293
        %v3326 = vmul.f32 %v1911, %v3294
        %v3327 = vmul.f32 %v1912, %v3295
        %v3328 = vmul.f32 %v1913, %v3296
        %v3329 = vmul.f32 %v1914, %v3297
        %v3330 = vmul.f32 %v1915, %v3298
        %v3331 = vmul.f32 %v1916, %v3299
        %v3332 = vmul.f32 %v1917, %v3300
        %v3333 = vmul.f32 %v1918, %v3301
        %v3334 = vmul.f32 %v1919, %v3302
        %v3335 = vmul.f32 %v1920, %v3303
        %v3336 = vmul.f32 %v1921, %v3304
        %v3337 = vmul.f32 %v1922, %v3305
        %v3338 = vmul.f32 %v1923, %v3306
        %v3339 = vmul.f32 %v1924, %v3307
        %v3340 = vmul.f32 %v1925, %v3308
        %v3341 = vmul.f32 %v1926, %v3309
        %v3342 = vmul.f32 %v1927, %v3310
        %v3343 = vmul.f32 %v1928, %v3311
        %v3344 = vmul.f32 %v1929, %v3312
        %v3345 = vmul.f32 %v1930, %v3313
        %v3346 = vmul.f32 %v3314, 0.044715
        %v3347 = vmul.f32 %v3315, 0.044715
        %v3348 = vmul.f32 %v3316, 0.044715
        %v3349 = vmul.f32 %v3317, 0.044715
        %v3350 = vmul.f32 %v3318, 0.044715
        %v3351 = vmul.f32 %v3319, 0.044715
        %v3352 = vmul.f32 %v3320, 0.044715
        %v3353 = vmul.f32 %v3321, 0.044715
        %v3354 = vmul.f32 %v3322, 0.044715
        %v3355 = vmul.f32 %v3323, 0.044715
        %v3356 = vmul.f32 %v3324, 0.044715
        %v3357 = vmul.f32 %v3325, 0.044715
        %v3358 = vmul.f32 %v3326, 0.044715
        %v3359 = vmul.f32 %v3327, 0.044715
        %v3360 = vmul.f32 %v3328, 0.044715
        %v3361 = vmul.f32 %v3329, 0.044715
        %v3362 = vmul.f32 %v3330, 0.044715
        %v3363 = vmul.f32 %v3331, 0.044715
        %v3364 = vmul.f32 %v3332, 0.044715
        %v3365 = vmul.f32 %v3333, 0.044715
        %v3366 = vmul.f32 %v3334, 0.044715
        %v3367 = vmul.f32 %v3335, 0.044715
        %v3368 = vmul.f32 %v3336, 0.044715
        %v3369 = vmul.f32 %v3337, 0.044715
        %v3370 = vmul.f32 %v3338, 0.044715
        %v3371 = vmul.f32 %v3339, 0.044715
        %v3372 = vmul.f32 %v3340, 0.044715
        %v3373 = vmul.f32 %v3341, 0.044715
        %v3374 = vmul.f32 %v3342, 0.044715
        %v3375 = vmul.f32 %v3343, 0.044715
        %v3376 = vmul.f32 %v3344, 0.044715
        %v3377 = vmul.f32 %v3345, 0.044715
        %v3378 = vadd.f32 %v1899, %v3346
        %v3379 = vadd.f32 %v1900, %v3347
        %v3380 = vadd.f32 %v1901, %v3348
        %v3381 = vadd.f32 %v1902, %v3349
        %v3382 = vadd.f32 %v1903, %v3350
        %v3383 = vadd.f32 %v1904, %v3351
        %v3384 = vadd.f32 %v1905, %v3352
        %v3385 = vadd.f32 %v1906, %v3353
        %v3386 = vadd.f32 %v1907, %v3354
        %v3387 = vadd.f32 %v1908, %v3355
        %v3388 = vadd.f32 %v1909, %v3356
        %v3389 = vadd.f32 %v1910, %v3357
        %v3390 = vadd.f32 %v1911, %v3358
        %v3391 = vadd.f32 %v1912, %v3359
        %v3392 = vadd.f32 %v1913, %v3360
        %v3393 = vadd.f32 %v1914, %v3361
        %v3394 = vadd.f32 %v1915, %v3362
        %v3395 = vadd.f32 %v1916, %v3363
        %v3396 = vadd.f32 %v1917, %v3364
        %v3397 = vadd.f32 %v1918, %v3365
        %v3398 = vadd.f32 %v1919, %v3366
        %v3399 = vadd.f32 %v1920, %v3367
        %v3400 = vadd.f32 %v1921, %v3368
        %v3401 = vadd.f32 %v1922, %v3369
        %v3402 = vadd.f32 %v1923, %v3370
        %v3403 = vadd.f32 %v1924, %v3371
        %v3404 = vadd.f32 %v1925, %v3372
        %v3405 = vadd.f32 %v1926, %v3373
        %v3406 = vadd.f32 %v1927, %v3374
        %v3407 = vadd.f32 %v1928, %v3375
        %v3408 = vadd.f32 %v1929, %v3376
        %v3409 = vadd.f32 %v1930, %v3377
        %v3410 = vmul.f32 %v3378, 0.7978846
        %v3411 = vmul.f32 %v3379, 0.7978846
        %v3412 = vmul.f32 %v3380, 0.7978846
        %v3413 = vmul.f32 %v3381, 0.7978846
        %v3414 = vmul.f32 %v3382, 0.7978846
        %v3415 = vmul.f32 %v3383, 0.7978846
        %v3416 = vmul.f32 %v3384, 0.7978846
        %v3417 = vmul.f32 %v3385, 0.7978846
        %v3418 = vmul.f32 %v3386, 0.7978846
        %v3419 = vmul.f32 %v3387, 0.7978846
        %v3420 = vmul.f32 %v3388, 0.7978846
        %v3421 = vmul.f32 %v3389, 0.7978846
        %v3422 = vmul.f32 %v3390, 0.7978846
        %v3423 = vmul.f32 %v3391, 0.7978846
        %v3424 = vmul.f32 %v3392, 0.7978846
        %v3425 = vmul.f32 %v3393, 0.7978846
        %v3426 = vmul.f32 %v3394, 0.7978846
        %v3427 = vmul.f32 %v3395, 0.7978846
        %v3428 = vmul.f32 %v3396, 0.7978846
        %v3429 = vmul.f32 %v3397, 0.7978846
        %v3430 = vmul.f32 %v3398, 0.7978846
        %v3431 = vmul.f32 %v3399, 0.7978846
        %v3432 = vmul.f32 %v3400, 0.7978846
        %v3433 = vmul.f32 %v3401, 0.7978846
        %v3434 = vmul.f32 %v3402, 0.7978846
        %v3435 = vmul.f32 %v3403, 0.7978846
        %v3436 = vmul.f32 %v3404, 0.7978846
        %v3437 = vmul.f32 %v3405, 0.7978846
        %v3438 = vmul.f32 %v3406, 0.7978846
        %v3439 = vmul.f32 %v3407, 0.7978846
        %v3440 = vmul.f32 %v3408, 0.7978846
        %v3441 = vmul.f32 %v3409, 0.7978846
        %v3442 = vtanh.pop %v3410
        %v3443 = vtanh.pop %v3411
        %v3444 = vtanh.pop %v3412
        %v3445 = vtanh.pop %v3413
        %v3446 = vtanh.pop %v3414
        %v3447 = vtanh.pop %v3415
        %v3448 = vtanh.pop %v3416
        %v3449 = vtanh.pop %v3417
        %v3450 = vtanh.pop %v3418
        %v3451 = vtanh.pop %v3419
        %v3452 = vtanh.pop %v3420
        %v3453 = vtanh.pop %v3421
        %v3454 = vtanh.pop %v3422
        %v3455 = vtanh.pop %v3423
        %v3456 = vtanh.pop %v3424
        %v3457 = vtanh.pop %v3425
        %v3458 = vtanh.pop %v3426
        %v3459 = vtanh.pop %v3427
        %v3460 = vtanh.pop %v3428
        %v3461 = vtanh.pop %v3429
        %v3462 = vtanh.pop %v3430
        %v3463 = vtanh.pop %v3431
        %v3464 = vtanh.pop %v3432
        %v3465 = vtanh.pop %v3433
        %v3466 = vtanh.pop %v3434
        %v3467 = vtanh.pop %v3435
        %v3468 = vtanh.pop %v3436
        %v3469 = vtanh.pop %v3437
        %v3470 = vtanh.pop %v3438
        %v3471 = vtanh.pop %v3439
        %v3472 = vtanh.pop %v3440
        %v3473 = vtanh.pop %v3441
        %v3474 = vadd.f32 %v3442, 1.0
        %v3475 = vadd.f32 %v3443, 1.0
        %v3476 = vadd.f32 %v3444, 1.0
        %v3477 = vadd.f32 %v3445, 1.0
        %v3478 = vadd.f32 %v3446, 1.0
        %v3479 = vadd.f32 %v3447, 1.0
        %v3480 = vadd.f32 %v3448, 1.0
        %v3481 = vadd.f32 %v3449, 1.0
        %v3482 = vadd.f32 %v3450, 1.0
        %v3483 = vadd.f32 %v3451, 1.0
        %v3484 = vadd.f32 %v3452, 1.0
        %v3485 = vadd.f32 %v3453, 1.0
        %v3486 = vadd.f32 %v3454, 1.0
        %v3487 = vadd.f32 %v3455, 1.0
        %v3488 = vadd.f32 %v3456, 1.0
        %v3489 = vadd.f32 %v3457, 1.0
        %v3490 = vadd.f32 %v3458, 1.0
        %v3491 = vadd.f32 %v3459, 1.0
        %v3492 = vadd.f32 %v3460, 1.0
        %v3493 = vadd.f32 %v3461, 1.0
        %v3494 = vadd.f32 %v3462, 1.0
        %v3495 = vadd.f32 %v3463, 1.0
        %v3496 = vadd.f32 %v3464, 1.0
        %v3497 = vadd.f32 %v3465, 1.0
        %v3498 = vadd.f32 %v3466, 1.0
        %v3499 = vadd.f32 %v3467, 1.0
        %v3500 = vadd.f32 %v3468, 1.0
        %v3501 = vadd.f32 %v3469, 1.0
        %v3502 = vadd.f32 %v3470, 1.0
        %v3503 = vadd.f32 %v3471, 1.0
        %v3504 = vadd.f32 %v3472, 1.0
        %v3505 = vadd.f32 %v3473, 1.0
        %v3506 = vmul.f32 %v3474, 0.5
        %v3507 = vmul.f32 %v3475, 0.5
        %v3508 = vmul.f32 %v3476, 0.5
        %v3509 = vmul.f32 %v3477, 0.5
        %v3510 = vmul.f32 %v3478, 0.5
        %v3511 = vmul.f32 %v3479, 0.5
        %v3512 = vmul.f32 %v3480, 0.5
        %v3513 = vmul.f32 %v3481, 0.5
        %v3514 = vmul.f32 %v3482, 0.5
        %v3515 = vmul.f32 %v3483, 0.5
        %v3516 = vmul.f32 %v3484, 0.5
        %v3517 = vmul.f32 %v3485, 0.5
        %v3518 = vmul.f32 %v3486, 0.5
        %v3519 = vmul.f32 %v3487, 0.5
        %v3520 = vmul.f32 %v3488, 0.5
        %v3521 = vmul.f32 %v3489, 0.5
        %v3522 = vmul.f32 %v3490, 0.5
        %v3523 = vmul.f32 %v3491, 0.5
        %v3524 = vmul.f32 %v3492, 0.5
        %v3525 = vmul.f32 %v3493, 0.5
        %v3526 = vmul.f32 %v3494, 0.5
        %v3527 = vmul.f32 %v3495, 0.5
        %v3528 = vmul.f32 %v3496, 0.5
        %v3529 = vmul.f32 %v3497, 0.5
        %v3530 = vmul.f32 %v3498, 0.5
        %v3531 = vmul.f32 %v3499, 0.5
        %v3532 = vmul.f32 %v3500, 0.5
        %v3533 = vmul.f32 %v3501, 0.5
        %v3534 = vmul.f32 %v3502, 0.5
        %v3535 = vmul.f32 %v3503, 0.5
        %v3536 = vmul.f32 %v3504, 0.5
        %v3537 = vmul.f32 %v3505, 0.5
        %v3538 = vmul.f32 %v1899, %v3506
        %v3539 = vmul.f32 %v1900, %v3507
        %v3540 = vmul.f32 %v1901, %v3508
        %v3541 = vmul.f32 %v1902, %v3509
        %v3542 = vmul.f32 %v1903, %v3510
        %v3543 = vmul.f32 %v1904, %v3511
        %v3544 = vmul.f32 %v1905, %v3512
        %v3545 = vmul.f32 %v1906, %v3513
        %v3546 = vmul.f32 %v1907, %v3514
        %v3547 = vmul.f32 %v1908, %v3515
        %v3548 = vmul.f32 %v1909, %v3516
        %v3549 = vmul.f32 %v1910, %v3517
        %v3550 = vmul.f32 %v1911, %v3518
        %v3551 = vmul.f32 %v1912, %v3519
        %v3552 = vmul.f32 %v1913, %v3520
        %v3553 = vmul.f32 %v1914, %v3521
        %v3554 = vmul.f32 %v1915, %v3522
        %v3555 = vmul.f32 %v1916, %v3523
        %v3556 = vmul.f32 %v1917, %v3524
        %v3557 = vmul.f32 %v1918, %v3525
        %v3558 = vmul.f32 %v1919, %v3526
        %v3559 = vmul.f32 %v1920, %v3527
        %v3560 = vmul.f32 %v1921, %v3528
        %v3561 = vmul.f32 %v1922, %v3529
        %v3562 = vmul.f32 %v1923, %v3530
        %v3563 = vmul.f32 %v1924, %v3531
        %v3564 = vmul.f32 %v1925, %v3532
        %v3565 = vmul.f32 %v1926, %v3533
        %v3566 = vmul.f32 %v1927, %v3534
        %v3567 = vmul.f32 %v1928, %v3535
        %v3568 = vmul.f32 %v1929, %v3536
        %v3569 = vmul.f32 %v1930, %v3537
        %v3570 = vmul.f32 %v3538, %v2930
        %v3571 = vmul.f32 %v3539, %v2931
        %v3572 = vmul.f32 %v3540, %v2932
        %v3573 = vmul.f32 %v3541, %v2933
        %v3574 = vmul.f32 %v3542, %v2934
        %v3575 = vmul.f32 %v3543, %v2935
        %v3576 = vmul.f32 %v3544, %v2936
        %v3577 = vmul.f32 %v3545, %v2937
        %v3578 = vmul.f32 %v3546, %v2938
        %v3579 = vmul.f32 %v3547, %v2939
        %v3580 = vmul.f32 %v3548, %v2940
        %v3581 = vmul.f32 %v3549, %v2941
        %v3582 = vmul.f32 %v3550, %v2942
        %v3583 = vmul.f32 %v3551, %v2943
        %v3584 = vmul.f32 %v3552, %v2944
        %v3585 = vmul.f32 %v3553, %v2945
        %v3586 = vmul.f32 %v3554, %v2946
        %v3587 = vmul.f32 %v3555, %v2947
        %v3588 = vmul.f32 %v3556, %v2948
        %v3589 = vmul.f32 %v3557, %v2949
        %v3590 = vmul.f32 %v3558, %v2950
        %v3591 = vmul.f32 %v3559, %v2951
        %v3592 = vmul.f32 %v3560, %v2952
        %v3593 = vmul.f32 %v3561, %v2953
        %v3594 = vmul.f32 %v3562, %v2954
        %v3595 = vmul.f32 %v3563, %v2955
        %v3596 = vmul.f32 %v3564, %v2956
        %v3597 = vmul.f32 %v3565, %v2957
        %v3598 = vmul.f32 %v3566, %v2958
        %v3599 = vmul.f32 %v3567, %v2959
        %v3600 = vmul.f32 %v3568, %v2960
        %v3601 = vmul.f32 %v3569, %v2961
        %v3602 = vadd.f32 %v3250, %v3570
        %v3603 = vadd.f32 %v3251, %v3571
        %v3604 = vadd.f32 %v3252, %v3572
        %v3605 = vadd.f32 %v3253, %v3573
        %v3606 = vadd.f32 %v3254, %v3574
        %v3607 = vadd.f32 %v3255, %v3575
        %v3608 = vadd.f32 %v3256, %v3576
        %v3609 = vadd.f32 %v3257, %v3577
        %v3610 = vadd.f32 %v3258, %v3578
        %v3611 = vadd.f32 %v3259, %v3579
        %v3612 = vadd.f32 %v3260, %v3580
        %v3613 = vadd.f32 %v3261, %v3581
        %v3614 = vadd.f32 %v3262, %v3582
        %v3615 = vadd.f32 %v3263, %v3583
        %v3616 = vadd.f32 %v3264, %v3584
        %v3617 = vadd.f32 %v3265, %v3585
        %v3618 = vadd.f32 %v3266, %v3586
        %v3619 = vadd.f32 %v3267, %v3587
        %v3620 = vadd.f32 %v3268, %v3588
        %v3621 = vadd.f32 %v3269, %v3589
        %v3622 = vadd.f32 %v3270, %v3590
        %v3623 = vadd.f32 %v3271, %v3591
        %v3624 = vadd.f32 %v3272, %v3592
        %v3625 = vadd.f32 %v3273, %v3593
        %v3626 = vadd.f32 %v3274, %v3594
        %v3627 = vadd.f32 %v3275, %v3595
        %v3628 = vadd.f32 %v3276, %v3596
        %v3629 = vadd.f32 %v3277, %v3597
        %v3630 = vadd.f32 %v3278, %v3598
        %v3631 = vadd.f32 %v3279, %v3599
        %v3632 = vadd.f32 %v3280, %v3600
        %v3633 = vadd.f32 %v3281, %v3601
        %v3634 = vld [vmem:[%s5] sm:$0xff]
        %v3635 = vld [vmem:[%s5 + $0x8] sm:$0xff]
        %v3636 = vld [vmem:[%s5 + $0x10] sm:$0xff]
        %v3637 = vld [vmem:[%s5 + $0x18] sm:$0xff]
        %v3638 = vld [vmem:[%s5 + $0x20] sm:$0xff]
        %v3639 = vld [vmem:[%s5 + $0x28] sm:$0xff]
        %v3640 = vld [vmem:[%s5 + $0x30] sm:$0xff]
        %v3641 = vld [vmem:[%s5 + $0x38] sm:$0xff]
        %v3642 = vld [vmem:[%s6] sm:$0x1]
        %v3644 = vlaneseq
        %v3645 = vshrl.u32 %v3644, 7
        %v3646 = vsub.s32 0, %v3645
        %v3647 = vrot.slane %v3642, %v3646
        %v3650 = vsel %vm903, %v3602, 0
        %v3653 = vsel %vm903, %v3603, 0
        %v3656 = vsel %vm903, %v3604, 0
        %v3659 = vsel %vm903, %v3605, 0
        %v3662 = vsel %vm903, %v3606, 0
        %v3665 = vsel %vm903, %v3607, 0
        %v3668 = vsel %vm903, %v3608, 0
        %v3671 = vsel %vm903, %v3609, 0
        %v3674 = vsel %vm903, %v3610, 0
        %v3677 = vsel %vm903, %v3611, 0
        %v3680 = vsel %vm903, %v3612, 0
        %v3683 = vsel %vm903, %v3613, 0
        %v3686 = vsel %vm903, %v3614, 0
        %v3689 = vsel %vm903, %v3615, 0
        %v3692 = vsel %vm903, %v3616, 0
        %v3695 = vsel %vm903, %v3617, 0
        %v3698 = vsel %vm903, %v3618, 0
        %v3701 = vsel %vm903, %v3619, 0
        %v3704 = vsel %vm903, %v3620, 0
        %v3707 = vsel %vm903, %v3621, 0
        %v3710 = vsel %vm903, %v3622, 0
        %v3713 = vsel %vm903, %v3623, 0
        %v3716 = vsel %vm903, %v3624, 0
        %v3719 = vsel %vm903, %v3625, 0
        %v3722 = vsel %vm903, %v3626, 0
        %v3725 = vsel %vm903, %v3627, 0
        %v3728 = vsel %vm903, %v3628, 0
        %v3731 = vsel %vm903, %v3629, 0
        %v3734 = vsel %vm903, %v3630, 0
        %v3737 = vsel %vm903, %v3631, 0
        %v3740 = vsel %vm903, %v3632, 0
        %v3743 = vsel %vm903, %v3633, 0
        %3745 = vmatprep.subr.mxu0 0.0
        %3746 = vmatpush1.msra.mxu0 0.0
        %3747 = vmatprep.subr.mxu0 0.0
        %3748 = vmatpush1.msra.mxu0 0.0
        %3749 = vmatprep.subr.mxu0 0.0
        %3750 = vmatpush1.msra.mxu0 0.0
        %3751 = vmatprep.subr.mxu0 0.0
        %3752 = vmatpush1.msra.mxu0 0.0
        %3753 = vmatprep.subr.mxu0 0.0
        %3754 = vmatpush1.msra.mxu0 0.0
        %3755 = vmatprep.subr.mxu0 0.0
        %3756 = vmatpush1.msra.mxu0 0.0
        %3757 = vmatprep.subr.mxu0 0.0
        %3758 = vmatpush1.msra.mxu0 0.0
        %3759 = vmatprep.subr.mxu0 0.0
        %3760 = vmatpush1.msra.mxu0 0.0
        %3761 = vmatprep.subr.mxu0 0.0
        %3762 = vmatpush1.msra.mxu0 %v3641
        %3763 = vmatprep.subr.mxu0 0.0
        %3764 = vmatpush1.msra.mxu0 %v3640
        %3765 = vmatprep.subr.mxu0 0.0
        %3766 = vmatpush1.msra.mxu0 %v3639
        %3767 = vmatprep.subr.mxu0 0.0
        %3768 = vmatpush1.msra.mxu0 %v3638
        %3769 = vmatprep.subr.mxu0 0.0
        %3770 = vmatpush1.msra.mxu0 %v3637
        %3771 = vmatprep.subr.mxu0 0.0
        %3772 = vmatpush1.msra.mxu0 %v3636
        %3773 = vmatprep.subr.mxu0 0.0
        %3774 = vmatpush1.msra.mxu0 %v3635
        %3775 = vmatprep.subr.mxu0 0.0
        %3776 = vmatpush1.msra.mxu0 %v3634
        %3777 = vmatprep.subr.mxu0 0.0
        %3778 = vmatpush2.msra.mxu0 0.0
        %3779 = vmatprep.subr.mxu0 0.0
        %3780 = vmatpush2.msra.mxu0 0.0
        %3781 = vmatprep.subr.mxu0 0.0
        %3782 = vmatpush2.msra.mxu0 0.0
        %3783 = vmatprep.subr.mxu0 0.0
        %3784 = vmatpush2.msra.mxu0 0.0
        %3785 = vmatprep.subr.mxu0 0.0
        %3786 = vmatpush2.msra.mxu0 0.0
        %3787 = vmatprep.subr.mxu0 0.0
        %3788 = vmatpush2.msra.mxu0 0.0
        %3789 = vmatprep.subr.mxu0 0.0
        %3790 = vmatpush2.msra.mxu0 0.0
        %3791 = vmatprep.subr.mxu0 0.0
        %3792 = vmatpush2.msra.mxu0 0.0
        %3793 = vmatprep.subr.mxu0 0.0
        %3794 = vmatpush2.msra.mxu0 0.0
        %3795 = vmatprep.subr.mxu0 0.0
        %3796 = vmatpush2.msra.mxu0 0.0
        %3797 = vmatprep.subr.mxu0 0.0
        %3798 = vmatpush2.msra.mxu0 0.0
        %3799 = vmatprep.subr.mxu0 0.0
        %3800 = vmatpush2.msra.mxu0 0.0
        %3801 = vmatprep.subr.mxu0 0.0
        %3802 = vmatpush2.msra.mxu0 0.0
        %3803 = vmatprep.subr.mxu0 0.0
        %3804 = vmatpush2.msra.mxu0 0.0
        %3805 = vmatprep.subr.mxu0 0.0
        %3806 = vmatpush2.msra.mxu0 0.0
        %3807 = vmatprep.subr.mxu0 0.0
        %3808 = vmatpush2.msra.mxu0 0.0
        %3809 = vmatprep.mubr.f32.mxu0 0.0
        %3810 = vmatmul.mubr.f32.gmra.mxu0 %v3650
        %v3811 = vpop.f32.mrf.mxu0
        %v3812 = vadd.f32 %v3647, %v3811
        %v3813 = vpop.f32.mrf.mxu0
        %3814 = vmatprep.mubr.f32.mxu0 0.0
        %3815 = vmatmul.mubr.f32.gmra.mxu0 %v3653
        %v3816 = vpop.f32.mrf.mxu0
        %v3817 = vadd.f32 %v3647, %v3816
        %v3818 = vpop.f32.mrf.mxu0
        %3819 = vmatprep.mubr.f32.mxu0 0.0
        %3820 = vmatmul.mubr.f32.gmra.mxu0 %v3656
        %v3821 = vpop.f32.mrf.mxu0
        %v3822 = vadd.f32 %v3647, %v3821
        %v3823 = vpop.f32.mrf.mxu0
        %3824 = vmatprep.mubr.f32.mxu0 0.0
        %3825 = vmatmul.mubr.f32.gmra.mxu0 %v3659
        %v3826 = vpop.f32.mrf.mxu0
        %v3827 = vadd.f32 %v3647, %v3826
        %v3828 = vpop.f32.mrf.mxu0
        %3829 = vmatprep.mubr.f32.mxu0 0.0
        %3830 = vmatmul.mubr.f32.gmra.mxu0 %v3662
        %v3831 = vpop.f32.mrf.mxu0
        %v3832 = vadd.f32 %v3647, %v3831
        %v3833 = vpop.f32.mrf.mxu0
        %3834 = vmatprep.mubr.f32.mxu0 0.0
        %3835 = vmatmul.mubr.f32.gmra.mxu0 %v3665
        %v3836 = vpop.f32.mrf.mxu0
        %v3837 = vadd.f32 %v3647, %v3836
        %v3838 = vpop.f32.mrf.mxu0
        %3839 = vmatprep.mubr.f32.mxu0 0.0
        %3840 = vmatmul.mubr.f32.gmra.mxu0 %v3668
        %v3841 = vpop.f32.mrf.mxu0
        %v3842 = vadd.f32 %v3647, %v3841
        %v3843 = vpop.f32.mrf.mxu0
        %3844 = vmatprep.mubr.f32.mxu0 0.0
        %3845 = vmatmul.mubr.f32.gmra.mxu0 %v3671
        %v3846 = vpop.f32.mrf.mxu0
        %v3847 = vadd.f32 %v3647, %v3846
        %v3848 = vpop.f32.mrf.mxu0
        %3849 = vmatprep.mubr.f32.mxu0 0.0
        %3850 = vmatmul.mubr.f32.gmra.mxu0 %v3674
        %v3851 = vpop.f32.mrf.mxu0
        %v3852 = vadd.f32 %v3647, %v3851
        %v3853 = vpop.f32.mrf.mxu0
        %3854 = vmatprep.mubr.f32.mxu0 0.0
        %3855 = vmatmul.mubr.f32.gmra.mxu0 %v3677
        %v3856 = vpop.f32.mrf.mxu0
        %v3857 = vadd.f32 %v3647, %v3856
        %v3858 = vpop.f32.mrf.mxu0
        %3859 = vmatprep.mubr.f32.mxu0 0.0
        %3860 = vmatmul.mubr.f32.gmra.mxu0 %v3680
        %v3861 = vpop.f32.mrf.mxu0
        %v3862 = vadd.f32 %v3647, %v3861
        %v3863 = vpop.f32.mrf.mxu0
        %3864 = vmatprep.mubr.f32.mxu0 0.0
        %3865 = vmatmul.mubr.f32.gmra.mxu0 %v3683
        %v3866 = vpop.f32.mrf.mxu0
        %v3867 = vadd.f32 %v3647, %v3866
        %v3868 = vpop.f32.mrf.mxu0
        %3869 = vmatprep.mubr.f32.mxu0 0.0
        %3870 = vmatmul.mubr.f32.gmra.mxu0 %v3686
        %v3871 = vpop.f32.mrf.mxu0
        %v3872 = vadd.f32 %v3647, %v3871
        %v3873 = vpop.f32.mrf.mxu0
        %3874 = vmatprep.mubr.f32.mxu0 0.0
        %3875 = vmatmul.mubr.f32.gmra.mxu0 %v3689
        %v3876 = vpop.f32.mrf.mxu0
        %v3877 = vadd.f32 %v3647, %v3876
        %v3878 = vpop.f32.mrf.mxu0
        %3879 = vmatprep.mubr.f32.mxu0 0.0
        %3880 = vmatmul.mubr.f32.gmra.mxu0 %v3692
        %v3881 = vpop.f32.mrf.mxu0
        %v3882 = vadd.f32 %v3647, %v3881
        %v3883 = vpop.f32.mrf.mxu0
        %3884 = vmatprep.mubr.f32.mxu0 0.0
        %3885 = vmatmul.mubr.f32.gmra.mxu0 %v3695
        %v3886 = vpop.f32.mrf.mxu0
        %v3887 = vadd.f32 %v3647, %v3886
        %v3888 = vpop.f32.mrf.mxu0
        %3889 = vmatprep.mubr.f32.mxu0 0.0
        %3890 = vmatmul.mubr.f32.gmra.mxu0 %v3698
        %v3891 = vpop.f32.mrf.mxu0
        %v3892 = vadd.f32 %v3647, %v3891
        %v3893 = vpop.f32.mrf.mxu0
        %3894 = vmatprep.mubr.f32.mxu0 0.0
        %3895 = vmatmul.mubr.f32.gmra.mxu0 %v3701
        %v3896 = vpop.f32.mrf.mxu0
        %v3897 = vadd.f32 %v3647, %v3896
        %v3898 = vpop.f32.mrf.mxu0
        %3899 = vmatprep.mubr.f32.mxu0 0.0
        %3900 = vmatmul.mubr.f32.gmra.mxu0 %v3704
        %v3901 = vpop.f32.mrf.mxu0
        %v3902 = vadd.f32 %v3647, %v3901
        %v3903 = vpop.f32.mrf.mxu0
        %3904 = vmatprep.mubr.f32.mxu0 0.0
        %3905 = vmatmul.mubr.f32.gmra.mxu0 %v3707
        %v3906 = vpop.f32.mrf.mxu0
        %v3907 = vadd.f32 %v3647, %v3906
        %v3908 = vpop.f32.mrf.mxu0
        %3909 = vmatprep.mubr.f32.mxu0 0.0
        %3910 = vmatmul.mubr.f32.gmra.mxu0 %v3710
        %v3911 = vpop.f32.mrf.mxu0
        %v3912 = vadd.f32 %v3647, %v3911
        %v3913 = vpop.f32.mrf.mxu0
        %3914 = vmatprep.mubr.f32.mxu0 0.0
        %3915 = vmatmul.mubr.f32.gmra.mxu0 %v3713
        %v3916 = vpop.f32.mrf.mxu0
        %v3917 = vadd.f32 %v3647, %v3916
        %v3918 = vpop.f32.mrf.mxu0
        %3919 = vmatprep.mubr.f32.mxu0 0.0
        %3920 = vmatmul.mubr.f32.gmra.mxu0 %v3716
        %v3921 = vpop.f32.mrf.mxu0
        %v3922 = vadd.f32 %v3647, %v3921
        %v3923 = vpop.f32.mrf.mxu0
        %3924 = vmatprep.mubr.f32.mxu0 0.0
        %3925 = vmatmul.mubr.f32.gmra.mxu0 %v3719
        %v3926 = vpop.f32.mrf.mxu0
        %v3927 = vadd.f32 %v3647, %v3926
        %v3928 = vpop.f32.mrf.mxu0
        %3929 = vmatprep.mubr.f32.mxu0 0.0
        %3930 = vmatmul.mubr.f32.gmra.mxu0 %v3722
        %v3931 = vpop.f32.mrf.mxu0
        %v3932 = vadd.f32 %v3647, %v3931
        %v3933 = vpop.f32.mrf.mxu0
        %3934 = vmatprep.mubr.f32.mxu0 0.0
        %3935 = vmatmul.mubr.f32.gmra.mxu0 %v3725
        %v3936 = vpop.f32.mrf.mxu0
        %v3937 = vadd.f32 %v3647, %v3936
        %v3938 = vpop.f32.mrf.mxu0
        %3939 = vmatprep.mubr.f32.mxu0 0.0
        %3940 = vmatmul.mubr.f32.gmra.mxu0 %v3728
        %v3941 = vpop.f32.mrf.mxu0
        %v3942 = vadd.f32 %v3647, %v3941
        %v3943 = vpop.f32.mrf.mxu0
        %3944 = vmatprep.mubr.f32.mxu0 0.0
        %3945 = vmatmul.mubr.f32.gmra.mxu0 %v3731
        %v3946 = vpop.f32.mrf.mxu0
        %v3947 = vadd.f32 %v3647, %v3946
        %v3948 = vpop.f32.mrf.mxu0
        %3949 = vmatprep.mubr.f32.mxu0 0.0
        %3950 = vmatmul.mubr.f32.gmra.mxu0 %v3734
        %v3951 = vpop.f32.mrf.mxu0
        %v3952 = vadd.f32 %v3647, %v3951
        %v3953 = vpop.f32.mrf.mxu0
        %3954 = vmatprep.mubr.f32.mxu0 0.0
        %3955 = vmatmul.mubr.f32.gmra.mxu0 %v3737
        %v3956 = vpop.f32.mrf.mxu0
        %v3957 = vadd.f32 %v3647, %v3956
        %v3958 = vpop.f32.mrf.mxu0
        %3959 = vmatprep.mubr.f32.mxu0 0.0
        %3960 = vmatmul.mubr.f32.gmra.mxu0 %v3740
        %v3961 = vpop.f32.mrf.mxu0
        %v3962 = vadd.f32 %v3647, %v3961
        %v3963 = vpop.f32.mrf.mxu0
        %3964 = vmatprep.mubr.f32.mxu0 0.0
        %3965 = vmatmul.mubr.f32.gmra.mxu0 %v3743
        %v3966 = vpop.f32.mrf.mxu0
        %v3967 = vadd.f32 %v3647, %v3966
        %v3968 = vpop.f32.mrf.mxu0
        %3969 = vdwg.mxu0
        %3970 = vst.msk [vmem:[%s296] sm:$0xff] %vm340, %v3812
        %3971 = vst.msk [vmem:[%s296 + $0x8] sm:$0xff] %vm340, %v3817
        %3972 = vst.msk [vmem:[%s296 + $0x10] sm:$0xff] %vm340, %v3822
        %3973 = vst.msk [vmem:[%s296 + $0x18] sm:$0xff] %vm340, %v3827
        %3974 = vst.msk [vmem:[%s296 + $0x20] sm:$0xff] %vm340, %v3832
        %3975 = vst.msk [vmem:[%s296 + $0x28] sm:$0xff] %vm340, %v3837
        %3976 = vst.msk [vmem:[%s296 + $0x30] sm:$0xff] %vm340, %v3842
        %3977 = vst.msk [vmem:[%s296 + $0x38] sm:$0xff] %vm340, %v3847
        %3978 = vst.msk [vmem:[%s296 + $0x40] sm:$0xff] %vm340, %v3852
        %3979 = vst.msk [vmem:[%s296 + $0x48] sm:$0xff] %vm340, %v3857
        %3980 = vst.msk [vmem:[%s296 + $0x50] sm:$0xff] %vm340, %v3862
        %3981 = vst.msk [vmem:[%s296 + $0x58] sm:$0xff] %vm340, %v3867
        %3982 = vst.msk [vmem:[%s296 + $0x60] sm:$0xff] %vm340, %v3872
        %3983 = vst.msk [vmem:[%s296 + $0x68] sm:$0xff] %vm340, %v3877
        %3984 = vst.msk [vmem:[%s296 + $0x70] sm:$0xff] %vm340, %v3882
        %3985 = vst.msk [vmem:[%s296 + $0x78] sm:$0xff] %vm340, %v3887
        %3986 = vst.msk [vmem:[%s296 + $0x80] sm:$0xff] %vm340, %v3892
        %3987 = vst.msk [vmem:[%s296 + $0x88] sm:$0xff] %vm340, %v3897
        %3988 = vst.msk [vmem:[%s296 + $0x90] sm:$0xff] %vm340, %v3902
        %3989 = vst.msk [vmem:[%s296 + $0x98] sm:$0xff] %vm340, %v3907
        %3990 = vst.msk [vmem:[%s296 + $0xa0] sm:$0xff] %vm340, %v3912
        %3991 = vst.msk [vmem:[%s296 + $0xa8] sm:$0xff] %vm340, %v3917
        %3992 = vst.msk [vmem:[%s296 + $0xb0] sm:$0xff] %vm340, %v3922
        %3993 = vst.msk [vmem:[%s296 + $0xb8] sm:$0xff] %vm340, %v3927
        %3994 = vst.msk [vmem:[%s296 + $0xc0] sm:$0xff] %vm340, %v3932
        %3995 = vst.msk [vmem:[%s296 + $0xc8] sm:$0xff] %vm340, %v3937
        %3996 = vst.msk [vmem:[%s296 + $0xd0] sm:$0xff] %vm340, %v3942
        %3997 = vst.msk [vmem:[%s296 + $0xd8] sm:$0xff] %vm340, %v3947
        %3998 = vst.msk [vmem:[%s296 + $0xe0] sm:$0xff] %vm340, %v3952
        %3999 = vst.msk [vmem:[%s296 + $0xe8] sm:$0xff] %vm340, %v3957
        %4000 = vst.msk [vmem:[%s296 + $0xf0] sm:$0xff] %vm340, %v3962
        %4001 = vst.msk [vmem:[%s296 + $0xf8] sm:$0xff] %vm340, %v3967
        %s4002 = sand.u32 %s184, 1
        %s4003 = scalar_lea.sflag [#allocation6], %s4002
        %s4004 = sand.u32 %s184, 1
        %s4005 = smul.addr %s4004, 256
        %s4006 = scalar_lea.vmem [#allocation7], %s4005
        // Predicated region
        $region53: #{tpu_custom_call.1} parent=47 // pred_check
          %p4007 = pneg %p194
        $region54: #{tpu_custom_call.1} parent=47 // pred_check_branch
          %4009 = sbr.rel (%p4007) target = $region56
        $region55: #{tpu_custom_call.1} parent=47 // pred_region
          %s4011 = ssub.s32 4096, 4096
          %4012 = vsyncadd %s4003, %s4011
          %s4013 = smul.addr %s24, 32
          %s4014 = smul.addr %s4013, 128
          %s4015 = scalar_lea.hbm %s7, %s4014
          %s4016 = sshll.u32 %s4006, 4
          %s4017 = int_to_ptr.vmem [resolvable:$true] %s4016
          %4022 = dma.vmem_to_hbm [thread:$0]  %s4017, 4096, %s4015, %s4003, 128, 128, 8
        $region56: #{tpu_custom_call.1} parent=47 // pred_fallthru
          _
      $region48: #{tpu_custom_call.1} parent=5 // pred_fallthru
        _
      %p4023 = scmp.le.s32.totalorder 2, %s19
      // Predicated region
      $region57: #{tpu_custom_call.1} parent=5 // pred_check
        %p4024 = pneg %p4023
      $region58: #{tpu_custom_call.1} parent=5 // pred_check_branch
        %4026 = sbr.rel (%p4024) target = $region60
      $region59: #{tpu_custom_call.1} parent=5 // pred_region
        %s4027 = ssub.s32 %s19, 2
        // Predicated region
        $region61: #{tpu_custom_call.1} parent=59 // pred_check
          %p4028 = pneg %p200
        $region62: #{tpu_custom_call.1} parent=59 // pred_check_branch
          %4030 = sbr.rel (%p4028) target = $region64
        $region63: #{tpu_custom_call.1} parent=59 // pred_region
          %s4031 = sand.u32 %s185, 1
          %s4032 = scalar_lea.sflag [#allocation6], %s4031
          %s4033 = sand.u32 %s185, 1
          %s4034 = smul.addr %s4033, 256
          %s4035 = scalar_lea.vmem [#allocation7], %s4034
          %4036 = dma.done %s4032, 4096
        $region64: #{tpu_custom_call.1} parent=59 // pred_fallthru
          _
      $region60: #{tpu_custom_call.1} parent=5 // pred_fallthru
        _
    $region6: #{tpu_custom_call.1} parent=1 // loop_footer
      %s23 = sadd.s32 1, %s19
    $region7: #{tpu_custom_call.1} parent=1 // loop_footer_branch
      %18 = sbr.rel target = $region3
    $region8: #{tpu_custom_call.1} parent=1 // loop_exit
      _
    %4037 = vsyncpa [#allocation5], 1
    %s4038 = scalar_lea.sflag [#allocation5], 1
    %4039 = vsyncpa %s4038, 1
    %4040 = vsyncpa [#allocation6], 1
    %s4041 = scalar_lea.sflag [#allocation6], 1
    %4042 = vsyncpa %s4041, 1

</llo_original>
